<compile_context>
chip_gen: v7x
topology: tpu7x:2x2x1
jax: 0.10.0
libtpu: 0.0.40
codegen_flags: <defaults>
</compile_context>

<pallas_src>
import functools

import jax
import jax.numpy as jnp
from jax.experimental import pallas as pl
from jax.experimental.pallas import tpu as pltpu

NEG_SLOPE = 0.2   # LeakyReLU(0.2)
LN_EPS = 1e-5     # PyTorch LayerNorm default


# ----------------------------------------------------------------------------
# Fused forward kernel.
#
#   p1e : (25, 25*B*hw)  conv1 patches, columns ordered (tap2, b, ho, wo);
#                        out-of-bounds conv2 taps are all-zero columns (the
#                        conv has no bias, so this reproduces zero padding).
#   py0 : (25, B*hw)     patches of the 2x2-pooled input for the skip conv.
#   w1f/w0f : (C, 25)    flattened 5x5 weights of the two 1->C convs.
#   w2t : (25, C, C)     per-tap (cout, cin) weights of the stride-2 conv.
#   wf/wl : (C*hw,512)/(label_dims,512)  split first FC weight.
# ----------------------------------------------------------------------------
def _disc_fused_kernel(alpha_ref, labels_ref, p1e_ref, py0_ref,
                       w1f_ref, w2t_ref, w0f_ref,
                       wf_ref, wl_ref, b1_ref, g1_ref, be1_ref,
                       w2_ref, b2_ref, g2_ref, be2_ref,
                       w3_ref, b3_ref, out_ref,
                       *, batch, n_ch, hw, n_tap):
    f32, bf16 = jnp.float32, jnp.bfloat16
    alpha = alpha_ref[0]                       # SMEM scalar
    blk = batch * hw                           # 128 lanes per conv2 tap block

    def lrelu(h):
        return jnp.where(h >= 0.0, h, NEG_SLOPE * h)

    def layer_norm(h, g, beta):
        mu = jnp.mean(h, axis=-1, keepdims=True)
        var = jnp.mean(jnp.square(h - mu), axis=-1, keepdims=True)
        return (h - mu) * jax.lax.rsqrt(var + LN_EPS) * g + beta

    # conv from2d[s] (1 -> n_ch, stride 1): one lane-dense matmul over all
    # (tap2, batch, out-position) columns.
    a1 = jnp.dot(w1f_ref[...], p1e_ref[...], preferred_element_type=f32)
    a1 = a1.astype(bf16)                       # (n_ch, n_tap*blk)

    # blocks[s-1] (stride-2 conv) + LeakyReLU: each tap is a 128-aligned lane
    # slice of a1; accumulate 25 tiny (C,C)@(C,blk) matmuls in f32.
    acc = jnp.zeros((n_ch, blk), f32)
    for t in range(n_tap):
        acc = acc + jnp.dot(w2t_ref[t], a1[:, t * blk:(t + 1) * blk],
                            preferred_element_type=f32)
    net = lrelu(acc)                           # (n_ch, B*hw)

    # skip path: conv on the pooled input, then alpha blend (alpha from SMEM).
    y0 = jnp.dot(w0f_ref[...], py0_ref[...], preferred_element_type=f32)
    blend = alpha * net + (1.0 - alpha) * y0   # (n_ch, B*hw), lanes = (b, q)

    # FC1 = flatten(NCHW) @ Wf + labels @ Wl + b1, with the PyTorch (c,h,w)
    # flatten realised by per-channel weight blocks (no concat of 264 lanes).
    h = (jnp.dot(labels_ref[...].astype(bf16), wl_ref[...],
                 preferred_element_type=f32) + b1_ref[...])
    for c in range(n_ch):
        mc = jnp.concatenate(
            [blend[c:c + 1, b * hw:(b + 1) * hw] for b in range(batch)],
            axis=0)                                            # (B, hw)
        h = h + jnp.dot(mc.astype(bf16), wf_ref[c * hw:(c + 1) * hw, :],
                        preferred_element_type=f32)

    h = lrelu(layer_norm(h, g1_ref[...], be1_ref[...]))
    h = jnp.dot(h.astype(bf16), w2_ref[...], preferred_element_type=f32) + b2_ref[...]
    h = lrelu(layer_norm(h, g2_ref[...], be2_ref[...]))
    out = jnp.dot(h.astype(bf16), w3_ref[...], preferred_element_type=f32) + b3_ref[...]
    out_ref[...] = out.astype(out_ref.dtype)


# ----------------------------------------------------------------------------
# Wrapper-side patch gathers (cheap XLA glue on the tiny 1-channel image).
# ----------------------------------------------------------------------------
def _im2col_taps(x, k=5, pad=2):
    """x: (B,H,W) -> (B,H,W,k*k) stride-1 5x5 patches, taps ordered (kh, kw)."""
    B, H, W = x.shape
    xp = jnp.pad(x, ((0, 0), (pad, pad), (pad, pad)))
    taps = [xp[:, kh:kh + H, kw:kw + W] for kh in range(k) for kw in range(k)]
    return jnp.stack(taps, axis=-1)


def discriminator_forward(weights, img, labels, alpha, noise_key, *, p):
    # TODO(synk): fused kernel is specialised to scheme_index=1 (the
    # configured depth); other scheme indices need a different conv pipeline.
    assert p.scheme_index == 1
    B, Cin, H, W = img.shape
    assert Cin == 1
    n_ch = p.size_temp
    Ho, Wo = H // 2, W // 2          # stride-2 conv output size
    hw = Ho * Wo
    n_tap = 25

    # Noise add: 512-float elementwise op, fused by XLA into the patch gather
    # below (keeping it out of the kernel avoids duplicating patch inputs).
    noise = jax.random.normal(noise_key, img.shape, img.dtype)
    noisy = (img + noise * p.noise_level)[:, 0]                    # (B,H,W)

    # conv1 patches at every conv1-output position ...
    t1 = _im2col_taps(noisy)                                       # (B,H,W,25)
    # ... gathered at the stride-2 conv2 tap positions (zero padded so that
    # out-of-bounds conv2 taps become all-zero patch columns).
    t1p = jnp.pad(t1, ((0, 0), (2, 2), (2, 2), (0, 0)))
    blks = [t1p[:, kh:kh + 2 * Ho:2, kw:kw + 2 * Wo:2, :]
            for kh in range(5) for kw in range(5)]                 # 25 x (B,Ho,Wo,25)
    p1e = jnp.stack(blks, axis=0)                                  # (t2,B,Ho,Wo,t1)
    p1e = jnp.transpose(p1e, (4, 0, 1, 2, 3)).reshape(n_tap, n_tap * B * hw)

    # skip path: adaptive_avg_pool2d (evenly divisible -> mean pool) + patches
    # TODO(synk): general non-divisible adaptive_avg_pool2d not implemented.
    pooled = noisy.reshape(B, Ho, H // Ho, Wo, W // Wo).mean(axis=(2, 4))
    ty = _im2col_taps(pooled)                                      # (B,Ho,Wo,25)
    py0 = jnp.transpose(ty, (3, 0, 1, 2)).reshape(n_tap, B * hw)

    bf16 = jnp.bfloat16
    fc = weights["fc"]
    n_feat = n_ch * hw
    assert fc["w1"].shape[0] == n_feat + labels.shape[1]

    w1f = weights["from2d"][1].reshape(n_ch, n_tap).astype(bf16)
    w2t = jnp.transpose(weights["blocks"][0], (2, 3, 0, 1)).reshape(
        n_tap, n_ch, n_ch).astype(bf16)
    w0f = weights["from2d"][0].reshape(n_ch, n_tap).astype(bf16)
    wf = fc["w1"][:n_feat].astype(bf16)
    wl = fc["w1"][n_feat:].astype(bf16)
    w2fc = fc["w2"].astype(bf16)
    w3fc = fc["w3"].astype(bf16)

    alpha_arr = jnp.asarray(alpha, jnp.float32).reshape(1)

    args = (alpha_arr, labels, p1e.astype(bf16), py0.astype(bf16),
            w1f, w2t, w0f, wf, wl,
            fc["b1"], fc["g1"], fc["beta1"],
            w2fc, fc["b2"], fc["g2"], fc["beta2"],
            w3fc, fc["b3"])

    d_hid = fc["w2"].shape[0]
    flops = (2 * n_ch * n_tap * (n_tap * B * hw)       # conv1
             + 2 * n_tap * n_ch * n_ch * B * hw        # stride-2 conv
             + 2 * n_ch * n_tap * B * hw               # skip conv
             + 2 * B * (n_feat + labels.shape[1]) * d_hid
             + 2 * B * d_hid * d_hid
             + 2 * B * d_hid)
    bytes_accessed = int(sum(a.size * a.dtype.itemsize for a in args)) + B * 4

    vmem = pl.BlockSpec(memory_space=pltpu.MemorySpace.VMEM)
    smem = pl.BlockSpec(memory_space=pltpu.MemorySpace.SMEM)

    kernel = functools.partial(_disc_fused_kernel,
                               batch=B, n_ch=n_ch, hw=hw, n_tap=n_tap)
    return pl.pallas_call(
        kernel,
        out_shape=jax.ShapeDtypeStruct((B, 1), jnp.float32),
        in_specs=[smem] + [vmem] * (len(args) - 1),
        cost_estimate=pl.CostEstimate(flops=int(flops), transcendentals=2 * B,
                                      bytes_accessed=bytes_accessed),
    )(*args)


# ----------------------------------------------------------------------------
# Parameters (shapes mirror the PyTorch module's __init__), deterministic init.
# ----------------------------------------------------------------------------
class HParams:
    size_temp = 4
    label_dims = 8
    max_res = 3
    noise_level = 0.1
    scheme_index = 1
    alpha = 0.7


def init_params(key, p):
    keys = iter(jax.random.split(key, 32))

    def nrm(shape, scale=0.05):
        return (scale * jax.random.normal(next(keys), shape)).astype(jnp.float32)

    # blocks[0]: Conv(size_temp -> size_temp, stride 2)
    blocks = [nrm((p.size_temp, p.size_temp, 5, 5))]
    for bi in range(p.max_res - 2):
        n_in = p.size_temp // (2 * 2 ** bi)
        n_out = p.size_temp // 2 ** bi
        blocks.append(nrm((n_out, n_in, 5, 5)))

    # from2d[0]: Conv(1 -> size_temp); from2d[1+i]: Conv(1 -> size_temp / 2**i)
    from2d = [nrm((p.size_temp, 1, 5, 5))]
    for i in range(p.max_res - 1):
        n_out = p.size_temp // 2 ** i
        from2d.append(nrm((n_out, 1, 5, 5)))

    d_in = 4 * 16 * p.size_temp + p.label_dims
    fc = dict(
        w1=nrm((d_in, 512)), b1=nrm((1, 512)),
        g1=jnp.ones((1, 512), jnp.float32), beta1=jnp.zeros((1, 512), jnp.float32),
        w2=nrm((512, 512)), b2=nrm((1, 512)),
        g2=jnp.ones((1, 512), jnp.float32), beta2=jnp.zeros((1, 512), jnp.float32),
        w3=nrm((512, 1)), b3=nrm((1, 1)),
    )
    return dict(blocks=blocks, from2d=from2d, fc=fc)


if __name__ == "__main__":
    p = HParams()
    key = jax.random.PRNGKey(0)
    k_img, k_lab, k_noise, k_w = jax.random.split(key, 4)

    # scheme_index=1: input resolution 16x16 so the flattened feature is
    # 4*16*size_temp, matching the FC input dim in __init__.
    img = jax.random.normal(k_img, (2, 1, 16, 16), jnp.float32)
    labels = jax.random.normal(k_lab, (2, p.label_dims), jnp.float32)
    weights = init_params(k_w, p)

    fwd = jax.jit(functools.partial(discriminator_forward, p=p))
    out = fwd(weights, img, labels, jnp.float32(p.alpha), k_noise)
    out = jax.block_until_ready(out)

    assert out.shape == (2, 1) and out.dtype == jnp.float32
    assert bool(jnp.isfinite(out).all())
    print("KERNEL_OK")
</pallas_src>

<mosaic_0001>
module attributes {stable_mosaic.version = 11 : i64} {
  func.func @_disc_fused_kernel(%arg0: memref<1xf32, #tpu.memory_space<smem>>, %arg1: memref<2x8xf32, #tpu.memory_space<vmem>>, %arg2: memref<25x3200xbf16, #tpu.memory_space<vmem>>, %arg3: memref<25x128xbf16, #tpu.memory_space<vmem>>, %arg4: memref<4x25xbf16, #tpu.memory_space<vmem>>, %arg5: memref<25x4x4xbf16, #tpu.memory_space<vmem>>, %arg6: memref<4x25xbf16, #tpu.memory_space<vmem>>, %arg7: memref<256x512xbf16, #tpu.memory_space<vmem>>, %arg8: memref<8x512xbf16, #tpu.memory_space<vmem>>, %arg9: memref<1x512xf32, #tpu.memory_space<vmem>>, %arg10: memref<1x512xf32, #tpu.memory_space<vmem>>, %arg11: memref<1x512xf32, #tpu.memory_space<vmem>>, %arg12: memref<512x512xbf16, #tpu.memory_space<vmem>>, %arg13: memref<1x512xf32, #tpu.memory_space<vmem>>, %arg14: memref<1x512xf32, #tpu.memory_space<vmem>>, %arg15: memref<1x512xf32, #tpu.memory_space<vmem>>, %arg16: memref<512x1xbf16, #tpu.memory_space<vmem>>, %arg17: memref<1x1xf32, #tpu.memory_space<vmem>>, %arg18: memref<2x1xf32, #tpu.memory_space<vmem>>) attributes {dimension_semantics = [], scalar_prefetch = 0 : i64, scratch_operands = 0 : i64, tpu.core_type = #tpu.core_type<tc>} {
    %c0 = arith.constant 0 : index
    %0 = memref.load %arg0[%c0] : memref<1xf32, #tpu.memory_space<smem>>
    %c0_0 = arith.constant 0 : index
    %c0_1 = arith.constant 0 : index
    %1 = vector.load %arg4[%c0_0, %c0_1] : memref<4x25xbf16, #tpu.memory_space<vmem>>, vector<4x25xbf16>
    %c0_2 = arith.constant 0 : index
    %c0_3 = arith.constant 0 : index
    %2 = vector.load %arg2[%c0_2, %c0_3] : memref<25x3200xbf16, #tpu.memory_space<vmem>>, vector<25x3200xbf16>
    %cst = arith.constant dense<0.000000e+00> : vector<4x3200xf32>
    %3 = tpu.matmul %1, %2, %cst {dimension_numbers = #tpu.dot_dimension_numbers<[1], [0], [0], [1], [0, 0, 1, 1], [], []>} : vector<4x25xbf16>, vector<25x3200xbf16>, vector<4x3200xf32> -> vector<4x3200xf32>
    %4 = arith.truncf %3 : vector<4x3200xf32> to vector<4x3200xbf16>
    %cst_4 = arith.constant 0.000000e+00 : f32
    %5 = vector.broadcast %cst_4 : f32 to vector<4x128xf32>
    %c0_5 = arith.constant 0 : index
    %c0_6 = arith.constant 0 : index
    %c0_7 = arith.constant 0 : index
    %6 = vector.load %arg5[%c0_5, %c0_6, %c0_7] : memref<25x4x4xbf16, #tpu.memory_space<vmem>>, vector<1x4x4xbf16>
    %7 = vector.shape_cast %6 : vector<1x4x4xbf16> to vector<4x4xbf16>
    %8 = vector.extract_strided_slice %4 {offsets = [0, 0], sizes = [4, 128], strides = [1, 1]} : vector<4x3200xbf16> to vector<4x128xbf16>
    %cst_8 = arith.constant dense<0.000000e+00> : vector<4x128xf32>
    %9 = tpu.matmul %7, %8, %cst_8 {dimension_numbers = #tpu.dot_dimension_numbers<[1], [0], [0], [1], [0, 0, 1, 1], [], []>} : vector<4x4xbf16>, vector<4x128xbf16>, vector<4x128xf32> -> vector<4x128xf32>
    %10 = arith.addf %5, %9 : vector<4x128xf32>
    %c1 = arith.constant 1 : index
    %c0_9 = arith.constant 0 : index
    %c0_10 = arith.constant 0 : index
    %11 = vector.load %arg5[%c1, %c0_9, %c0_10] : memref<25x4x4xbf16, #tpu.memory_space<vmem>>, vector<1x4x4xbf16>
    %12 = vector.shape_cast %11 : vector<1x4x4xbf16> to vector<4x4xbf16>
    %13 = vector.extract_strided_slice %4 {offsets = [0, 128], sizes = [4, 128], strides = [1, 1]} : vector<4x3200xbf16> to vector<4x128xbf16>
    %cst_11 = arith.constant dense<0.000000e+00> : vector<4x128xf32>
    %14 = tpu.matmul %12, %13, %cst_11 {dimension_numbers = #tpu.dot_dimension_numbers<[1], [0], [0], [1], [0, 0, 1, 1], [], []>} : vector<4x4xbf16>, vector<4x128xbf16>, vector<4x128xf32> -> vector<4x128xf32>
    %15 = arith.addf %10, %14 : vector<4x128xf32>
    %c2 = arith.constant 2 : index
    %c0_12 = arith.constant 0 : index
    %c0_13 = arith.constant 0 : index
    %16 = vector.load %arg5[%c2, %c0_12, %c0_13] : memref<25x4x4xbf16, #tpu.memory_space<vmem>>, vector<1x4x4xbf16>
    %17 = vector.shape_cast %16 : vector<1x4x4xbf16> to vector<4x4xbf16>
    %18 = vector.extract_strided_slice %4 {offsets = [0, 256], sizes = [4, 128], strides = [1, 1]} : vector<4x3200xbf16> to vector<4x128xbf16>
    %cst_14 = arith.constant dense<0.000000e+00> : vector<4x128xf32>
    %19 = tpu.matmul %17, %18, %cst_14 {dimension_numbers = #tpu.dot_dimension_numbers<[1], [0], [0], [1], [0, 0, 1, 1], [], []>} : vector<4x4xbf16>, vector<4x128xbf16>, vector<4x128xf32> -> vector<4x128xf32>
    %20 = arith.addf %15, %19 : vector<4x128xf32>
    %c3 = arith.constant 3 : index
    %c0_15 = arith.constant 0 : index
    %c0_16 = arith.constant 0 : index
    %21 = vector.load %arg5[%c3, %c0_15, %c0_16] : memref<25x4x4xbf16, #tpu.memory_space<vmem>>, vector<1x4x4xbf16>
    %22 = vector.shape_cast %21 : vector<1x4x4xbf16> to vector<4x4xbf16>
    %23 = vector.extract_strided_slice %4 {offsets = [0, 384], sizes = [4, 128], strides = [1, 1]} : vector<4x3200xbf16> to vector<4x128xbf16>
    %cst_17 = arith.constant dense<0.000000e+00> : vector<4x128xf32>
    %24 = tpu.matmul %22, %23, %cst_17 {dimension_numbers = #tpu.dot_dimension_numbers<[1], [0], [0], [1], [0, 0, 1, 1], [], []>} : vector<4x4xbf16>, vector<4x128xbf16>, vector<4x128xf32> -> vector<4x128xf32>
    %25 = arith.addf %20, %24 : vector<4x128xf32>
    %c4 = arith.constant 4 : index
    %c0_18 = arith.constant 0 : index
    %c0_19 = arith.constant 0 : index
    %26 = vector.load %arg5[%c4, %c0_18, %c0_19] : memref<25x4x4xbf16, #tpu.memory_space<vmem>>, vector<1x4x4xbf16>
    %27 = vector.shape_cast %26 : vector<1x4x4xbf16> to vector<4x4xbf16>
    %28 = vector.extract_strided_slice %4 {offsets = [0, 512], sizes = [4, 128], strides = [1, 1]} : vector<4x3200xbf16> to vector<4x128xbf16>
    %cst_20 = arith.constant dense<0.000000e+00> : vector<4x128xf32>
    %29 = tpu.matmul %27, %28, %cst_20 {dimension_numbers = #tpu.dot_dimension_numbers<[1], [0], [0], [1], [0, 0, 1, 1], [], []>} : vector<4x4xbf16>, vector<4x128xbf16>, vector<4x128xf32> -> vector<4x128xf32>
    %30 = arith.addf %25, %29 : vector<4x128xf32>
    %c5 = arith.constant 5 : index
    %c0_21 = arith.constant 0 : index
    %c0_22 = arith.constant 0 : index
    %31 = vector.load %arg5[%c5, %c0_21, %c0_22] : memref<25x4x4xbf16, #tpu.memory_space<vmem>>, vector<1x4x4xbf16>
    %32 = vector.shape_cast %31 : vector<1x4x4xbf16> to vector<4x4xbf16>
    %33 = vector.extract_strided_slice %4 {offsets = [0, 640], sizes = [4, 128], strides = [1, 1]} : vector<4x3200xbf16> to vector<4x128xbf16>
    %cst_23 = arith.constant dense<0.000000e+00> : vector<4x128xf32>
    %34 = tpu.matmul %32, %33, %cst_23 {dimension_numbers = #tpu.dot_dimension_numbers<[1], [0], [0], [1], [0, 0, 1, 1], [], []>} : vector<4x4xbf16>, vector<4x128xbf16>, vector<4x128xf32> -> vector<4x128xf32>
    %35 = arith.addf %30, %34 : vector<4x128xf32>
    %c6 = arith.constant 6 : index
    %c0_24 = arith.constant 0 : index
    %c0_25 = arith.constant 0 : index
    %36 = vector.load %arg5[%c6, %c0_24, %c0_25] : memref<25x4x4xbf16, #tpu.memory_space<vmem>>, vector<1x4x4xbf16>
    %37 = vector.shape_cast %36 : vector<1x4x4xbf16> to vector<4x4xbf16>
    %38 = vector.extract_strided_slice %4 {offsets = [0, 768], sizes = [4, 128], strides = [1, 1]} : vector<4x3200xbf16> to vector<4x128xbf16>
    %cst_26 = arith.constant dense<0.000000e+00> : vector<4x128xf32>
    %39 = tpu.matmul %37, %38, %cst_26 {dimension_numbers = #tpu.dot_dimension_numbers<[1], [0], [0], [1], [0, 0, 1, 1], [], []>} : vector<4x4xbf16>, vector<4x128xbf16>, vector<4x128xf32> -> vector<4x128xf32>
    %40 = arith.addf %35, %39 : vector<4x128xf32>
    %c7 = arith.constant 7 : index
    %c0_27 = arith.constant 0 : index
    %c0_28 = arith.constant 0 : index
    %41 = vector.load %arg5[%c7, %c0_27, %c0_28] : memref<25x4x4xbf16, #tpu.memory_space<vmem>>, vector<1x4x4xbf16>
    %42 = vector.shape_cast %41 : vector<1x4x4xbf16> to vector<4x4xbf16>
    %43 = vector.extract_strided_slice %4 {offsets = [0, 896], sizes = [4, 128], strides = [1, 1]} : vector<4x3200xbf16> to vector<4x128xbf16>
    %cst_29 = arith.constant dense<0.000000e+00> : vector<4x128xf32>
    %44 = tpu.matmul %42, %43, %cst_29 {dimension_numbers = #tpu.dot_dimension_numbers<[1], [0], [0], [1], [0, 0, 1, 1], [], []>} : vector<4x4xbf16>, vector<4x128xbf16>, vector<4x128xf32> -> vector<4x128xf32>
    %45 = arith.addf %40, %44 : vector<4x128xf32>
    %c8 = arith.constant 8 : index
    %c0_30 = arith.constant 0 : index
    %c0_31 = arith.constant 0 : index
    %46 = vector.load %arg5[%c8, %c0_30, %c0_31] : memref<25x4x4xbf16, #tpu.memory_space<vmem>>, vector<1x4x4xbf16>
    %47 = vector.shape_cast %46 : vector<1x4x4xbf16> to vector<4x4xbf16>
    %48 = vector.extract_strided_slice %4 {offsets = [0, 1024], sizes = [4, 128], strides = [1, 1]} : vector<4x3200xbf16> to vector<4x128xbf16>
    %cst_32 = arith.constant dense<0.000000e+00> : vector<4x128xf32>
    %49 = tpu.matmul %47, %48, %cst_32 {dimension_numbers = #tpu.dot_dimension_numbers<[1], [0], [0], [1], [0, 0, 1, 1], [], []>} : vector<4x4xbf16>, vector<4x128xbf16>, vector<4x128xf32> -> vector<4x128xf32>
    %50 = arith.addf %45, %49 : vector<4x128xf32>
    %c9 = arith.constant 9 : index
    %c0_33 = arith.constant 0 : index
    %c0_34 = arith.constant 0 : index
    %51 = vector.load %arg5[%c9, %c0_33, %c0_34] : memref<25x4x4xbf16, #tpu.memory_space<vmem>>, vector<1x4x4xbf16>
    %52 = vector.shape_cast %51 : vector<1x4x4xbf16> to vector<4x4xbf16>
    %53 = vector.extract_strided_slice %4 {offsets = [0, 1152], sizes = [4, 128], strides = [1, 1]} : vector<4x3200xbf16> to vector<4x128xbf16>
    %cst_35 = arith.constant dense<0.000000e+00> : vector<4x128xf32>
    %54 = tpu.matmul %52, %53, %cst_35 {dimension_numbers = #tpu.dot_dimension_numbers<[1], [0], [0], [1], [0, 0, 1, 1], [], []>} : vector<4x4xbf16>, vector<4x128xbf16>, vector<4x128xf32> -> vector<4x128xf32>
    %55 = arith.addf %50, %54 : vector<4x128xf32>
    %c10 = arith.constant 10 : index
    %c0_36 = arith.constant 0 : index
    %c0_37 = arith.constant 0 : index
    %56 = vector.load %arg5[%c10, %c0_36, %c0_37] : memref<25x4x4xbf16, #tpu.memory_space<vmem>>, vector<1x4x4xbf16>
    %57 = vector.shape_cast %56 : vector<1x4x4xbf16> to vector<4x4xbf16>
    %58 = vector.extract_strided_slice %4 {offsets = [0, 1280], sizes = [4, 128], strides = [1, 1]} : vector<4x3200xbf16> to vector<4x128xbf16>
    %cst_38 = arith.constant dense<0.000000e+00> : vector<4x128xf32>
    %59 = tpu.matmul %57, %58, %cst_38 {dimension_numbers = #tpu.dot_dimension_numbers<[1], [0], [0], [1], [0, 0, 1, 1], [], []>} : vector<4x4xbf16>, vector<4x128xbf16>, vector<4x128xf32> -> vector<4x128xf32>
    %60 = arith.addf %55, %59 : vector<4x128xf32>
    %c11 = arith.constant 11 : index
    %c0_39 = arith.constant 0 : index
    %c0_40 = arith.constant 0 : index
    %61 = vector.load %arg5[%c11, %c0_39, %c0_40] : memref<25x4x4xbf16, #tpu.memory_space<vmem>>, vector<1x4x4xbf16>
    %62 = vector.shape_cast %61 : vector<1x4x4xbf16> to vector<4x4xbf16>
    %63 = vector.extract_strided_slice %4 {offsets = [0, 1408], sizes = [4, 128], strides = [1, 1]} : vector<4x3200xbf16> to vector<4x128xbf16>
    %cst_41 = arith.constant dense<0.000000e+00> : vector<4x128xf32>
    %64 = tpu.matmul %62, %63, %cst_41 {dimension_numbers = #tpu.dot_dimension_numbers<[1], [0], [0], [1], [0, 0, 1, 1], [], []>} : vector<4x4xbf16>, vector<4x128xbf16>, vector<4x128xf32> -> vector<4x128xf32>
    %65 = arith.addf %60, %64 : vector<4x128xf32>
    %c12 = arith.constant 12 : index
    %c0_42 = arith.constant 0 : index
    %c0_43 = arith.constant 0 : index
    %66 = vector.load %arg5[%c12, %c0_42, %c0_43] : memref<25x4x4xbf16, #tpu.memory_space<vmem>>, vector<1x4x4xbf16>
    %67 = vector.shape_cast %66 : vector<1x4x4xbf16> to vector<4x4xbf16>
    %68 = vector.extract_strided_slice %4 {offsets = [0, 1536], sizes = [4, 128], strides = [1, 1]} : vector<4x3200xbf16> to vector<4x128xbf16>
    %cst_44 = arith.constant dense<0.000000e+00> : vector<4x128xf32>
    %69 = tpu.matmul %67, %68, %cst_44 {dimension_numbers = #tpu.dot_dimension_numbers<[1], [0], [0], [1], [0, 0, 1, 1], [], []>} : vector<4x4xbf16>, vector<4x128xbf16>, vector<4x128xf32> -> vector<4x128xf32>
    %70 = arith.addf %65, %69 : vector<4x128xf32>
    %c13 = arith.constant 13 : index
    %c0_45 = arith.constant 0 : index
    %c0_46 = arith.constant 0 : index
    %71 = vector.load %arg5[%c13, %c0_45, %c0_46] : memref<25x4x4xbf16, #tpu.memory_space<vmem>>, vector<1x4x4xbf16>
    %72 = vector.shape_cast %71 : vector<1x4x4xbf16> to vector<4x4xbf16>
    %73 = vector.extract_strided_slice %4 {offsets = [0, 1664], sizes = [4, 128], strides = [1, 1]} : vector<4x3200xbf16> to vector<4x128xbf16>
    %cst_47 = arith.constant dense<0.000000e+00> : vector<4x128xf32>
    %74 = tpu.matmul %72, %73, %cst_47 {dimension_numbers = #tpu.dot_dimension_numbers<[1], [0], [0], [1], [0, 0, 1, 1], [], []>} : vector<4x4xbf16>, vector<4x128xbf16>, vector<4x128xf32> -> vector<4x128xf32>
    %75 = arith.addf %70, %74 : vector<4x128xf32>
    %c14 = arith.constant 14 : index
    %c0_48 = arith.constant 0 : index
    %c0_49 = arith.constant 0 : index
    %76 = vector.load %arg5[%c14, %c0_48, %c0_49] : memref<25x4x4xbf16, #tpu.memory_space<vmem>>, vector<1x4x4xbf16>
    %77 = vector.shape_cast %76 : vector<1x4x4xbf16> to vector<4x4xbf16>
    %78 = vector.extract_strided_slice %4 {offsets = [0, 1792], sizes = [4, 128], strides = [1, 1]} : vector<4x3200xbf16> to vector<4x128xbf16>
    %cst_50 = arith.constant dense<0.000000e+00> : vector<4x128xf32>
    %79 = tpu.matmul %77, %78, %cst_50 {dimension_numbers = #tpu.dot_dimension_numbers<[1], [0], [0], [1], [0, 0, 1, 1], [], []>} : vector<4x4xbf16>, vector<4x128xbf16>, vector<4x128xf32> -> vector<4x128xf32>
    %80 = arith.addf %75, %79 : vector<4x128xf32>
    %c15 = arith.constant 15 : index
    %c0_51 = arith.constant 0 : index
    %c0_52 = arith.constant 0 : index
    %81 = vector.load %arg5[%c15, %c0_51, %c0_52] : memref<25x4x4xbf16, #tpu.memory_space<vmem>>, vector<1x4x4xbf16>
    %82 = vector.shape_cast %81 : vector<1x4x4xbf16> to vector<4x4xbf16>
    %83 = vector.extract_strided_slice %4 {offsets = [0, 1920], sizes = [4, 128], strides = [1, 1]} : vector<4x3200xbf16> to vector<4x128xbf16>
    %cst_53 = arith.constant dense<0.000000e+00> : vector<4x128xf32>
    %84 = tpu.matmul %82, %83, %cst_53 {dimension_numbers = #tpu.dot_dimension_numbers<[1], [0], [0], [1], [0, 0, 1, 1], [], []>} : vector<4x4xbf16>, vector<4x128xbf16>, vector<4x128xf32> -> vector<4x128xf32>
    %85 = arith.addf %80, %84 : vector<4x128xf32>
    %c16 = arith.constant 16 : index
    %c0_54 = arith.constant 0 : index
    %c0_55 = arith.constant 0 : index
    %86 = vector.load %arg5[%c16, %c0_54, %c0_55] : memref<25x4x4xbf16, #tpu.memory_space<vmem>>, vector<1x4x4xbf16>
    %87 = vector.shape_cast %86 : vector<1x4x4xbf16> to vector<4x4xbf16>
    %88 = vector.extract_strided_slice %4 {offsets = [0, 2048], sizes = [4, 128], strides = [1, 1]} : vector<4x3200xbf16> to vector<4x128xbf16>
    %cst_56 = arith.constant dense<0.000000e+00> : vector<4x128xf32>
    %89 = tpu.matmul %87, %88, %cst_56 {dimension_numbers = #tpu.dot_dimension_numbers<[1], [0], [0], [1], [0, 0, 1, 1], [], []>} : vector<4x4xbf16>, vector<4x128xbf16>, vector<4x128xf32> -> vector<4x128xf32>
    %90 = arith.addf %85, %89 : vector<4x128xf32>
    %c17 = arith.constant 17 : index
    %c0_57 = arith.constant 0 : index
    %c0_58 = arith.constant 0 : index
    %91 = vector.load %arg5[%c17, %c0_57, %c0_58] : memref<25x4x4xbf16, #tpu.memory_space<vmem>>, vector<1x4x4xbf16>
    %92 = vector.shape_cast %91 : vector<1x4x4xbf16> to vector<4x4xbf16>
    %93 = vector.extract_strided_slice %4 {offsets = [0, 2176], sizes = [4, 128], strides = [1, 1]} : vector<4x3200xbf16> to vector<4x128xbf16>
    %cst_59 = arith.constant dense<0.000000e+00> : vector<4x128xf32>
    %94 = tpu.matmul %92, %93, %cst_59 {dimension_numbers = #tpu.dot_dimension_numbers<[1], [0], [0], [1], [0, 0, 1, 1], [], []>} : vector<4x4xbf16>, vector<4x128xbf16>, vector<4x128xf32> -> vector<4x128xf32>
    %95 = arith.addf %90, %94 : vector<4x128xf32>
    %c18 = arith.constant 18 : index
    %c0_60 = arith.constant 0 : index
    %c0_61 = arith.constant 0 : index
    %96 = vector.load %arg5[%c18, %c0_60, %c0_61] : memref<25x4x4xbf16, #tpu.memory_space<vmem>>, vector<1x4x4xbf16>
    %97 = vector.shape_cast %96 : vector<1x4x4xbf16> to vector<4x4xbf16>
    %98 = vector.extract_strided_slice %4 {offsets = [0, 2304], sizes = [4, 128], strides = [1, 1]} : vector<4x3200xbf16> to vector<4x128xbf16>
    %cst_62 = arith.constant dense<0.000000e+00> : vector<4x128xf32>
    %99 = tpu.matmul %97, %98, %cst_62 {dimension_numbers = #tpu.dot_dimension_numbers<[1], [0], [0], [1], [0, 0, 1, 1], [], []>} : vector<4x4xbf16>, vector<4x128xbf16>, vector<4x128xf32> -> vector<4x128xf32>
    %100 = arith.addf %95, %99 : vector<4x128xf32>
    %c19 = arith.constant 19 : index
    %c0_63 = arith.constant 0 : index
    %c0_64 = arith.constant 0 : index
    %101 = vector.load %arg5[%c19, %c0_63, %c0_64] : memref<25x4x4xbf16, #tpu.memory_space<vmem>>, vector<1x4x4xbf16>
    %102 = vector.shape_cast %101 : vector<1x4x4xbf16> to vector<4x4xbf16>
    %103 = vector.extract_strided_slice %4 {offsets = [0, 2432], sizes = [4, 128], strides = [1, 1]} : vector<4x3200xbf16> to vector<4x128xbf16>
    %cst_65 = arith.constant dense<0.000000e+00> : vector<4x128xf32>
    %104 = tpu.matmul %102, %103, %cst_65 {dimension_numbers = #tpu.dot_dimension_numbers<[1], [0], [0], [1], [0, 0, 1, 1], [], []>} : vector<4x4xbf16>, vector<4x128xbf16>, vector<4x128xf32> -> vector<4x128xf32>
    %105 = arith.addf %100, %104 : vector<4x128xf32>
    %c20 = arith.constant 20 : index
    %c0_66 = arith.constant 0 : index
    %c0_67 = arith.constant 0 : index
    %106 = vector.load %arg5[%c20, %c0_66, %c0_67] : memref<25x4x4xbf16, #tpu.memory_space<vmem>>, vector<1x4x4xbf16>
    %107 = vector.shape_cast %106 : vector<1x4x4xbf16> to vector<4x4xbf16>
    %108 = vector.extract_strided_slice %4 {offsets = [0, 2560], sizes = [4, 128], strides = [1, 1]} : vector<4x3200xbf16> to vector<4x128xbf16>
    %cst_68 = arith.constant dense<0.000000e+00> : vector<4x128xf32>
    %109 = tpu.matmul %107, %108, %cst_68 {dimension_numbers = #tpu.dot_dimension_numbers<[1], [0], [0], [1], [0, 0, 1, 1], [], []>} : vector<4x4xbf16>, vector<4x128xbf16>, vector<4x128xf32> -> vector<4x128xf32>
    %110 = arith.addf %105, %109 : vector<4x128xf32>
    %c21 = arith.constant 21 : index
    %c0_69 = arith.constant 0 : index
    %c0_70 = arith.constant 0 : index
    %111 = vector.load %arg5[%c21, %c0_69, %c0_70] : memref<25x4x4xbf16, #tpu.memory_space<vmem>>, vector<1x4x4xbf16>
    %112 = vector.shape_cast %111 : vector<1x4x4xbf16> to vector<4x4xbf16>
    %113 = vector.extract_strided_slice %4 {offsets = [0, 2688], sizes = [4, 128], strides = [1, 1]} : vector<4x3200xbf16> to vector<4x128xbf16>
    %cst_71 = arith.constant dense<0.000000e+00> : vector<4x128xf32>
    %114 = tpu.matmul %112, %113, %cst_71 {dimension_numbers = #tpu.dot_dimension_numbers<[1], [0], [0], [1], [0, 0, 1, 1], [], []>} : vector<4x4xbf16>, vector<4x128xbf16>, vector<4x128xf32> -> vector<4x128xf32>
    %115 = arith.addf %110, %114 : vector<4x128xf32>
    %c22 = arith.constant 22 : index
    %c0_72 = arith.constant 0 : index
    %c0_73 = arith.constant 0 : index
    %116 = vector.load %arg5[%c22, %c0_72, %c0_73] : memref<25x4x4xbf16, #tpu.memory_space<vmem>>, vector<1x4x4xbf16>
    %117 = vector.shape_cast %116 : vector<1x4x4xbf16> to vector<4x4xbf16>
    %118 = vector.extract_strided_slice %4 {offsets = [0, 2816], sizes = [4, 128], strides = [1, 1]} : vector<4x3200xbf16> to vector<4x128xbf16>
    %cst_74 = arith.constant dense<0.000000e+00> : vector<4x128xf32>
    %119 = tpu.matmul %117, %118, %cst_74 {dimension_numbers = #tpu.dot_dimension_numbers<[1], [0], [0], [1], [0, 0, 1, 1], [], []>} : vector<4x4xbf16>, vector<4x128xbf16>, vector<4x128xf32> -> vector<4x128xf32>
    %120 = arith.addf %115, %119 : vector<4x128xf32>
    %c23 = arith.constant 23 : index
    %c0_75 = arith.constant 0 : index
    %c0_76 = arith.constant 0 : index
    %121 = vector.load %arg5[%c23, %c0_75, %c0_76] : memref<25x4x4xbf16, #tpu.memory_space<vmem>>, vector<1x4x4xbf16>
    %122 = vector.shape_cast %121 : vector<1x4x4xbf16> to vector<4x4xbf16>
    %123 = vector.extract_strided_slice %4 {offsets = [0, 2944], sizes = [4, 128], strides = [1, 1]} : vector<4x3200xbf16> to vector<4x128xbf16>
    %cst_77 = arith.constant dense<0.000000e+00> : vector<4x128xf32>
    %124 = tpu.matmul %122, %123, %cst_77 {dimension_numbers = #tpu.dot_dimension_numbers<[1], [0], [0], [1], [0, 0, 1, 1], [], []>} : vector<4x4xbf16>, vector<4x128xbf16>, vector<4x128xf32> -> vector<4x128xf32>
    %125 = arith.addf %120, %124 : vector<4x128xf32>
    %c24 = arith.constant 24 : index
    %c0_78 = arith.constant 0 : index
    %c0_79 = arith.constant 0 : index
    %126 = vector.load %arg5[%c24, %c0_78, %c0_79] : memref<25x4x4xbf16, #tpu.memory_space<vmem>>, vector<1x4x4xbf16>
    %127 = vector.shape_cast %126 : vector<1x4x4xbf16> to vector<4x4xbf16>
    %128 = vector.extract_strided_slice %4 {offsets = [0, 3072], sizes = [4, 128], strides = [1, 1]} : vector<4x3200xbf16> to vector<4x128xbf16>
    %cst_80 = arith.constant dense<0.000000e+00> : vector<4x128xf32>
    %129 = tpu.matmul %127, %128, %cst_80 {dimension_numbers = #tpu.dot_dimension_numbers<[1], [0], [0], [1], [0, 0, 1, 1], [], []>} : vector<4x4xbf16>, vector<4x128xbf16>, vector<4x128xf32> -> vector<4x128xf32>
    %130 = arith.addf %125, %129 : vector<4x128xf32>
    %cst_81 = arith.constant 0.000000e+00 : f32
    %131 = vector.broadcast %cst_81 : f32 to vector<4x128xf32>
    %132 = arith.cmpf oge, %130, %131 : vector<4x128xf32>
    %cst_82 = arith.constant 2.000000e-01 : f32
    %133 = vector.broadcast %cst_82 : f32 to vector<4x128xf32>
    %134 = arith.mulf %133, %130 : vector<4x128xf32>
    %135 = arith.select %132, %130, %134 : vector<4x128xi1>, vector<4x128xf32>
    %c0_83 = arith.constant 0 : index
    %c0_84 = arith.constant 0 : index
    %136 = vector.load %arg6[%c0_83, %c0_84] : memref<4x25xbf16, #tpu.memory_space<vmem>>, vector<4x25xbf16>
    %c0_85 = arith.constant 0 : index
    %c0_86 = arith.constant 0 : index
    %137 = vector.load %arg3[%c0_85, %c0_86] : memref<25x128xbf16, #tpu.memory_space<vmem>>, vector<25x128xbf16>
    %cst_87 = arith.constant dense<0.000000e+00> : vector<4x128xf32>
    %138 = tpu.matmul %136, %137, %cst_87 {dimension_numbers = #tpu.dot_dimension_numbers<[1], [0], [0], [1], [0, 0, 1, 1], [], []>} : vector<4x25xbf16>, vector<25x128xbf16>, vector<4x128xf32> -> vector<4x128xf32>
    %139 = vector.broadcast %0 : f32 to vector<4x128xf32>
    %140 = arith.mulf %139, %135 : vector<4x128xf32>
    %cst_88 = arith.constant 1.000000e+00 : f32
    %141 = arith.subf %cst_88, %0 : f32
    %142 = vector.broadcast %141 : f32 to vector<4x128xf32>
    %143 = arith.mulf %142, %138 : vector<4x128xf32>
    %144 = arith.addf %140, %143 : vector<4x128xf32>
    %c0_89 = arith.constant 0 : index
    %c0_90 = arith.constant 0 : index
    %145 = vector.load %arg1[%c0_89, %c0_90] : memref<2x8xf32, #tpu.memory_space<vmem>>, vector<2x8xf32>
    %146 = arith.truncf %145 : vector<2x8xf32> to vector<2x8xbf16>
    %c0_91 = arith.constant 0 : index
    %c0_92 = arith.constant 0 : index
    %147 = vector.load %arg8[%c0_91, %c0_92] : memref<8x512xbf16, #tpu.memory_space<vmem>>, vector<8x512xbf16>
    %cst_93 = arith.constant dense<0.000000e+00> : vector<2x512xf32>
    %148 = tpu.matmul %146, %147, %cst_93 {dimension_numbers = #tpu.dot_dimension_numbers<[1], [0], [0], [1], [0, 0, 1, 1], [], []>} : vector<2x8xbf16>, vector<8x512xbf16>, vector<2x512xf32> -> vector<2x512xf32>
    %c0_94 = arith.constant 0 : index
    %c0_95 = arith.constant 0 : index
    %149 = vector.load %arg9[%c0_94, %c0_95] : memref<1x512xf32, #tpu.memory_space<vmem>>, vector<1x512xf32>
    %150 = vector.broadcast %149 : vector<1x512xf32> to vector<2x512xf32>
    %151 = arith.addf %148, %150 : vector<2x512xf32>
    %152 = vector.extract_strided_slice %144 {offsets = [0, 0], sizes = [1, 64], strides = [1, 1]} : vector<4x128xf32> to vector<1x64xf32>
    %153 = vector.extract_strided_slice %144 {offsets = [0, 64], sizes = [1, 64], strides = [1, 1]} : vector<4x128xf32> to vector<1x64xf32>
    %154 = tpu.concatenate %152, %153 in 0 : vector<1x64xf32>, vector<1x64xf32> -> vector<2x64xf32>
    %155 = arith.truncf %154 : vector<2x64xf32> to vector<2x64xbf16>
    %c0_96 = arith.constant 0 : index
    %c0_97 = arith.constant 0 : index
    %156 = vector.load %arg7[%c0_96, %c0_97] : memref<256x512xbf16, #tpu.memory_space<vmem>>, vector<64x512xbf16>
    %cst_98 = arith.constant dense<0.000000e+00> : vector<2x512xf32>
    %157 = tpu.matmul %155, %156, %cst_98 {dimension_numbers = #tpu.dot_dimension_numbers<[1], [0], [0], [1], [0, 0, 1, 1], [], []>} : vector<2x64xbf16>, vector<64x512xbf16>, vector<2x512xf32> -> vector<2x512xf32>
    %158 = arith.addf %151, %157 : vector<2x512xf32>
    %159 = vector.extract_strided_slice %144 {offsets = [1, 0], sizes = [1, 64], strides = [1, 1]} : vector<4x128xf32> to vector<1x64xf32>
    %160 = vector.extract_strided_slice %144 {offsets = [1, 64], sizes = [1, 64], strides = [1, 1]} : vector<4x128xf32> to vector<1x64xf32>
    %161 = tpu.concatenate %159, %160 in 0 : vector<1x64xf32>, vector<1x64xf32> -> vector<2x64xf32>
    %162 = arith.truncf %161 : vector<2x64xf32> to vector<2x64xbf16>
    %c64 = arith.constant 64 : index
    %c0_99 = arith.constant 0 : index
    %163 = vector.load %arg7[%c64, %c0_99] : memref<256x512xbf16, #tpu.memory_space<vmem>>, vector<64x512xbf16>
    %cst_100 = arith.constant dense<0.000000e+00> : vector<2x512xf32>
    %164 = tpu.matmul %162, %163, %cst_100 {dimension_numbers = #tpu.dot_dimension_numbers<[1], [0], [0], [1], [0, 0, 1, 1], [], []>} : vector<2x64xbf16>, vector<64x512xbf16>, vector<2x512xf32> -> vector<2x512xf32>
    %165 = arith.addf %158, %164 : vector<2x512xf32>
    %166 = vector.extract_strided_slice %144 {offsets = [2, 0], sizes = [1, 64], strides = [1, 1]} : vector<4x128xf32> to vector<1x64xf32>
    %167 = vector.extract_strided_slice %144 {offsets = [2, 64], sizes = [1, 64], strides = [1, 1]} : vector<4x128xf32> to vector<1x64xf32>
    %168 = tpu.concatenate %166, %167 in 0 : vector<1x64xf32>, vector<1x64xf32> -> vector<2x64xf32>
    %169 = arith.truncf %168 : vector<2x64xf32> to vector<2x64xbf16>
    %c128 = arith.constant 128 : index
    %c0_101 = arith.constant 0 : index
    %170 = vector.load %arg7[%c128, %c0_101] : memref<256x512xbf16, #tpu.memory_space<vmem>>, vector<64x512xbf16>
    %cst_102 = arith.constant dense<0.000000e+00> : vector<2x512xf32>
    %171 = tpu.matmul %169, %170, %cst_102 {dimension_numbers = #tpu.dot_dimension_numbers<[1], [0], [0], [1], [0, 0, 1, 1], [], []>} : vector<2x64xbf16>, vector<64x512xbf16>, vector<2x512xf32> -> vector<2x512xf32>
    %172 = arith.addf %165, %171 : vector<2x512xf32>
    %173 = vector.extract_strided_slice %144 {offsets = [3, 0], sizes = [1, 64], strides = [1, 1]} : vector<4x128xf32> to vector<1x64xf32>
    %174 = vector.extract_strided_slice %144 {offsets = [3, 64], sizes = [1, 64], strides = [1, 1]} : vector<4x128xf32> to vector<1x64xf32>
    %175 = tpu.concatenate %173, %174 in 0 : vector<1x64xf32>, vector<1x64xf32> -> vector<2x64xf32>
    %176 = arith.truncf %175 : vector<2x64xf32> to vector<2x64xbf16>
    %c192 = arith.constant 192 : index
    %c0_103 = arith.constant 0 : index
    %177 = vector.load %arg7[%c192, %c0_103] : memref<256x512xbf16, #tpu.memory_space<vmem>>, vector<64x512xbf16>
    %cst_104 = arith.constant dense<0.000000e+00> : vector<2x512xf32>
    %178 = tpu.matmul %176, %177, %cst_104 {dimension_numbers = #tpu.dot_dimension_numbers<[1], [0], [0], [1], [0, 0, 1, 1], [], []>} : vector<2x64xbf16>, vector<64x512xbf16>, vector<2x512xf32> -> vector<2x512xf32>
    %179 = arith.addf %172, %178 : vector<2x512xf32>
    %c0_105 = arith.constant 0 : index
    %c0_106 = arith.constant 0 : index
    %180 = vector.load %arg10[%c0_105, %c0_106] : memref<1x512xf32, #tpu.memory_space<vmem>>, vector<1x512xf32>
    %c0_107 = arith.constant 0 : index
    %c0_108 = arith.constant 0 : index
    %181 = vector.load %arg11[%c0_107, %c0_108] : memref<1x512xf32, #tpu.memory_space<vmem>>, vector<1x512xf32>
    %cst_109 = arith.constant dense<0.000000e+00> : vector<2xf32>
    %182 = vector.multi_reduction <add>, %179, %cst_109 [1] : vector<2x512xf32> to vector<2xf32>
    %183 = vector.shape_cast %182 : vector<2xf32> to vector<2x1xf32>
    %cst_110 = arith.constant 5.120000e+02 : f32
    %184 = vector.broadcast %cst_110 : f32 to vector<2x1xf32>
    %185 = arith.divf %183, %184 : vector<2x1xf32>
    %186 = vector.broadcast %185 : vector<2x1xf32> to vector<2x512xf32>
    %187 = arith.subf %179, %186 : vector<2x512xf32>
    %188 = arith.mulf %187, %187 : vector<2x512xf32>
    %cst_111 = arith.constant dense<0.000000e+00> : vector<2xf32>
    %189 = vector.multi_reduction <add>, %188, %cst_111 [1] : vector<2x512xf32> to vector<2xf32>
    %190 = vector.shape_cast %189 : vector<2xf32> to vector<2x1xf32>
    %cst_112 = arith.constant 5.120000e+02 : f32
    %191 = vector.broadcast %cst_112 : f32 to vector<2x1xf32>
    %192 = arith.divf %190, %191 : vector<2x1xf32>
    %193 = vector.broadcast %185 : vector<2x1xf32> to vector<2x512xf32>
    %194 = arith.subf %179, %193 : vector<2x512xf32>
    %cst_113 = arith.constant 9.99999974E-6 : f32
    %195 = vector.broadcast %cst_113 : f32 to vector<2x1xf32>
    %196 = arith.addf %192, %195 : vector<2x1xf32>
    %197 = math.rsqrt %196 : vector<2x1xf32>
    %198 = vector.broadcast %197 : vector<2x1xf32> to vector<2x512xf32>
    %199 = arith.mulf %194, %198 : vector<2x512xf32>
    %200 = vector.broadcast %180 : vector<1x512xf32> to vector<2x512xf32>
    %201 = arith.mulf %199, %200 : vector<2x512xf32>
    %202 = vector.broadcast %181 : vector<1x512xf32> to vector<2x512xf32>
    %203 = arith.addf %201, %202 : vector<2x512xf32>
    %cst_114 = arith.constant 0.000000e+00 : f32
    %204 = vector.broadcast %cst_114 : f32 to vector<2x512xf32>
    %205 = arith.cmpf oge, %203, %204 : vector<2x512xf32>
    %cst_115 = arith.constant 2.000000e-01 : f32
    %206 = vector.broadcast %cst_115 : f32 to vector<2x512xf32>
    %207 = arith.mulf %206, %203 : vector<2x512xf32>
    %208 = arith.select %205, %203, %207 : vector<2x512xi1>, vector<2x512xf32>
    %209 = arith.truncf %208 : vector<2x512xf32> to vector<2x512xbf16>
    %c0_116 = arith.constant 0 : index
    %c0_117 = arith.constant 0 : index
    %210 = vector.load %arg12[%c0_116, %c0_117] : memref<512x512xbf16, #tpu.memory_space<vmem>>, vector<512x512xbf16>
    %cst_118 = arith.constant dense<0.000000e+00> : vector<2x512xf32>
    %211 = tpu.matmul %209, %210, %cst_118 {dimension_numbers = #tpu.dot_dimension_numbers<[1], [0], [0], [1], [0, 0, 1, 1], [], []>} : vector<2x512xbf16>, vector<512x512xbf16>, vector<2x512xf32> -> vector<2x512xf32>
    %c0_119 = arith.constant 0 : index
    %c0_120 = arith.constant 0 : index
    %212 = vector.load %arg13[%c0_119, %c0_120] : memref<1x512xf32, #tpu.memory_space<vmem>>, vector<1x512xf32>
    %213 = vector.broadcast %212 : vector<1x512xf32> to vector<2x512xf32>
    %214 = arith.addf %211, %213 : vector<2x512xf32>
    %c0_121 = arith.constant 0 : index
    %c0_122 = arith.constant 0 : index
    %215 = vector.load %arg14[%c0_121, %c0_122] : memref<1x512xf32, #tpu.memory_space<vmem>>, vector<1x512xf32>
    %c0_123 = arith.constant 0 : index
    %c0_124 = arith.constant 0 : index
    %216 = vector.load %arg15[%c0_123, %c0_124] : memref<1x512xf32, #tpu.memory_space<vmem>>, vector<1x512xf32>
    %cst_125 = arith.constant dense<0.000000e+00> : vector<2xf32>
    %217 = vector.multi_reduction <add>, %214, %cst_125 [1] : vector<2x512xf32> to vector<2xf32>
    %218 = vector.shape_cast %217 : vector<2xf32> to vector<2x1xf32>
    %cst_126 = arith.constant 5.120000e+02 : f32
    %219 = vector.broadcast %cst_126 : f32 to vector<2x1xf32>
    %220 = arith.divf %218, %219 : vector<2x1xf32>
    %221 = vector.broadcast %220 : vector<2x1xf32> to vector<2x512xf32>
    %222 = arith.subf %214, %221 : vector<2x512xf32>
    %223 = arith.mulf %222, %222 : vector<2x512xf32>
    %cst_127 = arith.constant dense<0.000000e+00> : vector<2xf32>
    %224 = vector.multi_reduction <add>, %223, %cst_127 [1] : vector<2x512xf32> to vector<2xf32>
    %225 = vector.shape_cast %224 : vector<2xf32> to vector<2x1xf32>
    %cst_128 = arith.constant 5.120000e+02 : f32
    %226 = vector.broadcast %cst_128 : f32 to vector<2x1xf32>
    %227 = arith.divf %225, %226 : vector<2x1xf32>
    %228 = vector.broadcast %220 : vector<2x1xf32> to vector<2x512xf32>
    %229 = arith.subf %214, %228 : vector<2x512xf32>
    %cst_129 = arith.constant 9.99999974E-6 : f32
    %230 = vector.broadcast %cst_129 : f32 to vector<2x1xf32>
    %231 = arith.addf %227, %230 : vector<2x1xf32>
    %232 = math.rsqrt %231 : vector<2x1xf32>
    %233 = vector.broadcast %232 : vector<2x1xf32> to vector<2x512xf32>
    %234 = arith.mulf %229, %233 : vector<2x512xf32>
    %235 = vector.broadcast %215 : vector<1x512xf32> to vector<2x512xf32>
    %236 = arith.mulf %234, %235 : vector<2x512xf32>
    %237 = vector.broadcast %216 : vector<1x512xf32> to vector<2x512xf32>
    %238 = arith.addf %236, %237 : vector<2x512xf32>
    %cst_130 = arith.constant 0.000000e+00 : f32
    %239 = vector.broadcast %cst_130 : f32 to vector<2x512xf32>
    %240 = arith.cmpf oge, %238, %239 : vector<2x512xf32>
    %cst_131 = arith.constant 2.000000e-01 : f32
    %241 = vector.broadcast %cst_131 : f32 to vector<2x512xf32>
    %242 = arith.mulf %241, %238 : vector<2x512xf32>
    %243 = arith.select %240, %238, %242 : vector<2x512xi1>, vector<2x512xf32>
    %244 = arith.truncf %243 : vector<2x512xf32> to vector<2x512xbf16>
    %c0_132 = arith.constant 0 : index
    %c0_133 = arith.constant 0 : index
    %245 = vector.load %arg16[%c0_132, %c0_133] : memref<512x1xbf16, #tpu.memory_space<vmem>>, vector<512x1xbf16>
    %cst_134 = arith.constant dense<0.000000e+00> : vector<2x1xf32>
    %246 = tpu.matmul %244, %245, %cst_134 {dimension_numbers = #tpu.dot_dimension_numbers<[1], [0], [0], [1], [0, 0, 1, 1], [], []>} : vector<2x512xbf16>, vector<512x1xbf16>, vector<2x1xf32> -> vector<2x1xf32>
    %c0_135 = arith.constant 0 : index
    %c0_136 = arith.constant 0 : index
    %247 = vector.load %arg17[%c0_135, %c0_136] : memref<1x1xf32, #tpu.memory_space<vmem>>, vector<1x1xf32>
    %248 = vector.broadcast %247 : vector<1x1xf32> to vector<2x1xf32>
    %249 = arith.addf %246, %248 : vector<2x1xf32>
    %c0_137 = arith.constant 0 : index
    %c0_138 = arith.constant 0 : index
    %250 = vector.load %arg18[%c0_137, %c0_138] : memref<2x1xf32, #tpu.memory_space<vmem>>, vector<2x1xf32>
    tpu.vector_store %arg18[%c0_137, %c0_138], %249 {strides = array<i32>} : memref<2x1xf32, #tpu.memory_space<vmem>>, vector<2x1xf32>,
    return
  }
}

</mosaic_0001>

<llo_original>
// kernel: squeeze.7
$region0: #{squeeze.7}
  %s0 = inlined_call_operand.vmem [shape: f32[2,1,16,16], index: 0, kind: input, shape index: {}]
  %s1 = inlined_call_operand.vmem [shape: f32[2,8,2,8,2], index: 1, kind: output, shape index: {}]
  %v2 = vld [vmem:[%s0] sm:$0xff]
  %vm3 = vcmask 15360
  %4 = vst.msk [vmem:[%s1] ss:$8 sm:$0xf] %vm3, %v2
  %5 = vst.msk [vmem:[%s1] ss:$8 sm:$0xf0] %vm3, %v2
  %s6 = scalar_lea.vmem %s0, 8
  %v7 = vld [vmem:[%s6] sm:$0xff]
  %vm8 = vcmask 15360
  %s9 = scalar_lea.vmem %s1, 64
  %10 = vst.msk [vmem:[%s9] ss:$8 sm:$0xf] %vm8, %v7
  %s11 = scalar_lea.vmem %s1, 64
  %12 = vst.msk [vmem:[%s11] ss:$8 sm:$0xf0] %vm8, %v7
  %s13 = scalar_lea.vmem %s0, 16
  %v14 = vld [vmem:[%s13] sm:$0xff]
  %vm15 = vcmask 15360
  %s16 = scalar_lea.vmem %s1, 128
  %17 = vst.msk [vmem:[%s16] ss:$8 sm:$0xf] %vm15, %v14
  %s18 = scalar_lea.vmem %s1, 128
  %19 = vst.msk [vmem:[%s18] ss:$8 sm:$0xf0] %vm15, %v14
  %s20 = scalar_lea.vmem %s0, 24
  %v21 = vld [vmem:[%s20] sm:$0xff]
  %vm22 = vcmask 15360
  %s23 = scalar_lea.vmem %s1, 192
  %24 = vst.msk [vmem:[%s23] ss:$8 sm:$0xf] %vm22, %v21
  %s25 = scalar_lea.vmem %s1, 192
  %26 = vst.msk [vmem:[%s25] ss:$8 sm:$0xf0] %vm22, %v21
  %v27 = vld [vmem:[%s0] sm:$0xff]
  %28 = vrot.lane.b32.xlu0 %v27, 126
  %v29 = vpop.permute.xlu0 %28
  %vm30 = vcmask 15360
  %s31 = scalar_lea.vmem %s1, 1
  %32 = vst.msk [vmem:[%s31] ss:$8 sm:$0xf] %vm30, %v29
  %s33 = scalar_lea.vmem %s1, 1
  %34 = vst.msk [vmem:[%s33] ss:$8 sm:$0xf0] %vm30, %v29
  %s35 = scalar_lea.vmem %s0, 8
  %v36 = vld [vmem:[%s35] sm:$0xff]
  %37 = vrot.lane.b32.xlu0 %v36, 126
  %v38 = vpop.permute.xlu0 %37
  %vm39 = vcmask 15360
  %s40 = scalar_lea.vmem %s1, 65
  %41 = vst.msk [vmem:[%s40] ss:$8 sm:$0xf] %vm39, %v38
  %s42 = scalar_lea.vmem %s1, 65
  %43 = vst.msk [vmem:[%s42] ss:$8 sm:$0xf0] %vm39, %v38
  %s44 = scalar_lea.vmem %s0, 16
  %v45 = vld [vmem:[%s44] sm:$0xff]
  %46 = vrot.lane.b32.xlu0 %v45, 126
  %v47 = vpop.permute.xlu0 %46
  %vm48 = vcmask 15360
  %s49 = scalar_lea.vmem %s1, 129
  %50 = vst.msk [vmem:[%s49] ss:$8 sm:$0xf] %vm48, %v47
  %s51 = scalar_lea.vmem %s1, 129
  %52 = vst.msk [vmem:[%s51] ss:$8 sm:$0xf0] %vm48, %v47
  %s53 = scalar_lea.vmem %s0, 24
  %v54 = vld [vmem:[%s53] sm:$0xff]
  %55 = vrot.lane.b32.xlu0 %v54, 126
  %v56 = vpop.permute.xlu0 %55
  %vm57 = vcmask 15360
  %s58 = scalar_lea.vmem %s1, 193
  %59 = vst.msk [vmem:[%s58] ss:$8 sm:$0xf] %vm57, %v56
  %s60 = scalar_lea.vmem %s1, 193
  %61 = vst.msk [vmem:[%s60] ss:$8 sm:$0xf0] %vm57, %v56
  %v62 = vld [vmem:[%s0] sm:$0xff]
  %63 = vrot.lane.b32.xlu0 %v62, 124
  %v64 = vpop.permute.xlu0 %63
  %vm65 = vcmask 15360
  %s66 = scalar_lea.vmem %s1, 2
  %67 = vst.msk [vmem:[%s66] ss:$8 sm:$0xf] %vm65, %v64
  %s68 = scalar_lea.vmem %s1, 2
  %69 = vst.msk [vmem:[%s68] ss:$8 sm:$0xf0] %vm65, %v64
  %s70 = scalar_lea.vmem %s0, 8
  %v71 = vld [vmem:[%s70] sm:$0xff]
  %72 = vrot.lane.b32.xlu0 %v71, 124
  %v73 = vpop.permute.xlu0 %72
  %vm74 = vcmask 15360
  %s75 = scalar_lea.vmem %s1, 66
  %76 = vst.msk [vmem:[%s75] ss:$8 sm:$0xf] %vm74, %v73
  %s77 = scalar_lea.vmem %s1, 66
  %78 = vst.msk [vmem:[%s77] ss:$8 sm:$0xf0] %vm74, %v73
  %s79 = scalar_lea.vmem %s0, 16
  %v80 = vld [vmem:[%s79] sm:$0xff]
  %81 = vrot.lane.b32.xlu0 %v80, 124
  %v82 = vpop.permute.xlu0 %81
  %vm83 = vcmask 15360
  %s84 = scalar_lea.vmem %s1, 130
  %85 = vst.msk [vmem:[%s84] ss:$8 sm:$0xf] %vm83, %v82
  %s86 = scalar_lea.vmem %s1, 130
  %87 = vst.msk [vmem:[%s86] ss:$8 sm:$0xf0] %vm83, %v82
  %s88 = scalar_lea.vmem %s0, 24
  %v89 = vld [vmem:[%s88] sm:$0xff]
  %90 = vrot.lane.b32.xlu0 %v89, 124
  %v91 = vpop.permute.xlu0 %90
  %vm92 = vcmask 15360
  %s93 = scalar_lea.vmem %s1, 194
  %94 = vst.msk [vmem:[%s93] ss:$8 sm:$0xf] %vm92, %v91
  %s95 = scalar_lea.vmem %s1, 194
  %96 = vst.msk [vmem:[%s95] ss:$8 sm:$0xf0] %vm92, %v91
  %v97 = vld [vmem:[%s0] sm:$0xff]
  %98 = vrot.lane.b32.xlu0 %v97, 122
  %v99 = vpop.permute.xlu0 %98
  %vm100 = vcmask 15360
  %s101 = scalar_lea.vmem %s1, 3
  %102 = vst.msk [vmem:[%s101] ss:$8 sm:$0xf] %vm100, %v99
  %s103 = scalar_lea.vmem %s1, 3
  %104 = vst.msk [vmem:[%s103] ss:$8 sm:$0xf0] %vm100, %v99
  %s105 = scalar_lea.vmem %s0, 8
  %v106 = vld [vmem:[%s105] sm:$0xff]
  %107 = vrot.lane.b32.xlu0 %v106, 122
  %v108 = vpop.permute.xlu0 %107
  %vm109 = vcmask 15360
  %s110 = scalar_lea.vmem %s1, 67
  %111 = vst.msk [vmem:[%s110] ss:$8 sm:$0xf] %vm109, %v108
  %s112 = scalar_lea.vmem %s1, 67
  %113 = vst.msk [vmem:[%s112] ss:$8 sm:$0xf0] %vm109, %v108
  %s114 = scalar_lea.vmem %s0, 16
  %v115 = vld [vmem:[%s114] sm:$0xff]
  %116 = vrot.lane.b32.xlu0 %v115, 122
  %v117 = vpop.permute.xlu0 %116
  %vm118 = vcmask 15360
  %s119 = scalar_lea.vmem %s1, 131
  %120 = vst.msk [vmem:[%s119] ss:$8 sm:$0xf] %vm118, %v117
  %s121 = scalar_lea.vmem %s1, 131
  %122 = vst.msk [vmem:[%s121] ss:$8 sm:$0xf0] %vm118, %v117
  %s123 = scalar_lea.vmem %s0, 24
  %v124 = vld [vmem:[%s123] sm:$0xff]
  %125 = vrot.lane.b32.xlu0 %v124, 122
  %v126 = vpop.permute.xlu0 %125
  %vm127 = vcmask 15360
  %s128 = scalar_lea.vmem %s1, 195
  %129 = vst.msk [vmem:[%s128] ss:$8 sm:$0xf] %vm127, %v126
  %s130 = scalar_lea.vmem %s1, 195
  %131 = vst.msk [vmem:[%s130] ss:$8 sm:$0xf0] %vm127, %v126
  %v132 = vld [vmem:[%s0] sm:$0xff]
  %133 = vrot.lane.b32.xlu0 %v132, 120
  %v134 = vpop.permute.xlu0 %133
  %vm135 = vcmask 15360
  %s136 = scalar_lea.vmem %s1, 4
  %137 = vst.msk [vmem:[%s136] ss:$8 sm:$0xf] %vm135, %v134
  %s138 = scalar_lea.vmem %s1, 4
  %139 = vst.msk [vmem:[%s138] ss:$8 sm:$0xf0] %vm135, %v134
  %s140 = scalar_lea.vmem %s0, 8
  %v141 = vld [vmem:[%s140] sm:$0xff]
  %142 = vrot.lane.b32.xlu0 %v141, 120
  %v143 = vpop.permute.xlu0 %142
  %vm144 = vcmask 15360
  %s145 = scalar_lea.vmem %s1, 68
  %146 = vst.msk [vmem:[%s145] ss:$8 sm:$0xf] %vm144, %v143
  %s147 = scalar_lea.vmem %s1, 68
  %148 = vst.msk [vmem:[%s147] ss:$8 sm:$0xf0] %vm144, %v143
  %s149 = scalar_lea.vmem %s0, 16
  %v150 = vld [vmem:[%s149] sm:$0xff]
  %151 = vrot.lane.b32.xlu0 %v150, 120
  %v152 = vpop.permute.xlu0 %151
  %vm153 = vcmask 15360
  %s154 = scalar_lea.vmem %s1, 132
  %155 = vst.msk [vmem:[%s154] ss:$8 sm:$0xf] %vm153, %v152
  %s156 = scalar_lea.vmem %s1, 132
  %157 = vst.msk [vmem:[%s156] ss:$8 sm:$0xf0] %vm153, %v152
  %s158 = scalar_lea.vmem %s0, 24
  %v159 = vld [vmem:[%s158] sm:$0xff]
  %160 = vrot.lane.b32.xlu0 %v159, 120
  %v161 = vpop.permute.xlu0 %160
  %vm162 = vcmask 15360
  %s163 = scalar_lea.vmem %s1, 196
  %164 = vst.msk [vmem:[%s163] ss:$8 sm:$0xf] %vm162, %v161
  %s165 = scalar_lea.vmem %s1, 196
  %166 = vst.msk [vmem:[%s165] ss:$8 sm:$0xf0] %vm162, %v161
  %v167 = vld [vmem:[%s0] sm:$0xff]
  %168 = vrot.lane.b32.xlu0 %v167, 118
  %v169 = vpop.permute.xlu0 %168
  %vm170 = vcmask 15360
  %s171 = scalar_lea.vmem %s1, 5
  %172 = vst.msk [vmem:[%s171] ss:$8 sm:$0xf] %vm170, %v169
  %s173 = scalar_lea.vmem %s1, 5
  %174 = vst.msk [vmem:[%s173] ss:$8 sm:$0xf0] %vm170, %v169
  %s175 = scalar_lea.vmem %s0, 8
  %v176 = vld [vmem:[%s175] sm:$0xff]
  %177 = vrot.lane.b32.xlu0 %v176, 118
  %v178 = vpop.permute.xlu0 %177
  %vm179 = vcmask 15360
  %s180 = scalar_lea.vmem %s1, 69
  %181 = vst.msk [vmem:[%s180] ss:$8 sm:$0xf] %vm179, %v178
  %s182 = scalar_lea.vmem %s1, 69
  %183 = vst.msk [vmem:[%s182] ss:$8 sm:$0xf0] %vm179, %v178
  %s184 = scalar_lea.vmem %s0, 16
  %v185 = vld [vmem:[%s184] sm:$0xff]
  %186 = vrot.lane.b32.xlu0 %v185, 118
  %v187 = vpop.permute.xlu0 %186
  %vm188 = vcmask 15360
  %s189 = scalar_lea.vmem %s1, 133
  %190 = vst.msk [vmem:[%s189] ss:$8 sm:$0xf] %vm188, %v187
  %s191 = scalar_lea.vmem %s1, 133
  %192 = vst.msk [vmem:[%s191] ss:$8 sm:$0xf0] %vm188, %v187
  %s193 = scalar_lea.vmem %s0, 24
  %v194 = vld [vmem:[%s193] sm:$0xff]
  %195 = vrot.lane.b32.xlu0 %v194, 118
  %v196 = vpop.permute.xlu0 %195
  %vm197 = vcmask 15360
  %s198 = scalar_lea.vmem %s1, 197
  %199 = vst.msk [vmem:[%s198] ss:$8 sm:$0xf] %vm197, %v196
  %s200 = scalar_lea.vmem %s1, 197
  %201 = vst.msk [vmem:[%s200] ss:$8 sm:$0xf0] %vm197, %v196
  %v202 = vld [vmem:[%s0] sm:$0xff]
  %203 = vrot.lane.b32.xlu0 %v202, 116
  %v204 = vpop.permute.xlu0 %203
  %vm205 = vcmask 15360
  %s206 = scalar_lea.vmem %s1, 6
  %207 = vst.msk [vmem:[%s206] ss:$8 sm:$0xf] %vm205, %v204
  %s208 = scalar_lea.vmem %s1, 6
  %209 = vst.msk [vmem:[%s208] ss:$8 sm:$0xf0] %vm205, %v204
  %s210 = scalar_lea.vmem %s0, 8
  %v211 = vld [vmem:[%s210] sm:$0xff]
  %212 = vrot.lane.b32.xlu0 %v211, 116
  %v213 = vpop.permute.xlu0 %212
  %vm214 = vcmask 15360
  %s215 = scalar_lea.vmem %s1, 70
  %216 = vst.msk [vmem:[%s215] ss:$8 sm:$0xf] %vm214, %v213
  %s217 = scalar_lea.vmem %s1, 70
  %218 = vst.msk [vmem:[%s217] ss:$8 sm:$0xf0] %vm214, %v213
  %s219 = scalar_lea.vmem %s0, 16
  %v220 = vld [vmem:[%s219] sm:$0xff]
  %221 = vrot.lane.b32.xlu0 %v220, 116
  %v222 = vpop.permute.xlu0 %221
  %vm223 = vcmask 15360
  %s224 = scalar_lea.vmem %s1, 134
  %225 = vst.msk [vmem:[%s224] ss:$8 sm:$0xf] %vm223, %v222
  %s226 = scalar_lea.vmem %s1, 134
  %227 = vst.msk [vmem:[%s226] ss:$8 sm:$0xf0] %vm223, %v222
  %s228 = scalar_lea.vmem %s0, 24
  %v229 = vld [vmem:[%s228] sm:$0xff]
  %230 = vrot.lane.b32.xlu0 %v229, 116
  %v231 = vpop.permute.xlu0 %230
  %vm232 = vcmask 15360
  %s233 = scalar_lea.vmem %s1, 198
  %234 = vst.msk [vmem:[%s233] ss:$8 sm:$0xf] %vm232, %v231
  %s235 = scalar_lea.vmem %s1, 198
  %236 = vst.msk [vmem:[%s235] ss:$8 sm:$0xf0] %vm232, %v231
  %v237 = vld [vmem:[%s0] sm:$0xff]
  %238 = vrot.lane.b32.xlu0 %v237, 114
  %v239 = vpop.permute.xlu0 %238
  %vm240 = vcmask 15360
  %s241 = scalar_lea.vmem %s1, 7
  %242 = vst.msk [vmem:[%s241] ss:$8 sm:$0xf] %vm240, %v239
  %s243 = scalar_lea.vmem %s1, 7
  %244 = vst.msk [vmem:[%s243] ss:$8 sm:$0xf0] %vm240, %v239
  %s245 = scalar_lea.vmem %s0, 8
  %v246 = vld [vmem:[%s245] sm:$0xff]
  %247 = vrot.lane.b32.xlu0 %v246, 114
  %v248 = vpop.permute.xlu0 %247
  %vm249 = vcmask 15360
  %s250 = scalar_lea.vmem %s1, 71
  %251 = vst.msk [vmem:[%s250] ss:$8 sm:$0xf] %vm249, %v248
  %s252 = scalar_lea.vmem %s1, 71
  %253 = vst.msk [vmem:[%s252] ss:$8 sm:$0xf0] %vm249, %v248
  %s254 = scalar_lea.vmem %s0, 16
  %v255 = vld [vmem:[%s254] sm:$0xff]
  %256 = vrot.lane.b32.xlu0 %v255, 114
  %v257 = vpop.permute.xlu0 %256
  %vm258 = vcmask 15360
  %s259 = scalar_lea.vmem %s1, 135
  %260 = vst.msk [vmem:[%s259] ss:$8 sm:$0xf] %vm258, %v257
  %s261 = scalar_lea.vmem %s1, 135
  %262 = vst.msk [vmem:[%s261] ss:$8 sm:$0xf0] %vm258, %v257
  %s263 = scalar_lea.vmem %s0, 24
  %v264 = vld [vmem:[%s263] sm:$0xff]
  %265 = vrot.lane.b32.xlu0 %v264, 114
  %v266 = vpop.permute.xlu0 %265
  %vm267 = vcmask 15360
  %s268 = scalar_lea.vmem %s1, 199
  %269 = vst.msk [vmem:[%s268] ss:$8 sm:$0xf] %vm267, %v266
  %s270 = scalar_lea.vmem %s1, 199
  %271 = vst.msk [vmem:[%s270] ss:$8 sm:$0xf0] %vm267, %v266

// kernel: discriminator_forward.1
$region0: #{discriminator_forward.1}
  #allocation0 [shape = 'u32[]', space=smem, size = 0x4, offset = 0x4, fixed_abs, tag = 'smem constant byte address 0x4 - core index']
  #allocation1 [shape = 'u32[144,128]{1,0:T(1,128)}', space=vmem, size = 0x12000, scoped, tag = 'internal scratch']
  #allocation2 [shape = 'f32[1]{0:T(128)S(6)}', space=smem, size = 0x200, scoped, tag = 'scoped memory for discriminator_forward.1']
  #allocation3 [shape = 'f32[1,1]{1,0:T(1,128)S(1)}', space=vmem, size = 0x200, scoped, tag = 'scoped memory for discriminator_forward.1']
  %s0 = inlined_call_operand.<no memory space> [shape: f32[1], index: 0, kind: input, shape index: {}]
  %s1 = inlined_call_operand.vmem [shape: f32[2,8], index: 1, kind: input, shape index: {}]
  %s2 = inlined_call_operand.vmem [shape: bf16[25,3200], index: 2, kind: input, shape index: {}]
  %s3 = inlined_call_operand.vmem [shape: bf16[25,128], index: 3, kind: input, shape index: {}]
  %s4 = inlined_call_operand.vmem [shape: bf16[4,25], index: 4, kind: input, shape index: {}]
  %s5 = inlined_call_operand.vmem [shape: bf16[25,4,4], index: 5, kind: input, shape index: {}]
  %s6 = inlined_call_operand.vmem [shape: bf16[4,25], index: 6, kind: input, shape index: {}]
  %s7 = inlined_call_operand.vmem [shape: bf16[256,512], index: 7, kind: input, shape index: {}]
  %s8 = inlined_call_operand.vmem [shape: bf16[8,512], index: 8, kind: input, shape index: {}]
  %s9 = inlined_call_operand.vmem [shape: f32[1,512], index: 9, kind: input, shape index: {}]
  %s10 = inlined_call_operand.vmem [shape: f32[1,512], index: 10, kind: input, shape index: {}]
  %s11 = inlined_call_operand.vmem [shape: f32[1,512], index: 11, kind: input, shape index: {}]
  %s12 = inlined_call_operand.vmem [shape: bf16[512,512], index: 12, kind: input, shape index: {}]
  %s13 = inlined_call_operand.vmem [shape: f32[1,512], index: 13, kind: input, shape index: {}]
  %s14 = inlined_call_operand.vmem [shape: f32[1,512], index: 14, kind: input, shape index: {}]
  %s15 = inlined_call_operand.vmem [shape: f32[1,512], index: 15, kind: input, shape index: {}]
  %s16 = inlined_call_operand.vmem [shape: bf16[512,1], index: 16, kind: input, shape index: {}]
  %s17 = inlined_call_operand.<no memory space> [shape: f32[1,1], index: 17, kind: input, shape index: {}]
  %s18 = inlined_call_operand.vmem [shape: f32[2,1], index: 18, kind: output, shape index: {}]
  %s19 = sld [smem:[#allocation0]]
  $region82: #{discriminator_forward.1} parent=0
    _
  %s21 = ssub.s32 1, %s19
  %s22 = scalar_select 0, %s21, %s19
  %23 = sst [smem:[#allocation2]] %s0
  %v24 = vstv %s17
  %25 = vst [vmem:[#allocation3] sm:$0x1] %v24
  // Predicated region
  $region2: #{discriminator_forward.1} parent=0 // pred_check
    _
  $region3: #{discriminator_forward.1} parent=0 // pred_check_branch
    %27 = sbr.rel (0) target = $region5
  $region4: #{discriminator_forward.1} parent=0 // pred_region
    _
  $region5: #{discriminator_forward.1} parent=0 // pred_fallthru
    _
  // Predicated region
  $region6: #{discriminator_forward.1} parent=0 // pred_check
    _
  $region7: #{discriminator_forward.1} parent=0 // pred_check_branch
    %29 = sbr.rel (0) target = $region9
  $region8: #{discriminator_forward.1} parent=0 // pred_region
    _
  $region9: #{discriminator_forward.1} parent=0 // pred_fallthru
    _
  // Predicated region
  $region10: #{discriminator_forward.1} parent=0 // pred_check
    _
  $region11: #{discriminator_forward.1} parent=0 // pred_check_branch
    %31 = sbr.rel (0) target = $region13
  $region12: #{discriminator_forward.1} parent=0 // pred_region
    _
  $region13: #{discriminator_forward.1} parent=0 // pred_fallthru
    _
  // Predicated region
  $region14: #{discriminator_forward.1} parent=0 // pred_check
    _
  $region15: #{discriminator_forward.1} parent=0 // pred_check_branch
    %33 = sbr.rel (0) target = $region17
  $region16: #{discriminator_forward.1} parent=0 // pred_region
    _
  $region17: #{discriminator_forward.1} parent=0 // pred_fallthru
    _
  // Predicated region
  $region18: #{discriminator_forward.1} parent=0 // pred_check
    _
  $region19: #{discriminator_forward.1} parent=0 // pred_check_branch
    %35 = sbr.rel (0) target = $region21
  $region20: #{discriminator_forward.1} parent=0 // pred_region
    _
  $region21: #{discriminator_forward.1} parent=0 // pred_fallthru
    _
  // Predicated region
  $region22: #{discriminator_forward.1} parent=0 // pred_check
    _
  $region23: #{discriminator_forward.1} parent=0 // pred_check_branch
    %37 = sbr.rel (0) target = $region25
  $region24: #{discriminator_forward.1} parent=0 // pred_region
    _
  $region25: #{discriminator_forward.1} parent=0 // pred_fallthru
    _
  // Predicated region
  $region26: #{discriminator_forward.1} parent=0 // pred_check
    _
  $region27: #{discriminator_forward.1} parent=0 // pred_check_branch
    %39 = sbr.rel (0) target = $region29
  $region28: #{discriminator_forward.1} parent=0 // pred_region
    _
  $region29: #{discriminator_forward.1} parent=0 // pred_fallthru
    _
  // Predicated region
  $region30: #{discriminator_forward.1} parent=0 // pred_check
    _
  $region31: #{discriminator_forward.1} parent=0 // pred_check_branch
    %41 = sbr.rel (0) target = $region33
  $region32: #{discriminator_forward.1} parent=0 // pred_region
    _
  $region33: #{discriminator_forward.1} parent=0 // pred_fallthru
    _
  // Predicated region
  $region34: #{discriminator_forward.1} parent=0 // pred_check
    _
  $region35: #{discriminator_forward.1} parent=0 // pred_check_branch
    %43 = sbr.rel (0) target = $region37
  $region36: #{discriminator_forward.1} parent=0 // pred_region
    _
  $region37: #{discriminator_forward.1} parent=0 // pred_fallthru
    _
  // Predicated region
  $region38: #{discriminator_forward.1} parent=0 // pred_check
    _
  $region39: #{discriminator_forward.1} parent=0 // pred_check_branch
    %45 = sbr.rel (0) target = $region41
  $region40: #{discriminator_forward.1} parent=0 // pred_region
    _
  $region41: #{discriminator_forward.1} parent=0 // pred_fallthru
    _
  // Predicated region
  $region42: #{discriminator_forward.1} parent=0 // pred_check
    _
  $region43: #{discriminator_forward.1} parent=0 // pred_check_branch
    %47 = sbr.rel (0) target = $region45
  $region44: #{discriminator_forward.1} parent=0 // pred_region
    _
  $region45: #{discriminator_forward.1} parent=0 // pred_fallthru
    _
  // Predicated region
  $region46: #{discriminator_forward.1} parent=0 // pred_check
    _
  $region47: #{discriminator_forward.1} parent=0 // pred_check_branch
    %49 = sbr.rel (0) target = $region49
  $region48: #{discriminator_forward.1} parent=0 // pred_region
    _
  $region49: #{discriminator_forward.1} parent=0 // pred_fallthru
    _
  // Predicated region
  $region50: #{discriminator_forward.1} parent=0 // pred_check
    _
  $region51: #{discriminator_forward.1} parent=0 // pred_check_branch
    %51 = sbr.rel (0) target = $region53
  $region52: #{discriminator_forward.1} parent=0 // pred_region
    _
  $region53: #{discriminator_forward.1} parent=0 // pred_fallthru
    _
  // Predicated region
  $region54: #{discriminator_forward.1} parent=0 // pred_check
    _
  $region55: #{discriminator_forward.1} parent=0 // pred_check_branch
    %53 = sbr.rel (0) target = $region57
  $region56: #{discriminator_forward.1} parent=0 // pred_region
    _
  $region57: #{discriminator_forward.1} parent=0 // pred_fallthru
    _
  // Predicated region
  $region58: #{discriminator_forward.1} parent=0 // pred_check
    _
  $region59: #{discriminator_forward.1} parent=0 // pred_check_branch
    %55 = sbr.rel (0) target = $region61
  $region60: #{discriminator_forward.1} parent=0 // pred_region
    _
  $region61: #{discriminator_forward.1} parent=0 // pred_fallthru
    _
  // Predicated region
  $region62: #{discriminator_forward.1} parent=0 // pred_check
    _
  $region63: #{discriminator_forward.1} parent=0 // pred_check_branch
    %57 = sbr.rel (0) target = $region65
  $region64: #{discriminator_forward.1} parent=0 // pred_region
    _
  $region65: #{discriminator_forward.1} parent=0 // pred_fallthru
    _
  // Predicated region
  $region66: #{discriminator_forward.1} parent=0 // pred_check
    _
  $region67: #{discriminator_forward.1} parent=0 // pred_check_branch
    %59 = sbr.rel (0) target = $region69
  $region68: #{discriminator_forward.1} parent=0 // pred_region
    _
  $region69: #{discriminator_forward.1} parent=0 // pred_fallthru
    _
  // Predicated region
  $region70: #{discriminator_forward.1} parent=0 // pred_check
    _
  $region71: #{discriminator_forward.1} parent=0 // pred_check_branch
    %61 = sbr.rel (0) target = $region73
  $region72: #{discriminator_forward.1} parent=0 // pred_region
    _
  $region73: #{discriminator_forward.1} parent=0 // pred_fallthru
    _
  %s63 = sld [smem:[#allocation2]]
  %v64 = vld [vmem:[%s4] sm:$0x3]
  %v65 = vld [vmem:[%s2] sm:$0xff]
  %v66 = vld [vmem:[%s2 + $0x8] sm:$0xff]
  %v67 = vld [vmem:[%s2 + $0x10] sm:$0xff]
  %v68 = vld [vmem:[%s2 + $0x18] sm:$0xff]
  %v69 = vld [vmem:[%s2 + $0x20] sm:$0xff]
  %v70 = vld [vmem:[%s2 + $0x28] sm:$0xff]
  %v71 = vld [vmem:[%s2 + $0x30] sm:$0xff]
  %v72 = vld [vmem:[%s2 + $0x38] sm:$0xff]
  %v73 = vld [vmem:[%s2 + $0x40] sm:$0xff]
  %v74 = vld [vmem:[%s2 + $0x48] sm:$0xff]
  %v75 = vld [vmem:[%s2 + $0x50] sm:$0xff]
  %v76 = vld [vmem:[%s2 + $0x58] sm:$0xff]
  %v77 = vld [vmem:[%s2 + $0x60] sm:$0xf]
  %v78 = vld [vmem:[%s2 + $0x64] sm:$0xff]
  %v79 = vld [vmem:[%s2 + $0x6c] sm:$0xff]
  %v80 = vld [vmem:[%s2 + $0x74] sm:$0xff]
  %v81 = vld [vmem:[%s2 + $0x7c] sm:$0xff]
  %v82 = vld [vmem:[%s2 + $0x84] sm:$0xff]
  %v83 = vld [vmem:[%s2 + $0x8c] sm:$0xff]
  %v84 = vld [vmem:[%s2 + $0x94] sm:$0xff]
  %v85 = vld [vmem:[%s2 + $0x9c] sm:$0xff]
  %v86 = vld [vmem:[%s2 + $0xa4] sm:$0xff]
  %v87 = vld [vmem:[%s2 + $0xac] sm:$0xff]
  %v88 = vld [vmem:[%s2 + $0xb4] sm:$0xff]
  %v89 = vld [vmem:[%s2 + $0xbc] sm:$0xff]
  %v90 = vld [vmem:[%s2 + $0xc4] sm:$0xf]
  %v91 = vld [vmem:[%s2 + $0xc8] sm:$0xff]
  %v92 = vld [vmem:[%s2 + $0xd0] sm:$0xff]
  %v93 = vld [vmem:[%s2 + $0xd8] sm:$0xff]
  %v94 = vld [vmem:[%s2 + $0xe0] sm:$0xff]
  %v95 = vld [vmem:[%s2 + $0xe8] sm:$0xff]
  %v96 = vld [vmem:[%s2 + $0xf0] sm:$0xff]
  %v97 = vld [vmem:[%s2 + $0xf8] sm:$0xff]
  %v98 = vld [vmem:[%s2 + $0x100] sm:$0xff]
  %v99 = vld [vmem:[%s2 + $0x108] sm:$0xff]
  %v100 = vld [vmem:[%s2 + $0x110] sm:$0xff]
  %v101 = vld [vmem:[%s2 + $0x118] sm:$0xff]
  %v102 = vld [vmem:[%s2 + $0x120] sm:$0xff]
  %v103 = vld [vmem:[%s2 + $0x128] sm:$0xf]
  %v104 = vld [vmem:[%s2 + $0x12c] sm:$0x11]
  %v105 = vld [vmem:[%s2 + $0x134] sm:$0x11]
  %v106 = vld [vmem:[%s2 + $0x13c] sm:$0x11]
  %v107 = vld [vmem:[%s2 + $0x144] sm:$0x11]
  %v108 = vld [vmem:[%s2 + $0x14c] sm:$0x11]
  %v109 = vld [vmem:[%s2 + $0x154] sm:$0x11]
  %v110 = vld [vmem:[%s2 + $0x15c] sm:$0x11]
  %v111 = vld [vmem:[%s2 + $0x164] sm:$0x11]
  %v112 = vld [vmem:[%s2 + $0x16c] sm:$0x11]
  %v113 = vld [vmem:[%s2 + $0x174] sm:$0x11]
  %v114 = vld [vmem:[%s2 + $0x17c] sm:$0x11]
  %v115 = vld [vmem:[%s2 + $0x184] sm:$0x11]
  %v116 = vld [vmem:[%s2 + $0x18c] sm:$0x1]
  %v169 = vunpack.c.l.b16 %v65
  %v170 = vunpack.c.h.b16 %v65
  %v171 = vunpack.c.l.b16 %v66
  %v172 = vunpack.c.h.b16 %v66
  %v173 = vunpack.c.l.b16 %v67
  %v174 = vunpack.c.h.b16 %v67
  %v175 = vunpack.c.l.b16 %v68
  %v176 = vunpack.c.h.b16 %v68
  %v177 = vunpack.c.l.b16 %v69
  %v178 = vunpack.c.h.b16 %v69
  %v179 = vunpack.c.l.b16 %v70
  %v180 = vunpack.c.h.b16 %v70
  %v181 = vunpack.c.l.b16 %v71
  %v182 = vunpack.c.h.b16 %v71
  %v183 = vunpack.c.l.b16 %v72
  %v184 = vunpack.c.h.b16 %v72
  %v185 = vunpack.c.l.b16 %v73
  %v186 = vunpack.c.h.b16 %v73
  %v187 = vunpack.c.l.b16 %v74
  %v188 = vunpack.c.h.b16 %v74
  %v189 = vunpack.c.l.b16 %v75
  %v190 = vunpack.c.h.b16 %v75
  %v191 = vunpack.c.l.b16 %v76
  %v192 = vunpack.c.h.b16 %v76
  %v193 = vunpack.c.l.b16 %v77
  %v194 = vunpack.c.l.b16 %v78
  %v195 = vunpack.c.h.b16 %v78
  %v196 = vunpack.c.l.b16 %v79
  %v197 = vunpack.c.h.b16 %v79
  %v198 = vunpack.c.l.b16 %v80
  %v199 = vunpack.c.h.b16 %v80
  %v200 = vunpack.c.l.b16 %v81
  %v201 = vunpack.c.h.b16 %v81
  %v202 = vunpack.c.l.b16 %v82
  %v203 = vunpack.c.h.b16 %v82
  %v204 = vunpack.c.l.b16 %v83
  %v205 = vunpack.c.h.b16 %v83
  %v206 = vunpack.c.l.b16 %v84
  %v207 = vunpack.c.h.b16 %v84
  %v208 = vunpack.c.l.b16 %v85
  %v209 = vunpack.c.h.b16 %v85
  %v210 = vunpack.c.l.b16 %v86
  %v211 = vunpack.c.h.b16 %v86
  %v212 = vunpack.c.l.b16 %v87
  %v213 = vunpack.c.h.b16 %v87
  %v214 = vunpack.c.l.b16 %v88
  %v215 = vunpack.c.h.b16 %v88
  %v216 = vunpack.c.l.b16 %v89
  %v217 = vunpack.c.h.b16 %v89
  %v218 = vunpack.c.l.b16 %v90
  %v219 = vunpack.c.l.b16 %v91
  %v220 = vunpack.c.h.b16 %v91
  %v221 = vunpack.c.l.b16 %v92
  %v222 = vunpack.c.h.b16 %v92
  %v223 = vunpack.c.l.b16 %v93
  %v224 = vunpack.c.h.b16 %v93
  %v225 = vunpack.c.l.b16 %v94
  %v226 = vunpack.c.h.b16 %v94
  %v227 = vunpack.c.l.b16 %v95
  %v228 = vunpack.c.h.b16 %v95
  %v229 = vunpack.c.l.b16 %v96
  %v230 = vunpack.c.h.b16 %v96
  %v231 = vunpack.c.l.b16 %v97
  %v232 = vunpack.c.h.b16 %v97
  %v233 = vunpack.c.l.b16 %v98
  %v234 = vunpack.c.h.b16 %v98
  %v235 = vunpack.c.l.b16 %v99
  %v236 = vunpack.c.h.b16 %v99
  %v237 = vunpack.c.l.b16 %v100
  %v238 = vunpack.c.h.b16 %v100
  %v239 = vunpack.c.l.b16 %v101
  %v240 = vunpack.c.h.b16 %v101
  %v241 = vunpack.c.l.b16 %v102
  %v242 = vunpack.c.h.b16 %v102
  %v243 = vunpack.c.l.b16 %v103
  %v244 = vunpack.c.l.b16 %v104
  %v245 = vunpack.c.h.b16 %v104
  %v246 = vunpack.c.l.b16 %v105
  %v247 = vunpack.c.h.b16 %v105
  %v248 = vunpack.c.l.b16 %v106
  %v249 = vunpack.c.h.b16 %v106
  %v250 = vunpack.c.l.b16 %v107
  %v251 = vunpack.c.h.b16 %v107
  %v252 = vunpack.c.l.b16 %v108
  %v253 = vunpack.c.h.b16 %v108
  %v254 = vunpack.c.l.b16 %v109
  %v255 = vunpack.c.h.b16 %v109
  %v256 = vunpack.c.l.b16 %v110
  %v257 = vunpack.c.h.b16 %v110
  %v258 = vunpack.c.l.b16 %v111
  %v259 = vunpack.c.h.b16 %v111
  %v260 = vunpack.c.l.b16 %v112
  %v261 = vunpack.c.h.b16 %v112
  %v262 = vunpack.c.l.b16 %v113
  %v263 = vunpack.c.h.b16 %v113
  %v264 = vunpack.c.l.b16 %v114
  %v265 = vunpack.c.h.b16 %v114
  %v266 = vunpack.c.l.b16 %v115
  %v267 = vunpack.c.h.b16 %v115
  %v268 = vunpack.c.l.b16 %v116
  %v269 = vpack.c.b16 %v194, %v169
  %v270 = vpack.c.b16 %v195, %v170
  %v271 = vpack.c.b16 %v196, %v171
  %v272 = vpack.c.b16 %v197, %v172
  %v273 = vpack.c.b16 %v198, %v173
  %v274 = vpack.c.b16 %v199, %v174
  %v275 = vpack.c.b16 %v200, %v175
  %v276 = vpack.c.b16 %v201, %v176
  %v277 = vpack.c.b16 %v202, %v177
  %v278 = vpack.c.b16 %v203, %v178
  %v279 = vpack.c.b16 %v204, %v179
  %v280 = vpack.c.b16 %v205, %v180
  %v281 = vpack.c.b16 %v206, %v181
  %v282 = vpack.c.b16 %v207, %v182
  %v283 = vpack.c.b16 %v208, %v183
  %v284 = vpack.c.b16 %v209, %v184
  %v285 = vpack.c.b16 %v210, %v185
  %v286 = vpack.c.b16 %v211, %v186
  %v287 = vpack.c.b16 %v212, %v187
  %v288 = vpack.c.b16 %v213, %v188
  %v289 = vpack.c.b16 %v214, %v189
  %v290 = vpack.c.b16 %v215, %v190
  %v291 = vpack.c.b16 %v216, %v191
  %v292 = vpack.c.b16 %v217, %v192
  %v293 = vpack.c.b16 %v218, %v193
  %v294 = vpack.c.b16 %v244, %v219
  %v295 = vpack.c.b16 %v245, %v220
  %v296 = vpack.c.b16 %v246, %v221
  %v297 = vpack.c.b16 %v247, %v222
  %v298 = vpack.c.b16 %v248, %v223
  %v299 = vpack.c.b16 %v249, %v224
  %v300 = vpack.c.b16 %v250, %v225
  %v301 = vpack.c.b16 %v251, %v226
  %v302 = vpack.c.b16 %v252, %v227
  %v303 = vpack.c.b16 %v253, %v228
  %v304 = vpack.c.b16 %v254, %v229
  %v305 = vpack.c.b16 %v255, %v230
  %v306 = vpack.c.b16 %v256, %v231
  %v307 = vpack.c.b16 %v257, %v232
  %v308 = vpack.c.b16 %v258, %v233
  %v309 = vpack.c.b16 %v259, %v234
  %v310 = vpack.c.b16 %v260, %v235
  %v311 = vpack.c.b16 %v261, %v236
  %v312 = vpack.c.b16 %v262, %v237
  %v313 = vpack.c.b16 %v263, %v238
  %v314 = vpack.c.b16 %v264, %v239
  %v315 = vpack.c.b16 %v265, %v240
  %v316 = vpack.c.b16 %v266, %v241
  %v317 = vpack.c.b16 %v267, %v242
  %v318 = vpack.c.b16 %v268, %v243
  %vm344 = vcmask 203776
  %v346 = vsel %vm344, %v64, 0
  %vm348 = vcmask 1043456
  %vm349 = vcmask 1044480
  %v350 = vsel %vm348, 4294967295, 65535
  %v351 = vsel %vm349, %v350, 0
  %v353 = vand.u32 %v294, %v351
  %v356 = vand.u32 %v295, %v351
  %v359 = vand.u32 %v296, %v351
  %v362 = vand.u32 %v297, %v351
  %v365 = vand.u32 %v298, %v351
  %v368 = vand.u32 %v299, %v351
  %v371 = vand.u32 %v300, %v351
  %v374 = vand.u32 %v301, %v351
  %v377 = vand.u32 %v302, %v351
  %v380 = vand.u32 %v303, %v351
  %v383 = vand.u32 %v304, %v351
  %v386 = vand.u32 %v305, %v351
  %v389 = vand.u32 %v306, %v351
  %v392 = vand.u32 %v307, %v351
  %v395 = vand.u32 %v308, %v351
  %v398 = vand.u32 %v309, %v351
  %v401 = vand.u32 %v310, %v351
  %v404 = vand.u32 %v311, %v351
  %v407 = vand.u32 %v312, %v351
  %v410 = vand.u32 %v313, %v351
  %v413 = vand.u32 %v314, %v351
  %v416 = vand.u32 %v315, %v351
  %v419 = vand.u32 %v316, %v351
  %v422 = vand.u32 %v317, %v351
  %v425 = vand.u32 %v318, %v351
  %427 = vmatprep.subr.bf16.mxu0 %v270
  %428 = vmatpush1.bf16.msra.mxu0 %v269
  %429 = vmatprep.subr.bf16.mxu0 %v356
  %430 = vmatpush1.bf16.msra.mxu0 %v353
  %431 = vmatprep.subr.bf16.mxu0 0
  %432 = vmatpush1.bf16.msra.mxu0 0
  %433 = vmatprep.subr.bf16.mxu0 0
  %434 = vmatpush1.bf16.msra.mxu0 0
  %435 = vmatprep.subr.bf16.mxu0 0
  %436 = vmatpush1.bf16.msra.mxu0 0
  %437 = vmatprep.subr.bf16.mxu0 0
  %438 = vmatpush1.bf16.msra.mxu0 0
  %439 = vmatprep.subr.bf16.mxu0 0
  %440 = vmatpush1.bf16.msra.mxu0 0
  %441 = vmatprep.subr.bf16.mxu0 0
  %442 = vmatpush1.bf16.msra.mxu0 0
  %443 = vmatprep.subr.bf16.mxu0 0
  %444 = vmatpush1.bf16.msra.mxu0 0
  %445 = vmatprep.subr.bf16.mxu0 0
  %446 = vmatpush1.bf16.msra.mxu0 0
  %447 = vmatprep.subr.bf16.mxu0 0
  %448 = vmatpush1.bf16.msra.mxu0 0
  %449 = vmatprep.subr.bf16.mxu0 0
  %450 = vmatpush1.bf16.msra.mxu0 0
  %451 = vmatprep.subr.bf16.mxu0 0
  %452 = vmatpush1.bf16.msra.mxu0 0
  %453 = vmatprep.subr.bf16.mxu0 0
  %454 = vmatpush1.bf16.msra.mxu0 0
  %455 = vmatprep.subr.bf16.mxu0 0
  %456 = vmatpush1.bf16.msra.mxu0 0
  %457 = vmatprep.subr.bf16.mxu0 0
  %458 = vmatpush1.bf16.msra.mxu0 0
  %459 = vmatprep.mubr.bf16.mxu0 0
  %460 = vmatmul.mubr.bf16.gmra.mrb[0].mxu0 %v346
  %v461 = vpop.f32.mrb[0].mxu0
  %v462 = vadd.f32 0.0, %v461
  %v463 = vpop.f32.mrb[0].mxu0
  %v464 = vadd.f32 0.0, %v463
  %v465 = vpop.f32.mrb[0].mxu0
  %v466 = vpop.f32.mrb[0].mxu0
  %467 = vdwg.mxu0
  %468 = vmatprep.subr.bf16.mxu0 %v272
  %469 = vmatpush1.bf16.msra.mxu0 %v271
  %470 = vmatprep.subr.bf16.mxu0 %v362
  %471 = vmatpush1.bf16.msra.mxu0 %v359
  %472 = vmatprep.subr.bf16.mxu0 0
  %473 = vmatpush1.bf16.msra.mxu0 0
  %474 = vmatprep.subr.bf16.mxu0 0
  %475 = vmatpush1.bf16.msra.mxu0 0
  %476 = vmatprep.subr.bf16.mxu0 0
  %477 = vmatpush1.bf16.msra.mxu0 0
  %478 = vmatprep.subr.bf16.mxu0 0
  %479 = vmatpush1.bf16.msra.mxu0 0
  %480 = vmatprep.subr.bf16.mxu0 0
  %481 = vmatpush1.bf16.msra.mxu0 0
  %482 = vmatprep.subr.bf16.mxu0 0
  %483 = vmatpush1.bf16.msra.mxu0 0
  %484 = vmatprep.subr.bf16.mxu0 0
  %485 = vmatpush1.bf16.msra.mxu0 0
  %486 = vmatprep.subr.bf16.mxu0 0
  %487 = vmatpush1.bf16.msra.mxu0 0
  %488 = vmatprep.subr.bf16.mxu0 0
  %489 = vmatpush1.bf16.msra.mxu0 0
  %490 = vmatprep.subr.bf16.mxu0 0
  %491 = vmatpush1.bf16.msra.mxu0 0
  %492 = vmatprep.subr.bf16.mxu0 0
  %493 = vmatpush1.bf16.msra.mxu0 0
  %494 = vmatprep.subr.bf16.mxu0 0
  %495 = vmatpush1.bf16.msra.mxu0 0
  %496 = vmatprep.subr.bf16.mxu0 0
  %497 = vmatpush1.bf16.msra.mxu0 0
  %498 = vmatprep.subr.bf16.mxu0 0
  %499 = vmatpush1.bf16.msra.mxu0 0
  %500 = vmatprep.mubr.bf16.mxu0 0
  %501 = vmatmul.mubr.bf16.gmra.mrb[0].mxu0 %v346
  %v502 = vpop.f32.mrb[0].mxu0
  %v503 = vadd.f32 0.0, %v502
  %v504 = vpop.f32.mrb[0].mxu0
  %v505 = vadd.f32 0.0, %v504
  %v506 = vpop.f32.mrb[0].mxu0
  %v507 = vpop.f32.mrb[0].mxu0
  %508 = vdwg.mxu0
  %509 = vmatprep.subr.bf16.mxu0 %v274
  %510 = vmatpush1.bf16.msra.mxu0 %v273
  %511 = vmatprep.subr.bf16.mxu0 %v368
  %512 = vmatpush1.bf16.msra.mxu0 %v365
  %513 = vmatprep.subr.bf16.mxu0 0
  %514 = vmatpush1.bf16.msra.mxu0 0
  %515 = vmatprep.subr.bf16.mxu0 0
  %516 = vmatpush1.bf16.msra.mxu0 0
  %517 = vmatprep.subr.bf16.mxu0 0
  %518 = vmatpush1.bf16.msra.mxu0 0
  %519 = vmatprep.subr.bf16.mxu0 0
  %520 = vmatpush1.bf16.msra.mxu0 0
  %521 = vmatprep.subr.bf16.mxu0 0
  %522 = vmatpush1.bf16.msra.mxu0 0
  %523 = vmatprep.subr.bf16.mxu0 0
  %524 = vmatpush1.bf16.msra.mxu0 0
  %525 = vmatprep.subr.bf16.mxu0 0
  %526 = vmatpush1.bf16.msra.mxu0 0
  %527 = vmatprep.subr.bf16.mxu0 0
  %528 = vmatpush1.bf16.msra.mxu0 0
  %529 = vmatprep.subr.bf16.mxu0 0
  %530 = vmatpush1.bf16.msra.mxu0 0
  %531 = vmatprep.subr.bf16.mxu0 0
  %532 = vmatpush1.bf16.msra.mxu0 0
  %533 = vmatprep.subr.bf16.mxu0 0
  %534 = vmatpush1.bf16.msra.mxu0 0
  %535 = vmatprep.subr.bf16.mxu0 0
  %536 = vmatpush1.bf16.msra.mxu0 0
  %537 = vmatprep.subr.bf16.mxu0 0
  %538 = vmatpush1.bf16.msra.mxu0 0
  %539 = vmatprep.subr.bf16.mxu0 0
  %540 = vmatpush1.bf16.msra.mxu0 0
  %541 = vmatprep.mubr.bf16.mxu0 0
  %542 = vmatmul.mubr.bf16.gmra.mrb[0].mxu0 %v346
  %v543 = vpop.f32.mrb[0].mxu0
  %v544 = vadd.f32 0.0, %v543
  %v545 = vpop.f32.mrb[0].mxu0
  %v546 = vadd.f32 0.0, %v545
  %v547 = vpop.f32.mrb[0].mxu0
  %v548 = vpop.f32.mrb[0].mxu0
  %549 = vdwg.mxu0
  %550 = vmatprep.subr.bf16.mxu0 %v276
  %551 = vmatpush1.bf16.msra.mxu0 %v275
  %552 = vmatprep.subr.bf16.mxu0 %v374
  %553 = vmatpush1.bf16.msra.mxu0 %v371
  %554 = vmatprep.subr.bf16.mxu0 0
  %555 = vmatpush1.bf16.msra.mxu0 0
  %556 = vmatprep.subr.bf16.mxu0 0
  %557 = vmatpush1.bf16.msra.mxu0 0
  %558 = vmatprep.subr.bf16.mxu0 0
  %559 = vmatpush1.bf16.msra.mxu0 0
  %560 = vmatprep.subr.bf16.mxu0 0
  %561 = vmatpush1.bf16.msra.mxu0 0
  %562 = vmatprep.subr.bf16.mxu0 0
  %563 = vmatpush1.bf16.msra.mxu0 0
  %564 = vmatprep.subr.bf16.mxu0 0
  %565 = vmatpush1.bf16.msra.mxu0 0
  %566 = vmatprep.subr.bf16.mxu0 0
  %567 = vmatpush1.bf16.msra.mxu0 0
  %568 = vmatprep.subr.bf16.mxu0 0
  %569 = vmatpush1.bf16.msra.mxu0 0
  %570 = vmatprep.subr.bf16.mxu0 0
  %571 = vmatpush1.bf16.msra.mxu0 0
  %572 = vmatprep.subr.bf16.mxu0 0
  %573 = vmatpush1.bf16.msra.mxu0 0
  %574 = vmatprep.subr.bf16.mxu0 0
  %575 = vmatpush1.bf16.msra.mxu0 0
  %576 = vmatprep.subr.bf16.mxu0 0
  %577 = vmatpush1.bf16.msra.mxu0 0
  %578 = vmatprep.subr.bf16.mxu0 0
  %579 = vmatpush1.bf16.msra.mxu0 0
  %580 = vmatprep.subr.bf16.mxu0 0
  %581 = vmatpush1.bf16.msra.mxu0 0
  %582 = vmatprep.mubr.bf16.mxu0 0
  %583 = vmatmul.mubr.bf16.gmra.mrb[0].mxu0 %v346
  %v584 = vpop.f32.mrb[0].mxu0
  %v585 = vadd.f32 0.0, %v584
  %v586 = vpop.f32.mrb[0].mxu0
  %v587 = vadd.f32 0.0, %v586
  %v588 = vpop.f32.mrb[0].mxu0
  %v589 = vpop.f32.mrb[0].mxu0
  %590 = vdwg.mxu0
  %591 = vmatprep.subr.bf16.mxu0 %v278
  %592 = vmatpush1.bf16.msra.mxu0 %v277
  %593 = vmatprep.subr.bf16.mxu0 %v380
  %594 = vmatpush1.bf16.msra.mxu0 %v377
  %595 = vmatprep.subr.bf16.mxu0 0
  %596 = vmatpush1.bf16.msra.mxu0 0
  %597 = vmatprep.subr.bf16.mxu0 0
  %598 = vmatpush1.bf16.msra.mxu0 0
  %599 = vmatprep.subr.bf16.mxu0 0
  %600 = vmatpush1.bf16.msra.mxu0 0
  %601 = vmatprep.subr.bf16.mxu0 0
  %602 = vmatpush1.bf16.msra.mxu0 0
  %603 = vmatprep.subr.bf16.mxu0 0
  %604 = vmatpush1.bf16.msra.mxu0 0
  %605 = vmatprep.subr.bf16.mxu0 0
  %606 = vmatpush1.bf16.msra.mxu0 0
  %607 = vmatprep.subr.bf16.mxu0 0
  %608 = vmatpush1.bf16.msra.mxu0 0
  %609 = vmatprep.subr.bf16.mxu0 0
  %610 = vmatpush1.bf16.msra.mxu0 0
  %611 = vmatprep.subr.bf16.mxu0 0
  %612 = vmatpush1.bf16.msra.mxu0 0
  %613 = vmatprep.subr.bf16.mxu0 0
  %614 = vmatpush1.bf16.msra.mxu0 0
  %615 = vmatprep.subr.bf16.mxu0 0
  %616 = vmatpush1.bf16.msra.mxu0 0
  %617 = vmatprep.subr.bf16.mxu0 0
  %618 = vmatpush1.bf16.msra.mxu0 0
  %619 = vmatprep.subr.bf16.mxu0 0
  %620 = vmatpush1.bf16.msra.mxu0 0
  %621 = vmatprep.subr.bf16.mxu0 0
  %622 = vmatpush1.bf16.msra.mxu0 0
  %623 = vmatprep.mubr.bf16.mxu0 0
  %624 = vmatmul.mubr.bf16.gmra.mrb[0].mxu0 %v346
  %v625 = vpop.f32.mrb[0].mxu0
  %v626 = vadd.f32 0.0, %v625
  %v627 = vpop.f32.mrb[0].mxu0
  %v628 = vadd.f32 0.0, %v627
  %v629 = vpop.f32.mrb[0].mxu0
  %v630 = vpop.f32.mrb[0].mxu0
  %631 = vdwg.mxu0
  %632 = vmatprep.subr.bf16.mxu0 %v280
  %633 = vmatpush1.bf16.msra.mxu0 %v279
  %634 = vmatprep.subr.bf16.mxu0 %v386
  %635 = vmatpush1.bf16.msra.mxu0 %v383
  %636 = vmatprep.subr.bf16.mxu0 0
  %637 = vmatpush1.bf16.msra.mxu0 0
  %638 = vmatprep.subr.bf16.mxu0 0
  %639 = vmatpush1.bf16.msra.mxu0 0
  %640 = vmatprep.subr.bf16.mxu0 0
  %641 = vmatpush1.bf16.msra.mxu0 0
  %642 = vmatprep.subr.bf16.mxu0 0
  %643 = vmatpush1.bf16.msra.mxu0 0
  %644 = vmatprep.subr.bf16.mxu0 0
  %645 = vmatpush1.bf16.msra.mxu0 0
  %646 = vmatprep.subr.bf16.mxu0 0
  %647 = vmatpush1.bf16.msra.mxu0 0
  %648 = vmatprep.subr.bf16.mxu0 0
  %649 = vmatpush1.bf16.msra.mxu0 0
  %650 = vmatprep.subr.bf16.mxu0 0
  %651 = vmatpush1.bf16.msra.mxu0 0
  %652 = vmatprep.subr.bf16.mxu0 0
  %653 = vmatpush1.bf16.msra.mxu0 0
  %654 = vmatprep.subr.bf16.mxu0 0
  %655 = vmatpush1.bf16.msra.mxu0 0
  %656 = vmatprep.subr.bf16.mxu0 0
  %657 = vmatpush1.bf16.msra.mxu0 0
  %658 = vmatprep.subr.bf16.mxu0 0
  %659 = vmatpush1.bf16.msra.mxu0 0
  %660 = vmatprep.subr.bf16.mxu0 0
  %661 = vmatpush1.bf16.msra.mxu0 0
  %662 = vmatprep.subr.bf16.mxu0 0
  %663 = vmatpush1.bf16.msra.mxu0 0
  %664 = vmatprep.mubr.bf16.mxu0 0
  %665 = vmatmul.mubr.bf16.gmra.mrb[0].mxu0 %v346
  %v666 = vpop.f32.mrb[0].mxu0
  %v667 = vadd.f32 0.0, %v666
  %v668 = vpop.f32.mrb[0].mxu0
  %v669 = vadd.f32 0.0, %v668
  %v670 = vpop.f32.mrb[0].mxu0
  %v671 = vpop.f32.mrb[0].mxu0
  %672 = vdwg.mxu0
  %673 = vmatprep.subr.bf16.mxu0 %v282
  %674 = vmatpush1.bf16.msra.mxu0 %v281
  %675 = vmatprep.subr.bf16.mxu0 %v392
  %676 = vmatpush1.bf16.msra.mxu0 %v389
  %677 = vmatprep.subr.bf16.mxu0 0
  %678 = vmatpush1.bf16.msra.mxu0 0
  %679 = vmatprep.subr.bf16.mxu0 0
  %680 = vmatpush1.bf16.msra.mxu0 0
  %681 = vmatprep.subr.bf16.mxu0 0
  %682 = vmatpush1.bf16.msra.mxu0 0
  %683 = vmatprep.subr.bf16.mxu0 0
  %684 = vmatpush1.bf16.msra.mxu0 0
  %685 = vmatprep.subr.bf16.mxu0 0
  %686 = vmatpush1.bf16.msra.mxu0 0
  %687 = vmatprep.subr.bf16.mxu0 0
  %688 = vmatpush1.bf16.msra.mxu0 0
  %689 = vmatprep.subr.bf16.mxu0 0
  %690 = vmatpush1.bf16.msra.mxu0 0
  %691 = vmatprep.subr.bf16.mxu0 0
  %692 = vmatpush1.bf16.msra.mxu0 0
  %693 = vmatprep.subr.bf16.mxu0 0
  %694 = vmatpush1.bf16.msra.mxu0 0
  %695 = vmatprep.subr.bf16.mxu0 0
  %696 = vmatpush1.bf16.msra.mxu0 0
  %697 = vmatprep.subr.bf16.mxu0 0
  %698 = vmatpush1.bf16.msra.mxu0 0
  %699 = vmatprep.subr.bf16.mxu0 0
  %700 = vmatpush1.bf16.msra.mxu0 0
  %701 = vmatprep.subr.bf16.mxu0 0
  %702 = vmatpush1.bf16.msra.mxu0 0
  %703 = vmatprep.subr.bf16.mxu0 0
  %704 = vmatpush1.bf16.msra.mxu0 0
  %705 = vmatprep.mubr.bf16.mxu0 0
  %706 = vmatmul.mubr.bf16.gmra.mrb[0].mxu0 %v346
  %v707 = vpop.f32.mrb[0].mxu0
  %v708 = vadd.f32 0.0, %v707
  %v709 = vpop.f32.mrb[0].mxu0
  %v710 = vadd.f32 0.0, %v709
  %v711 = vpop.f32.mrb[0].mxu0
  %v712 = vpop.f32.mrb[0].mxu0
  %713 = vdwg.mxu0
  %714 = vmatprep.subr.bf16.mxu0 %v284
  %715 = vmatpush1.bf16.msra.mxu0 %v283
  %716 = vmatprep.subr.bf16.mxu0 %v398
  %717 = vmatpush1.bf16.msra.mxu0 %v395
  %718 = vmatprep.subr.bf16.mxu0 0
  %719 = vmatpush1.bf16.msra.mxu0 0
  %720 = vmatprep.subr.bf16.mxu0 0
  %721 = vmatpush1.bf16.msra.mxu0 0
  %722 = vmatprep.subr.bf16.mxu0 0
  %723 = vmatpush1.bf16.msra.mxu0 0
  %724 = vmatprep.subr.bf16.mxu0 0
  %725 = vmatpush1.bf16.msra.mxu0 0
  %726 = vmatprep.subr.bf16.mxu0 0
  %727 = vmatpush1.bf16.msra.mxu0 0
  %728 = vmatprep.subr.bf16.mxu0 0
  %729 = vmatpush1.bf16.msra.mxu0 0
  %730 = vmatprep.subr.bf16.mxu0 0
  %731 = vmatpush1.bf16.msra.mxu0 0
  %732 = vmatprep.subr.bf16.mxu0 0
  %733 = vmatpush1.bf16.msra.mxu0 0
  %734 = vmatprep.subr.bf16.mxu0 0
  %735 = vmatpush1.bf16.msra.mxu0 0
  %736 = vmatprep.subr.bf16.mxu0 0
  %737 = vmatpush1.bf16.msra.mxu0 0
  %738 = vmatprep.subr.bf16.mxu0 0
  %739 = vmatpush1.bf16.msra.mxu0 0
  %740 = vmatprep.subr.bf16.mxu0 0
  %741 = vmatpush1.bf16.msra.mxu0 0
  %742 = vmatprep.subr.bf16.mxu0 0
  %743 = vmatpush1.bf16.msra.mxu0 0
  %744 = vmatprep.subr.bf16.mxu0 0
  %745 = vmatpush1.bf16.msra.mxu0 0
  %746 = vmatprep.mubr.bf16.mxu0 0
  %747 = vmatmul.mubr.bf16.gmra.mrb[0].mxu0 %v346
  %v748 = vpop.f32.mrb[0].mxu0
  %v749 = vadd.f32 0.0, %v748
  %v750 = vpop.f32.mrb[0].mxu0
  %v751 = vadd.f32 0.0, %v750
  %v752 = vpop.f32.mrb[0].mxu0
  %v753 = vpop.f32.mrb[0].mxu0
  %754 = vdwg.mxu0
  %755 = vmatprep.subr.bf16.mxu0 %v286
  %756 = vmatpush1.bf16.msra.mxu0 %v285
  %757 = vmatprep.subr.bf16.mxu0 %v404
  %758 = vmatpush1.bf16.msra.mxu0 %v401
  %759 = vmatprep.subr.bf16.mxu0 0
  %760 = vmatpush1.bf16.msra.mxu0 0
  %761 = vmatprep.subr.bf16.mxu0 0
  %762 = vmatpush1.bf16.msra.mxu0 0
  %763 = vmatprep.subr.bf16.mxu0 0
  %764 = vmatpush1.bf16.msra.mxu0 0
  %765 = vmatprep.subr.bf16.mxu0 0
  %766 = vmatpush1.bf16.msra.mxu0 0
  %767 = vmatprep.subr.bf16.mxu0 0
  %768 = vmatpush1.bf16.msra.mxu0 0
  %769 = vmatprep.subr.bf16.mxu0 0
  %770 = vmatpush1.bf16.msra.mxu0 0
  %771 = vmatprep.subr.bf16.mxu0 0
  %772 = vmatpush1.bf16.msra.mxu0 0
  %773 = vmatprep.subr.bf16.mxu0 0
  %774 = vmatpush1.bf16.msra.mxu0 0
  %775 = vmatprep.subr.bf16.mxu0 0
  %776 = vmatpush1.bf16.msra.mxu0 0
  %777 = vmatprep.subr.bf16.mxu0 0
  %778 = vmatpush1.bf16.msra.mxu0 0
  %779 = vmatprep.subr.bf16.mxu0 0
  %780 = vmatpush1.bf16.msra.mxu0 0
  %781 = vmatprep.subr.bf16.mxu0 0
  %782 = vmatpush1.bf16.msra.mxu0 0
  %783 = vmatprep.subr.bf16.mxu0 0
  %784 = vmatpush1.bf16.msra.mxu0 0
  %785 = vmatprep.subr.bf16.mxu0 0
  %786 = vmatpush1.bf16.msra.mxu0 0
  %787 = vmatprep.mubr.bf16.mxu0 0
  %788 = vmatmul.mubr.bf16.gmra.mrb[0].mxu0 %v346
  %v789 = vpop.f32.mrb[0].mxu0
  %v790 = vadd.f32 0.0, %v789
  %v791 = vpop.f32.mrb[0].mxu0
  %v792 = vadd.f32 0.0, %v791
  %v793 = vpop.f32.mrb[0].mxu0
  %v794 = vpop.f32.mrb[0].mxu0
  %795 = vdwg.mxu0
  %796 = vmatprep.subr.bf16.mxu0 %v288
  %797 = vmatpush1.bf16.msra.mxu0 %v287
  %798 = vmatprep.subr.bf16.mxu0 %v410
  %799 = vmatpush1.bf16.msra.mxu0 %v407
  %800 = vmatprep.subr.bf16.mxu0 0
  %801 = vmatpush1.bf16.msra.mxu0 0
  %802 = vmatprep.subr.bf16.mxu0 0
  %803 = vmatpush1.bf16.msra.mxu0 0
  %804 = vmatprep.subr.bf16.mxu0 0
  %805 = vmatpush1.bf16.msra.mxu0 0
  %806 = vmatprep.subr.bf16.mxu0 0
  %807 = vmatpush1.bf16.msra.mxu0 0
  %808 = vmatprep.subr.bf16.mxu0 0
  %809 = vmatpush1.bf16.msra.mxu0 0
  %810 = vmatprep.subr.bf16.mxu0 0
  %811 = vmatpush1.bf16.msra.mxu0 0
  %812 = vmatprep.subr.bf16.mxu0 0
  %813 = vmatpush1.bf16.msra.mxu0 0
  %814 = vmatprep.subr.bf16.mxu0 0
  %815 = vmatpush1.bf16.msra.mxu0 0
  %816 = vmatprep.subr.bf16.mxu0 0
  %817 = vmatpush1.bf16.msra.mxu0 0
  %818 = vmatprep.subr.bf16.mxu0 0
  %819 = vmatpush1.bf16.msra.mxu0 0
  %820 = vmatprep.subr.bf16.mxu0 0
  %821 = vmatpush1.bf16.msra.mxu0 0
  %822 = vmatprep.subr.bf16.mxu0 0
  %823 = vmatpush1.bf16.msra.mxu0 0
  %824 = vmatprep.subr.bf16.mxu0 0
  %825 = vmatpush1.bf16.msra.mxu0 0
  %826 = vmatprep.subr.bf16.mxu0 0
  %827 = vmatpush1.bf16.msra.mxu0 0
  %828 = vmatprep.mubr.bf16.mxu0 0
  %829 = vmatmul.mubr.bf16.gmra.mrb[0].mxu0 %v346
  %v830 = vpop.f32.mrb[0].mxu0
  %v831 = vadd.f32 0.0, %v830
  %v832 = vpop.f32.mrb[0].mxu0
  %v833 = vadd.f32 0.0, %v832
  %v834 = vpop.f32.mrb[0].mxu0
  %v835 = vpop.f32.mrb[0].mxu0
  %836 = vdwg.mxu0
  %837 = vmatprep.subr.bf16.mxu0 %v290
  %838 = vmatpush1.bf16.msra.mxu0 %v289
  %839 = vmatprep.subr.bf16.mxu0 %v416
  %840 = vmatpush1.bf16.msra.mxu0 %v413
  %841 = vmatprep.subr.bf16.mxu0 0
  %842 = vmatpush1.bf16.msra.mxu0 0
  %843 = vmatprep.subr.bf16.mxu0 0
  %844 = vmatpush1.bf16.msra.mxu0 0
  %845 = vmatprep.subr.bf16.mxu0 0
  %846 = vmatpush1.bf16.msra.mxu0 0
  %847 = vmatprep.subr.bf16.mxu0 0
  %848 = vmatpush1.bf16.msra.mxu0 0
  %849 = vmatprep.subr.bf16.mxu0 0
  %850 = vmatpush1.bf16.msra.mxu0 0
  %851 = vmatprep.subr.bf16.mxu0 0
  %852 = vmatpush1.bf16.msra.mxu0 0
  %853 = vmatprep.subr.bf16.mxu0 0
  %854 = vmatpush1.bf16.msra.mxu0 0
  %855 = vmatprep.subr.bf16.mxu0 0
  %856 = vmatpush1.bf16.msra.mxu0 0
  %857 = vmatprep.subr.bf16.mxu0 0
  %858 = vmatpush1.bf16.msra.mxu0 0
  %859 = vmatprep.subr.bf16.mxu0 0
  %860 = vmatpush1.bf16.msra.mxu0 0
  %861 = vmatprep.subr.bf16.mxu0 0
  %862 = vmatpush1.bf16.msra.mxu0 0
  %863 = vmatprep.subr.bf16.mxu0 0
  %864 = vmatpush1.bf16.msra.mxu0 0
  %865 = vmatprep.subr.bf16.mxu0 0
  %866 = vmatpush1.bf16.msra.mxu0 0
  %867 = vmatprep.subr.bf16.mxu0 0
  %868 = vmatpush1.bf16.msra.mxu0 0
  %869 = vmatprep.mubr.bf16.mxu0 0
  %870 = vmatmul.mubr.bf16.gmra.mrb[0].mxu0 %v346
  %v871 = vpop.f32.mrb[0].mxu0
  %v872 = vadd.f32 0.0, %v871
  %v873 = vpop.f32.mrb[0].mxu0
  %v874 = vadd.f32 0.0, %v873
  %v875 = vpop.f32.mrb[0].mxu0
  %v876 = vpop.f32.mrb[0].mxu0
  %877 = vdwg.mxu0
  %878 = vmatprep.subr.bf16.mxu0 %v292
  %879 = vmatpush1.bf16.msra.mxu0 %v291
  %880 = vmatprep.subr.bf16.mxu0 %v422
  %881 = vmatpush1.bf16.msra.mxu0 %v419
  %882 = vmatprep.subr.bf16.mxu0 0
  %883 = vmatpush1.bf16.msra.mxu0 0
  %884 = vmatprep.subr.bf16.mxu0 0
  %885 = vmatpush1.bf16.msra.mxu0 0
  %886 = vmatprep.subr.bf16.mxu0 0
  %887 = vmatpush1.bf16.msra.mxu0 0
  %888 = vmatprep.subr.bf16.mxu0 0
  %889 = vmatpush1.bf16.msra.mxu0 0
  %890 = vmatprep.subr.bf16.mxu0 0
  %891 = vmatpush1.bf16.msra.mxu0 0
  %892 = vmatprep.subr.bf16.mxu0 0
  %893 = vmatpush1.bf16.msra.mxu0 0
  %894 = vmatprep.subr.bf16.mxu0 0
  %895 = vmatpush1.bf16.msra.mxu0 0
  %896 = vmatprep.subr.bf16.mxu0 0
  %897 = vmatpush1.bf16.msra.mxu0 0
  %898 = vmatprep.subr.bf16.mxu0 0
  %899 = vmatpush1.bf16.msra.mxu0 0
  %900 = vmatprep.subr.bf16.mxu0 0
  %901 = vmatpush1.bf16.msra.mxu0 0
  %902 = vmatprep.subr.bf16.mxu0 0
  %903 = vmatpush1.bf16.msra.mxu0 0
  %904 = vmatprep.subr.bf16.mxu0 0
  %905 = vmatpush1.bf16.msra.mxu0 0
  %906 = vmatprep.subr.bf16.mxu0 0
  %907 = vmatpush1.bf16.msra.mxu0 0
  %908 = vmatprep.subr.bf16.mxu0 0
  %909 = vmatpush1.bf16.msra.mxu0 0
  %910 = vmatprep.mubr.bf16.mxu0 0
  %911 = vmatmul.mubr.bf16.gmra.mrb[0].mxu0 %v346
  %v912 = vpop.f32.mrb[0].mxu0
  %v913 = vadd.f32 0.0, %v912
  %v914 = vpop.f32.mrb[0].mxu0
  %v915 = vadd.f32 0.0, %v914
  %v916 = vpop.f32.mrb[0].mxu0
  %v917 = vpop.f32.mrb[0].mxu0
  %918 = vdwg.mxu0
  %919 = vmatprep.subr.bf16.mxu0 0
  %920 = vmatpush1.bf16.msra.mxu0 %v293
  %921 = vmatprep.subr.bf16.mxu0 0
  %922 = vmatpush1.bf16.msra.mxu0 %v425
  %923 = vmatprep.subr.bf16.mxu0 0
  %924 = vmatpush1.bf16.msra.mxu0 0
  %925 = vmatprep.subr.bf16.mxu0 0
  %926 = vmatpush1.bf16.msra.mxu0 0
  %927 = vmatprep.subr.bf16.mxu0 0
  %928 = vmatpush1.bf16.msra.mxu0 0
  %929 = vmatprep.subr.bf16.mxu0 0
  %930 = vmatpush1.bf16.msra.mxu0 0
  %931 = vmatprep.subr.bf16.mxu0 0
  %932 = vmatpush1.bf16.msra.mxu0 0
  %933 = vmatprep.subr.bf16.mxu0 0
  %934 = vmatpush1.bf16.msra.mxu0 0
  %935 = vmatprep.subr.bf16.mxu0 0
  %936 = vmatpush1.bf16.msra.mxu0 0
  %937 = vmatprep.subr.bf16.mxu0 0
  %938 = vmatpush1.bf16.msra.mxu0 0
  %939 = vmatprep.subr.bf16.mxu0 0
  %940 = vmatpush1.bf16.msra.mxu0 0
  %941 = vmatprep.subr.bf16.mxu0 0
  %942 = vmatpush1.bf16.msra.mxu0 0
  %943 = vmatprep.subr.bf16.mxu0 0
  %944 = vmatpush1.bf16.msra.mxu0 0
  %945 = vmatprep.subr.bf16.mxu0 0
  %946 = vmatpush1.bf16.msra.mxu0 0
  %947 = vmatprep.subr.bf16.mxu0 0
  %948 = vmatpush1.bf16.msra.mxu0 0
  %949 = vmatprep.subr.bf16.mxu0 0
  %950 = vmatpush1.bf16.msra.mxu0 0
  %951 = vmatprep.mubr.bf16.mxu0 0
  %952 = vmatmul.mubr.bf16.gmra.mrb[0].mxu0 %v346
  %v953 = vpop.f32.mrb[0].mxu0
  %v954 = vadd.f32 0.0, %v953
  %v955 = vpop.f32.mrb[0].mxu0
  %v956 = vpop.f32.mrb[0].mxu0
  %v957 = vpop.f32.mrb[0].mxu0
  %958 = vdwg.mxu0
  %v959 = vpack.c.bf16 %v462, %v462
  %v960 = vpack.c.bf16 %v464, %v464
  %v961 = vpack.c.bf16 %v503, %v503
  %v962 = vpack.c.bf16 %v505, %v505
  %v963 = vpack.c.bf16 %v544, %v544
  %v964 = vpack.c.bf16 %v546, %v546
  %v965 = vpack.c.bf16 %v585, %v585
  %v966 = vpack.c.bf16 %v587, %v587
  %v967 = vpack.c.bf16 %v626, %v626
  %v968 = vpack.c.bf16 %v628, %v628
  %v969 = vpack.c.bf16 %v667, %v667
  %v970 = vpack.c.bf16 %v669, %v669
  %v971 = vpack.c.bf16 %v708, %v708
  %v972 = vpack.c.bf16 %v710, %v710
  %v973 = vpack.c.bf16 %v749, %v749
  %v974 = vpack.c.bf16 %v751, %v751
  %v975 = vpack.c.bf16 %v790, %v790
  %v976 = vpack.c.bf16 %v792, %v792
  %v977 = vpack.c.bf16 %v831, %v831
  %v978 = vpack.c.bf16 %v833, %v833
  %v979 = vpack.c.bf16 %v872, %v872
  %v980 = vpack.c.bf16 %v874, %v874
  %v981 = vpack.c.bf16 %v913, %v913
  %v982 = vpack.c.bf16 %v915, %v915
  %v983 = vpack.c.bf16 %v954, %v954
  %v984 = vld [vmem:[%s5] sm:$0x3]
  %s985 = scalar_lea.vmem %s5, 2
  %v986 = vld [vmem:[%s985] sm:$0x3]
  %vm987 = vcmask 31744
  %v989 = vsel %vm987, %v986, 0
  %vm991 = vcmask 1041408
  %v993 = vsel %vm991, %v960, 0
  %995 = vmatprep.subr.bf16.mxu0 0
  %996 = vmatpush1.bf16.msra.mxu0 %v993
  %997 = vmatprep.subr.bf16.mxu0 0
  %998 = vmatpush1.bf16.msra.mxu0 0
  %999 = vmatprep.subr.bf16.mxu0 0
  %1000 = vmatpush1.bf16.msra.mxu0 0
  %1001 = vmatprep.subr.bf16.mxu0 0
  %1002 = vmatpush1.bf16.msra.mxu0 0
  %1003 = vmatprep.subr.bf16.mxu0 0
  %1004 = vmatpush1.bf16.msra.mxu0 0
  %1005 = vmatprep.subr.bf16.mxu0 0
  %1006 = vmatpush1.bf16.msra.mxu0 0
  %1007 = vmatprep.subr.bf16.mxu0 0
  %1008 = vmatpush1.bf16.msra.mxu0 0
  %1009 = vmatprep.subr.bf16.mxu0 0
  %1010 = vmatpush1.bf16.msra.mxu0 0
  %1011 = vmatprep.subr.bf16.mxu0 0
  %1012 = vmatpush1.bf16.msra.mxu0 0
  %1013 = vmatprep.subr.bf16.mxu0 0
  %1014 = vmatpush1.bf16.msra.mxu0 0
  %1015 = vmatprep.subr.bf16.mxu0 0
  %1016 = vmatpush1.bf16.msra.mxu0 0
  %1017 = vmatprep.subr.bf16.mxu0 0
  %1018 = vmatpush1.bf16.msra.mxu0 0
  %1019 = vmatprep.subr.bf16.mxu0 0
  %1020 = vmatpush1.bf16.msra.mxu0 0
  %1021 = vmatprep.subr.bf16.mxu0 0
  %1022 = vmatpush1.bf16.msra.mxu0 0
  %1023 = vmatprep.subr.bf16.mxu0 0
  %1024 = vmatpush1.bf16.msra.mxu0 0
  %1025 = vmatprep.subr.bf16.mxu0 0
  %1026 = vmatpush1.bf16.msra.mxu0 0
  %1027 = vmatprep.mubr.bf16.mxu0 0
  %1028 = vmatmul.mubr.bf16.gmra.mrb[0].mxu0 %v989
  %v1029 = vpop.f32.mrb[0].mxu0
  %v1030 = vadd.f32 0.0, %v1029
  %v1031 = vpop.f32.mrb[0].mxu0
  %v1032 = vpop.f32.mrb[0].mxu0
  %v1033 = vpop.f32.mrb[0].mxu0
  %1034 = vdwg.mxu0
  %v1036 = vsel %vm987, %v984, 0
  %v1039 = vsel %vm991, %v959, 0
  %1041 = vmatprep.subr.bf16.mxu0 0
  %1042 = vmatpush1.bf16.msra.mxu0 %v1039
  %1043 = vmatprep.subr.bf16.mxu0 0
  %1044 = vmatpush1.bf16.msra.mxu0 0
  %1045 = vmatprep.subr.bf16.mxu0 0
  %1046 = vmatpush1.bf16.msra.mxu0 0
  %1047 = vmatprep.subr.bf16.mxu0 0
  %1048 = vmatpush1.bf16.msra.mxu0 0
  %1049 = vmatprep.subr.bf16.mxu0 0
  %1050 = vmatpush1.bf16.msra.mxu0 0
  %1051 = vmatprep.subr.bf16.mxu0 0
  %1052 = vmatpush1.bf16.msra.mxu0 0
  %1053 = vmatprep.subr.bf16.mxu0 0
  %1054 = vmatpush1.bf16.msra.mxu0 0
  %1055 = vmatprep.subr.bf16.mxu0 0
  %1056 = vmatpush1.bf16.msra.mxu0 0
  %1057 = vmatprep.subr.bf16.mxu0 0
  %1058 = vmatpush1.bf16.msra.mxu0 0
  %1059 = vmatprep.subr.bf16.mxu0 0
  %1060 = vmatpush1.bf16.msra.mxu0 0
  %1061 = vmatprep.subr.bf16.mxu0 0
  %1062 = vmatpush1.bf16.msra.mxu0 0
  %1063 = vmatprep.subr.bf16.mxu0 0
  %1064 = vmatpush1.bf16.msra.mxu0 0
  %1065 = vmatprep.subr.bf16.mxu0 0
  %1066 = vmatpush1.bf16.msra.mxu0 0
  %1067 = vmatprep.subr.bf16.mxu0 0
  %1068 = vmatpush1.bf16.msra.mxu0 0
  %1069 = vmatprep.subr.bf16.mxu0 0
  %1070 = vmatpush1.bf16.msra.mxu0 0
  %1071 = vmatprep.subr.bf16.mxu0 0
  %1072 = vmatpush1.bf16.msra.mxu0 0
  %1073 = vmatprep.mubr.bf16.mxu0 0
  %1074 = vmatmul.mubr.bf16.gmra.mrb[0].mxu0 %v1036
  %v1075 = vpop.f32.mrb[0].mxu0
  %v1076 = vadd.f32 %v1030, %v1075
  %v1077 = vpop.f32.mrb[0].mxu0
  %v1078 = vpop.f32.mrb[0].mxu0
  %v1079 = vpop.f32.mrb[0].mxu0
  %1080 = vdwg.mxu0
  %s1081 = scalar_lea.vmem %s5, 4
  %v1082 = vld [vmem:[%s1081] sm:$0x3]
  %v1084 = vsel %vm987, %v1082, 0
  %v1087 = vsel %vm991, %v961, 0
  %1089 = vmatprep.subr.bf16.mxu0 0
  %1090 = vmatpush1.bf16.msra.mxu0 %v1087
  %1091 = vmatprep.subr.bf16.mxu0 0
  %1092 = vmatpush1.bf16.msra.mxu0 0
  %1093 = vmatprep.subr.bf16.mxu0 0
  %1094 = vmatpush1.bf16.msra.mxu0 0
  %1095 = vmatprep.subr.bf16.mxu0 0
  %1096 = vmatpush1.bf16.msra.mxu0 0
  %1097 = vmatprep.subr.bf16.mxu0 0
  %1098 = vmatpush1.bf16.msra.mxu0 0
  %1099 = vmatprep.subr.bf16.mxu0 0
  %1100 = vmatpush1.bf16.msra.mxu0 0
  %1101 = vmatprep.subr.bf16.mxu0 0
  %1102 = vmatpush1.bf16.msra.mxu0 0
  %1103 = vmatprep.subr.bf16.mxu0 0
  %1104 = vmatpush1.bf16.msra.mxu0 0
  %1105 = vmatprep.subr.bf16.mxu0 0
  %1106 = vmatpush1.bf16.msra.mxu0 0
  %1107 = vmatprep.subr.bf16.mxu0 0
  %1108 = vmatpush1.bf16.msra.mxu0 0
  %1109 = vmatprep.subr.bf16.mxu0 0
  %1110 = vmatpush1.bf16.msra.mxu0 0
  %1111 = vmatprep.subr.bf16.mxu0 0
  %1112 = vmatpush1.bf16.msra.mxu0 0
  %1113 = vmatprep.subr.bf16.mxu0 0
  %1114 = vmatpush1.bf16.msra.mxu0 0
  %1115 = vmatprep.subr.bf16.mxu0 0
  %1116 = vmatpush1.bf16.msra.mxu0 0
  %1117 = vmatprep.subr.bf16.mxu0 0
  %1118 = vmatpush1.bf16.msra.mxu0 0
  %1119 = vmatprep.subr.bf16.mxu0 0
  %1120 = vmatpush1.bf16.msra.mxu0 0
  %1121 = vmatprep.mubr.bf16.mxu0 0
  %1122 = vmatmul.mubr.bf16.gmra.mrb[0].mxu0 %v1084
  %v1123 = vpop.f32.mrb[0].mxu0
  %v1124 = vadd.f32 0.0, %v1123
  %v1125 = vpop.f32.mrb[0].mxu0
  %v1126 = vpop.f32.mrb[0].mxu0
  %v1127 = vpop.f32.mrb[0].mxu0
  %1128 = vdwg.mxu0
  %v1129 = vadd.f32 %v1076, %v1124
  %s1130 = scalar_lea.vmem %s5, 6
  %v1131 = vld [vmem:[%s1130] sm:$0x3]
  %v1133 = vsel %vm987, %v1131, 0
  %v1136 = vsel %vm991, %v962, 0
  %1138 = vmatprep.subr.bf16.mxu0 0
  %1139 = vmatpush1.bf16.msra.mxu0 %v1136
  %1140 = vmatprep.subr.bf16.mxu0 0
  %1141 = vmatpush1.bf16.msra.mxu0 0
  %1142 = vmatprep.subr.bf16.mxu0 0
  %1143 = vmatpush1.bf16.msra.mxu0 0
  %1144 = vmatprep.subr.bf16.mxu0 0
  %1145 = vmatpush1.bf16.msra.mxu0 0
  %1146 = vmatprep.subr.bf16.mxu0 0
  %1147 = vmatpush1.bf16.msra.mxu0 0
  %1148 = vmatprep.subr.bf16.mxu0 0
  %1149 = vmatpush1.bf16.msra.mxu0 0
  %1150 = vmatprep.subr.bf16.mxu0 0
  %1151 = vmatpush1.bf16.msra.mxu0 0
  %1152 = vmatprep.subr.bf16.mxu0 0
  %1153 = vmatpush1.bf16.msra.mxu0 0
  %1154 = vmatprep.subr.bf16.mxu0 0
  %1155 = vmatpush1.bf16.msra.mxu0 0
  %1156 = vmatprep.subr.bf16.mxu0 0
  %1157 = vmatpush1.bf16.msra.mxu0 0
  %1158 = vmatprep.subr.bf16.mxu0 0
  %1159 = vmatpush1.bf16.msra.mxu0 0
  %1160 = vmatprep.subr.bf16.mxu0 0
  %1161 = vmatpush1.bf16.msra.mxu0 0
  %1162 = vmatprep.subr.bf16.mxu0 0
  %1163 = vmatpush1.bf16.msra.mxu0 0
  %1164 = vmatprep.subr.bf16.mxu0 0
  %1165 = vmatpush1.bf16.msra.mxu0 0
  %1166 = vmatprep.subr.bf16.mxu0 0
  %1167 = vmatpush1.bf16.msra.mxu0 0
  %1168 = vmatprep.subr.bf16.mxu0 0
  %1169 = vmatpush1.bf16.msra.mxu0 0
  %1170 = vmatprep.mubr.bf16.mxu0 0
  %1171 = vmatmul.mubr.bf16.gmra.mrb[0].mxu0 %v1133
  %v1172 = vpop.f32.mrb[0].mxu0
  %v1173 = vadd.f32 0.0, %v1172
  %v1174 = vpop.f32.mrb[0].mxu0
  %v1175 = vpop.f32.mrb[0].mxu0
  %v1176 = vpop.f32.mrb[0].mxu0
  %1177 = vdwg.mxu0
  %v1178 = vadd.f32 %v1129, %v1173
  %s1179 = scalar_lea.vmem %s5, 8
  %v1180 = vld [vmem:[%s1179] sm:$0x3]
  %v1182 = vsel %vm987, %v1180, 0
  %v1185 = vsel %vm991, %v963, 0
  %1187 = vmatprep.subr.bf16.mxu0 0
  %1188 = vmatpush1.bf16.msra.mxu0 %v1185
  %1189 = vmatprep.subr.bf16.mxu0 0
  %1190 = vmatpush1.bf16.msra.mxu0 0
  %1191 = vmatprep.subr.bf16.mxu0 0
  %1192 = vmatpush1.bf16.msra.mxu0 0
  %1193 = vmatprep.subr.bf16.mxu0 0
  %1194 = vmatpush1.bf16.msra.mxu0 0
  %1195 = vmatprep.subr.bf16.mxu0 0
  %1196 = vmatpush1.bf16.msra.mxu0 0
  %1197 = vmatprep.subr.bf16.mxu0 0
  %1198 = vmatpush1.bf16.msra.mxu0 0
  %1199 = vmatprep.subr.bf16.mxu0 0
  %1200 = vmatpush1.bf16.msra.mxu0 0
  %1201 = vmatprep.subr.bf16.mxu0 0
  %1202 = vmatpush1.bf16.msra.mxu0 0
  %1203 = vmatprep.subr.bf16.mxu0 0
  %1204 = vmatpush1.bf16.msra.mxu0 0
  %1205 = vmatprep.subr.bf16.mxu0 0
  %1206 = vmatpush1.bf16.msra.mxu0 0
  %1207 = vmatprep.subr.bf16.mxu0 0
  %1208 = vmatpush1.bf16.msra.mxu0 0
  %1209 = vmatprep.subr.bf16.mxu0 0
  %1210 = vmatpush1.bf16.msra.mxu0 0
  %1211 = vmatprep.subr.bf16.mxu0 0
  %1212 = vmatpush1.bf16.msra.mxu0 0
  %1213 = vmatprep.subr.bf16.mxu0 0
  %1214 = vmatpush1.bf16.msra.mxu0 0
  %1215 = vmatprep.subr.bf16.mxu0 0
  %1216 = vmatpush1.bf16.msra.mxu0 0
  %1217 = vmatprep.subr.bf16.mxu0 0
  %1218 = vmatpush1.bf16.msra.mxu0 0
  %1219 = vmatprep.mubr.bf16.mxu0 0
  %1220 = vmatmul.mubr.bf16.gmra.mrb[0].mxu0 %v1182
  %v1221 = vpop.f32.mrb[0].mxu0
  %v1222 = vadd.f32 0.0, %v1221
  %v1223 = vpop.f32.mrb[0].mxu0
  %v1224 = vpop.f32.mrb[0].mxu0
  %v1225 = vpop.f32.mrb[0].mxu0
  %1226 = vdwg.mxu0
  %v1227 = vadd.f32 %v1178, %v1222
  %s1228 = scalar_lea.vmem %s5, 10
  %v1229 = vld [vmem:[%s1228] sm:$0x3]
  %v1231 = vsel %vm987, %v1229, 0
  %v1234 = vsel %vm991, %v964, 0
  %1236 = vmatprep.subr.bf16.mxu0 0
  %1237 = vmatpush1.bf16.msra.mxu0 %v1234
  %1238 = vmatprep.subr.bf16.mxu0 0
  %1239 = vmatpush1.bf16.msra.mxu0 0
  %1240 = vmatprep.subr.bf16.mxu0 0
  %1241 = vmatpush1.bf16.msra.mxu0 0
  %1242 = vmatprep.subr.bf16.mxu0 0
  %1243 = vmatpush1.bf16.msra.mxu0 0
  %1244 = vmatprep.subr.bf16.mxu0 0
  %1245 = vmatpush1.bf16.msra.mxu0 0
  %1246 = vmatprep.subr.bf16.mxu0 0
  %1247 = vmatpush1.bf16.msra.mxu0 0
  %1248 = vmatprep.subr.bf16.mxu0 0
  %1249 = vmatpush1.bf16.msra.mxu0 0
  %1250 = vmatprep.subr.bf16.mxu0 0
  %1251 = vmatpush1.bf16.msra.mxu0 0
  %1252 = vmatprep.subr.bf16.mxu0 0
  %1253 = vmatpush1.bf16.msra.mxu0 0
  %1254 = vmatprep.subr.bf16.mxu0 0
  %1255 = vmatpush1.bf16.msra.mxu0 0
  %1256 = vmatprep.subr.bf16.mxu0 0
  %1257 = vmatpush1.bf16.msra.mxu0 0
  %1258 = vmatprep.subr.bf16.mxu0 0
  %1259 = vmatpush1.bf16.msra.mxu0 0
  %1260 = vmatprep.subr.bf16.mxu0 0
  %1261 = vmatpush1.bf16.msra.mxu0 0
  %1262 = vmatprep.subr.bf16.mxu0 0
  %1263 = vmatpush1.bf16.msra.mxu0 0
  %1264 = vmatprep.subr.bf16.mxu0 0
  %1265 = vmatpush1.bf16.msra.mxu0 0
  %1266 = vmatprep.subr.bf16.mxu0 0
  %1267 = vmatpush1.bf16.msra.mxu0 0
  %1268 = vmatprep.mubr.bf16.mxu0 0
  %1269 = vmatmul.mubr.bf16.gmra.mrb[0].mxu0 %v1231
  %v1270 = vpop.f32.mrb[0].mxu0
  %v1271 = vadd.f32 0.0, %v1270
  %v1272 = vpop.f32.mrb[0].mxu0
  %v1273 = vpop.f32.mrb[0].mxu0
  %v1274 = vpop.f32.mrb[0].mxu0
  %1275 = vdwg.mxu0
  %v1276 = vadd.f32 %v1227, %v1271
  %s1277 = scalar_lea.vmem %s5, 12
  %v1278 = vld [vmem:[%s1277] sm:$0x3]
  %v1280 = vsel %vm987, %v1278, 0
  %v1283 = vsel %vm991, %v965, 0
  %1285 = vmatprep.subr.bf16.mxu0 0
  %1286 = vmatpush1.bf16.msra.mxu0 %v1283
  %1287 = vmatprep.subr.bf16.mxu0 0
  %1288 = vmatpush1.bf16.msra.mxu0 0
  %1289 = vmatprep.subr.bf16.mxu0 0
  %1290 = vmatpush1.bf16.msra.mxu0 0
  %1291 = vmatprep.subr.bf16.mxu0 0
  %1292 = vmatpush1.bf16.msra.mxu0 0
  %1293 = vmatprep.subr.bf16.mxu0 0
  %1294 = vmatpush1.bf16.msra.mxu0 0
  %1295 = vmatprep.subr.bf16.mxu0 0
  %1296 = vmatpush1.bf16.msra.mxu0 0
  %1297 = vmatprep.subr.bf16.mxu0 0
  %1298 = vmatpush1.bf16.msra.mxu0 0
  %1299 = vmatprep.subr.bf16.mxu0 0
  %1300 = vmatpush1.bf16.msra.mxu0 0
  %1301 = vmatprep.subr.bf16.mxu0 0
  %1302 = vmatpush1.bf16.msra.mxu0 0
  %1303 = vmatprep.subr.bf16.mxu0 0
  %1304 = vmatpush1.bf16.msra.mxu0 0
  %1305 = vmatprep.subr.bf16.mxu0 0
  %1306 = vmatpush1.bf16.msra.mxu0 0
  %1307 = vmatprep.subr.bf16.mxu0 0
  %1308 = vmatpush1.bf16.msra.mxu0 0
  %1309 = vmatprep.subr.bf16.mxu0 0
  %1310 = vmatpush1.bf16.msra.mxu0 0
  %1311 = vmatprep.subr.bf16.mxu0 0
  %1312 = vmatpush1.bf16.msra.mxu0 0
  %1313 = vmatprep.subr.bf16.mxu0 0
  %1314 = vmatpush1.bf16.msra.mxu0 0
  %1315 = vmatprep.subr.bf16.mxu0 0
  %1316 = vmatpush1.bf16.msra.mxu0 0
  %1317 = vmatprep.mubr.bf16.mxu0 0
  %1318 = vmatmul.mubr.bf16.gmra.mrb[0].mxu0 %v1280
  %v1319 = vpop.f32.mrb[0].mxu0
  %v1320 = vadd.f32 0.0, %v1319
  %v1321 = vpop.f32.mrb[0].mxu0
  %v1322 = vpop.f32.mrb[0].mxu0
  %v1323 = vpop.f32.mrb[0].mxu0
  %1324 = vdwg.mxu0
  %v1325 = vadd.f32 %v1276, %v1320
  %s1326 = scalar_lea.vmem %s5, 14
  %v1327 = vld [vmem:[%s1326] sm:$0x3]
  %v1329 = vsel %vm987, %v1327, 0
  %v1332 = vsel %vm991, %v966, 0
  %1334 = vmatprep.subr.bf16.mxu0 0
  %1335 = vmatpush1.bf16.msra.mxu0 %v1332
  %1336 = vmatprep.subr.bf16.mxu0 0
  %1337 = vmatpush1.bf16.msra.mxu0 0
  %1338 = vmatprep.subr.bf16.mxu0 0
  %1339 = vmatpush1.bf16.msra.mxu0 0
  %1340 = vmatprep.subr.bf16.mxu0 0
  %1341 = vmatpush1.bf16.msra.mxu0 0
  %1342 = vmatprep.subr.bf16.mxu0 0
  %1343 = vmatpush1.bf16.msra.mxu0 0
  %1344 = vmatprep.subr.bf16.mxu0 0
  %1345 = vmatpush1.bf16.msra.mxu0 0
  %1346 = vmatprep.subr.bf16.mxu0 0
  %1347 = vmatpush1.bf16.msra.mxu0 0
  %1348 = vmatprep.subr.bf16.mxu0 0
  %1349 = vmatpush1.bf16.msra.mxu0 0
  %1350 = vmatprep.subr.bf16.mxu0 0
  %1351 = vmatpush1.bf16.msra.mxu0 0
  %1352 = vmatprep.subr.bf16.mxu0 0
  %1353 = vmatpush1.bf16.msra.mxu0 0
  %1354 = vmatprep.subr.bf16.mxu0 0
  %1355 = vmatpush1.bf16.msra.mxu0 0
  %1356 = vmatprep.subr.bf16.mxu0 0
  %1357 = vmatpush1.bf16.msra.mxu0 0
  %1358 = vmatprep.subr.bf16.mxu0 0
  %1359 = vmatpush1.bf16.msra.mxu0 0
  %1360 = vmatprep.subr.bf16.mxu0 0
  %1361 = vmatpush1.bf16.msra.mxu0 0
  %1362 = vmatprep.subr.bf16.mxu0 0
  %1363 = vmatpush1.bf16.msra.mxu0 0
  %1364 = vmatprep.subr.bf16.mxu0 0
  %1365 = vmatpush1.bf16.msra.mxu0 0
  %1366 = vmatprep.mubr.bf16.mxu0 0
  %1367 = vmatmul.mubr.bf16.gmra.mrb[0].mxu0 %v1329
  %v1368 = vpop.f32.mrb[0].mxu0
  %v1369 = vadd.f32 0.0, %v1368
  %v1370 = vpop.f32.mrb[0].mxu0
  %v1371 = vpop.f32.mrb[0].mxu0
  %v1372 = vpop.f32.mrb[0].mxu0
  %1373 = vdwg.mxu0
  %v1374 = vadd.f32 %v1325, %v1369
  %s1375 = scalar_lea.vmem %s5, 16
  %v1376 = vld [vmem:[%s1375] sm:$0x3]
  %v1378 = vsel %vm987, %v1376, 0
  %v1381 = vsel %vm991, %v967, 0
  %1383 = vmatprep.subr.bf16.mxu0 0
  %1384 = vmatpush1.bf16.msra.mxu0 %v1381
  %1385 = vmatprep.subr.bf16.mxu0 0
  %1386 = vmatpush1.bf16.msra.mxu0 0
  %1387 = vmatprep.subr.bf16.mxu0 0
  %1388 = vmatpush1.bf16.msra.mxu0 0
  %1389 = vmatprep.subr.bf16.mxu0 0
  %1390 = vmatpush1.bf16.msra.mxu0 0
  %1391 = vmatprep.subr.bf16.mxu0 0
  %1392 = vmatpush1.bf16.msra.mxu0 0
  %1393 = vmatprep.subr.bf16.mxu0 0
  %1394 = vmatpush1.bf16.msra.mxu0 0
  %1395 = vmatprep.subr.bf16.mxu0 0
  %1396 = vmatpush1.bf16.msra.mxu0 0
  %1397 = vmatprep.subr.bf16.mxu0 0
  %1398 = vmatpush1.bf16.msra.mxu0 0
  %1399 = vmatprep.subr.bf16.mxu0 0
  %1400 = vmatpush1.bf16.msra.mxu0 0
  %1401 = vmatprep.subr.bf16.mxu0 0
  %1402 = vmatpush1.bf16.msra.mxu0 0
  %1403 = vmatprep.subr.bf16.mxu0 0
  %1404 = vmatpush1.bf16.msra.mxu0 0
  %1405 = vmatprep.subr.bf16.mxu0 0
  %1406 = vmatpush1.bf16.msra.mxu0 0
  %1407 = vmatprep.subr.bf16.mxu0 0
  %1408 = vmatpush1.bf16.msra.mxu0 0
  %1409 = vmatprep.subr.bf16.mxu0 0
  %1410 = vmatpush1.bf16.msra.mxu0 0
  %1411 = vmatprep.subr.bf16.mxu0 0
  %1412 = vmatpush1.bf16.msra.mxu0 0
  %1413 = vmatprep.subr.bf16.mxu0 0
  %1414 = vmatpush1.bf16.msra.mxu0 0
  %1415 = vmatprep.mubr.bf16.mxu0 0
  %1416 = vmatmul.mubr.bf16.gmra.mrb[0].mxu0 %v1378
  %v1417 = vpop.f32.mrb[0].mxu0
  %v1418 = vadd.f32 0.0, %v1417
  %v1419 = vpop.f32.mrb[0].mxu0
  %v1420 = vpop.f32.mrb[0].mxu0
  %v1421 = vpop.f32.mrb[0].mxu0
  %1422 = vdwg.mxu0
  %v1423 = vadd.f32 %v1374, %v1418
  %s1424 = scalar_lea.vmem %s5, 18
  %v1425 = vld [vmem:[%s1424] sm:$0x3]
  %v1427 = vsel %vm987, %v1425, 0
  %v1430 = vsel %vm991, %v968, 0
  %1432 = vmatprep.subr.bf16.mxu0 0
  %1433 = vmatpush1.bf16.msra.mxu0 %v1430
  %1434 = vmatprep.subr.bf16.mxu0 0
  %1435 = vmatpush1.bf16.msra.mxu0 0
  %1436 = vmatprep.subr.bf16.mxu0 0
  %1437 = vmatpush1.bf16.msra.mxu0 0
  %1438 = vmatprep.subr.bf16.mxu0 0
  %1439 = vmatpush1.bf16.msra.mxu0 0
  %1440 = vmatprep.subr.bf16.mxu0 0
  %1441 = vmatpush1.bf16.msra.mxu0 0
  %1442 = vmatprep.subr.bf16.mxu0 0
  %1443 = vmatpush1.bf16.msra.mxu0 0
  %1444 = vmatprep.subr.bf16.mxu0 0
  %1445 = vmatpush1.bf16.msra.mxu0 0
  %1446 = vmatprep.subr.bf16.mxu0 0
  %1447 = vmatpush1.bf16.msra.mxu0 0
  %1448 = vmatprep.subr.bf16.mxu0 0
  %1449 = vmatpush1.bf16.msra.mxu0 0
  %1450 = vmatprep.subr.bf16.mxu0 0
  %1451 = vmatpush1.bf16.msra.mxu0 0
  %1452 = vmatprep.subr.bf16.mxu0 0
  %1453 = vmatpush1.bf16.msra.mxu0 0
  %1454 = vmatprep.subr.bf16.mxu0 0
  %1455 = vmatpush1.bf16.msra.mxu0 0
  %1456 = vmatprep.subr.bf16.mxu0 0
  %1457 = vmatpush1.bf16.msra.mxu0 0
  %1458 = vmatprep.subr.bf16.mxu0 0
  %1459 = vmatpush1.bf16.msra.mxu0 0
  %1460 = vmatprep.subr.bf16.mxu0 0
  %1461 = vmatpush1.bf16.msra.mxu0 0
  %1462 = vmatprep.subr.bf16.mxu0 0
  %1463 = vmatpush1.bf16.msra.mxu0 0
  %1464 = vmatprep.mubr.bf16.mxu0 0
  %1465 = vmatmul.mubr.bf16.gmra.mrb[0].mxu0 %v1427
  %v1466 = vpop.f32.mrb[0].mxu0
  %v1467 = vadd.f32 0.0, %v1466
  %v1468 = vpop.f32.mrb[0].mxu0
  %v1469 = vpop.f32.mrb[0].mxu0
  %v1470 = vpop.f32.mrb[0].mxu0
  %1471 = vdwg.mxu0
  %v1472 = vadd.f32 %v1423, %v1467
  %s1473 = scalar_lea.vmem %s5, 20
  %v1474 = vld [vmem:[%s1473] sm:$0x3]
  %v1476 = vsel %vm987, %v1474, 0
  %v1479 = vsel %vm991, %v969, 0
  %1481 = vmatprep.subr.bf16.mxu0 0
  %1482 = vmatpush1.bf16.msra.mxu0 %v1479
  %1483 = vmatprep.subr.bf16.mxu0 0
  %1484 = vmatpush1.bf16.msra.mxu0 0
  %1485 = vmatprep.subr.bf16.mxu0 0
  %1486 = vmatpush1.bf16.msra.mxu0 0
  %1487 = vmatprep.subr.bf16.mxu0 0
  %1488 = vmatpush1.bf16.msra.mxu0 0
  %1489 = vmatprep.subr.bf16.mxu0 0
  %1490 = vmatpush1.bf16.msra.mxu0 0
  %1491 = vmatprep.subr.bf16.mxu0 0
  %1492 = vmatpush1.bf16.msra.mxu0 0
  %1493 = vmatprep.subr.bf16.mxu0 0
  %1494 = vmatpush1.bf16.msra.mxu0 0
  %1495 = vmatprep.subr.bf16.mxu0 0
  %1496 = vmatpush1.bf16.msra.mxu0 0
  %1497 = vmatprep.subr.bf16.mxu0 0
  %1498 = vmatpush1.bf16.msra.mxu0 0
  %1499 = vmatprep.subr.bf16.mxu0 0
  %1500 = vmatpush1.bf16.msra.mxu0 0
  %1501 = vmatprep.subr.bf16.mxu0 0
  %1502 = vmatpush1.bf16.msra.mxu0 0
  %1503 = vmatprep.subr.bf16.mxu0 0
  %1504 = vmatpush1.bf16.msra.mxu0 0
  %1505 = vmatprep.subr.bf16.mxu0 0
  %1506 = vmatpush1.bf16.msra.mxu0 0
  %1507 = vmatprep.subr.bf16.mxu0 0
  %1508 = vmatpush1.bf16.msra.mxu0 0
  %1509 = vmatprep.subr.bf16.mxu0 0
  %1510 = vmatpush1.bf16.msra.mxu0 0
  %1511 = vmatprep.subr.bf16.mxu0 0
  %1512 = vmatpush1.bf16.msra.mxu0 0
  %1513 = vmatprep.mubr.bf16.mxu0 0
  %1514 = vmatmul.mubr.bf16.gmra.mrb[0].mxu0 %v1476
  %v1515 = vpop.f32.mrb[0].mxu0
  %v1516 = vadd.f32 0.0, %v1515
  %v1517 = vpop.f32.mrb[0].mxu0
  %v1518 = vpop.f32.mrb[0].mxu0
  %v1519 = vpop.f32.mrb[0].mxu0
  %1520 = vdwg.mxu0
  %v1521 = vadd.f32 %v1472, %v1516
  %s1522 = scalar_lea.vmem %s5, 22
  %v1523 = vld [vmem:[%s1522] sm:$0x3]
  %v1525 = vsel %vm987, %v1523, 0
  %v1528 = vsel %vm991, %v970, 0
  %1530 = vmatprep.subr.bf16.mxu0 0
  %1531 = vmatpush1.bf16.msra.mxu0 %v1528
  %1532 = vmatprep.subr.bf16.mxu0 0
  %1533 = vmatpush1.bf16.msra.mxu0 0
  %1534 = vmatprep.subr.bf16.mxu0 0
  %1535 = vmatpush1.bf16.msra.mxu0 0
  %1536 = vmatprep.subr.bf16.mxu0 0
  %1537 = vmatpush1.bf16.msra.mxu0 0
  %1538 = vmatprep.subr.bf16.mxu0 0
  %1539 = vmatpush1.bf16.msra.mxu0 0
  %1540 = vmatprep.subr.bf16.mxu0 0
  %1541 = vmatpush1.bf16.msra.mxu0 0
  %1542 = vmatprep.subr.bf16.mxu0 0
  %1543 = vmatpush1.bf16.msra.mxu0 0
  %1544 = vmatprep.subr.bf16.mxu0 0
  %1545 = vmatpush1.bf16.msra.mxu0 0
  %1546 = vmatprep.subr.bf16.mxu0 0
  %1547 = vmatpush1.bf16.msra.mxu0 0
  %1548 = vmatprep.subr.bf16.mxu0 0
  %1549 = vmatpush1.bf16.msra.mxu0 0
  %1550 = vmatprep.subr.bf16.mxu0 0
  %1551 = vmatpush1.bf16.msra.mxu0 0
  %1552 = vmatprep.subr.bf16.mxu0 0
  %1553 = vmatpush1.bf16.msra.mxu0 0
  %1554 = vmatprep.subr.bf16.mxu0 0
  %1555 = vmatpush1.bf16.msra.mxu0 0
  %1556 = vmatprep.subr.bf16.mxu0 0
  %1557 = vmatpush1.bf16.msra.mxu0 0
  %1558 = vmatprep.subr.bf16.mxu0 0
  %1559 = vmatpush1.bf16.msra.mxu0 0
  %1560 = vmatprep.subr.bf16.mxu0 0
  %1561 = vmatpush1.bf16.msra.mxu0 0
  %1562 = vmatprep.mubr.bf16.mxu0 0
  %1563 = vmatmul.mubr.bf16.gmra.mrb[0].mxu0 %v1525
  %v1564 = vpop.f32.mrb[0].mxu0
  %v1565 = vadd.f32 0.0, %v1564
  %v1566 = vpop.f32.mrb[0].mxu0
  %v1567 = vpop.f32.mrb[0].mxu0
  %v1568 = vpop.f32.mrb[0].mxu0
  %1569 = vdwg.mxu0
  %v1570 = vadd.f32 %v1521, %v1565
  %s1571 = scalar_lea.vmem %s5, 24
  %v1572 = vld [vmem:[%s1571] sm:$0x3]
  %v1574 = vsel %vm987, %v1572, 0
  %v1577 = vsel %vm991, %v971, 0
  %1579 = vmatprep.subr.bf16.mxu0 0
  %1580 = vmatpush1.bf16.msra.mxu0 %v1577
  %1581 = vmatprep.subr.bf16.mxu0 0
  %1582 = vmatpush1.bf16.msra.mxu0 0
  %1583 = vmatprep.subr.bf16.mxu0 0
  %1584 = vmatpush1.bf16.msra.mxu0 0
  %1585 = vmatprep.subr.bf16.mxu0 0
  %1586 = vmatpush1.bf16.msra.mxu0 0
  %1587 = vmatprep.subr.bf16.mxu0 0
  %1588 = vmatpush1.bf16.msra.mxu0 0
  %1589 = vmatprep.subr.bf16.mxu0 0
  %1590 = vmatpush1.bf16.msra.mxu0 0
  %1591 = vmatprep.subr.bf16.mxu0 0
  %1592 = vmatpush1.bf16.msra.mxu0 0
  %1593 = vmatprep.subr.bf16.mxu0 0
  %1594 = vmatpush1.bf16.msra.mxu0 0
  %1595 = vmatprep.subr.bf16.mxu0 0
  %1596 = vmatpush1.bf16.msra.mxu0 0
  %1597 = vmatprep.subr.bf16.mxu0 0
  %1598 = vmatpush1.bf16.msra.mxu0 0
  %1599 = vmatprep.subr.bf16.mxu0 0
  %1600 = vmatpush1.bf16.msra.mxu0 0
  %1601 = vmatprep.subr.bf16.mxu0 0
  %1602 = vmatpush1.bf16.msra.mxu0 0
  %1603 = vmatprep.subr.bf16.mxu0 0
  %1604 = vmatpush1.bf16.msra.mxu0 0
  %1605 = vmatprep.subr.bf16.mxu0 0
  %1606 = vmatpush1.bf16.msra.mxu0 0
  %1607 = vmatprep.subr.bf16.mxu0 0
  %1608 = vmatpush1.bf16.msra.mxu0 0
  %1609 = vmatprep.subr.bf16.mxu0 0
  %1610 = vmatpush1.bf16.msra.mxu0 0
  %1611 = vmatprep.mubr.bf16.mxu0 0
  %1612 = vmatmul.mubr.bf16.gmra.mrb[0].mxu0 %v1574
  %v1613 = vpop.f32.mrb[0].mxu0
  %v1614 = vadd.f32 0.0, %v1613
  %v1615 = vpop.f32.mrb[0].mxu0
  %v1616 = vpop.f32.mrb[0].mxu0
  %v1617 = vpop.f32.mrb[0].mxu0
  %1618 = vdwg.mxu0
  %v1619 = vadd.f32 %v1570, %v1614
  %s1620 = scalar_lea.vmem %s5, 26
  %v1621 = vld [vmem:[%s1620] sm:$0x3]
  %v1623 = vsel %vm987, %v1621, 0
  %v1626 = vsel %vm991, %v972, 0
  %1628 = vmatprep.subr.bf16.mxu0 0
  %1629 = vmatpush1.bf16.msra.mxu0 %v1626
  %1630 = vmatprep.subr.bf16.mxu0 0
  %1631 = vmatpush1.bf16.msra.mxu0 0
  %1632 = vmatprep.subr.bf16.mxu0 0
  %1633 = vmatpush1.bf16.msra.mxu0 0
  %1634 = vmatprep.subr.bf16.mxu0 0
  %1635 = vmatpush1.bf16.msra.mxu0 0
  %1636 = vmatprep.subr.bf16.mxu0 0
  %1637 = vmatpush1.bf16.msra.mxu0 0
  %1638 = vmatprep.subr.bf16.mxu0 0
  %1639 = vmatpush1.bf16.msra.mxu0 0
  %1640 = vmatprep.subr.bf16.mxu0 0
  %1641 = vmatpush1.bf16.msra.mxu0 0
  %1642 = vmatprep.subr.bf16.mxu0 0
  %1643 = vmatpush1.bf16.msra.mxu0 0
  %1644 = vmatprep.subr.bf16.mxu0 0
  %1645 = vmatpush1.bf16.msra.mxu0 0
  %1646 = vmatprep.subr.bf16.mxu0 0
  %1647 = vmatpush1.bf16.msra.mxu0 0
  %1648 = vmatprep.subr.bf16.mxu0 0
  %1649 = vmatpush1.bf16.msra.mxu0 0
  %1650 = vmatprep.subr.bf16.mxu0 0
  %1651 = vmatpush1.bf16.msra.mxu0 0
  %1652 = vmatprep.subr.bf16.mxu0 0
  %1653 = vmatpush1.bf16.msra.mxu0 0
  %1654 = vmatprep.subr.bf16.mxu0 0
  %1655 = vmatpush1.bf16.msra.mxu0 0
  %1656 = vmatprep.subr.bf16.mxu0 0
  %1657 = vmatpush1.bf16.msra.mxu0 0
  %1658 = vmatprep.subr.bf16.mxu0 0
  %1659 = vmatpush1.bf16.msra.mxu0 0
  %1660 = vmatprep.mubr.bf16.mxu0 0
  %1661 = vmatmul.mubr.bf16.gmra.mrb[0].mxu0 %v1623
  %v1662 = vpop.f32.mrb[0].mxu0
  %v1663 = vadd.f32 0.0, %v1662
  %v1664 = vpop.f32.mrb[0].mxu0
  %v1665 = vpop.f32.mrb[0].mxu0
  %v1666 = vpop.f32.mrb[0].mxu0
  %1667 = vdwg.mxu0
  %v1668 = vadd.f32 %v1619, %v1663
  %s1669 = scalar_lea.vmem %s5, 28
  %v1670 = vld [vmem:[%s1669] sm:$0x3]
  %v1672 = vsel %vm987, %v1670, 0
  %v1675 = vsel %vm991, %v973, 0
  %1677 = vmatprep.subr.bf16.mxu0 0
  %1678 = vmatpush1.bf16.msra.mxu0 %v1675
  %1679 = vmatprep.subr.bf16.mxu0 0
  %1680 = vmatpush1.bf16.msra.mxu0 0
  %1681 = vmatprep.subr.bf16.mxu0 0
  %1682 = vmatpush1.bf16.msra.mxu0 0
  %1683 = vmatprep.subr.bf16.mxu0 0
  %1684 = vmatpush1.bf16.msra.mxu0 0
  %1685 = vmatprep.subr.bf16.mxu0 0
  %1686 = vmatpush1.bf16.msra.mxu0 0
  %1687 = vmatprep.subr.bf16.mxu0 0
  %1688 = vmatpush1.bf16.msra.mxu0 0
  %1689 = vmatprep.subr.bf16.mxu0 0
  %1690 = vmatpush1.bf16.msra.mxu0 0
  %1691 = vmatprep.subr.bf16.mxu0 0
  %1692 = vmatpush1.bf16.msra.mxu0 0
  %1693 = vmatprep.subr.bf16.mxu0 0
  %1694 = vmatpush1.bf16.msra.mxu0 0
  %1695 = vmatprep.subr.bf16.mxu0 0
  %1696 = vmatpush1.bf16.msra.mxu0 0
  %1697 = vmatprep.subr.bf16.mxu0 0
  %1698 = vmatpush1.bf16.msra.mxu0 0
  %1699 = vmatprep.subr.bf16.mxu0 0
  %1700 = vmatpush1.bf16.msra.mxu0 0
  %1701 = vmatprep.subr.bf16.mxu0 0
  %1702 = vmatpush1.bf16.msra.mxu0 0
  %1703 = vmatprep.subr.bf16.mxu0 0
  %1704 = vmatpush1.bf16.msra.mxu0 0
  %1705 = vmatprep.subr.bf16.mxu0 0
  %1706 = vmatpush1.bf16.msra.mxu0 0
  %1707 = vmatprep.subr.bf16.mxu0 0
  %1708 = vmatpush1.bf16.msra.mxu0 0
  %1709 = vmatprep.mubr.bf16.mxu0 0
  %1710 = vmatmul.mubr.bf16.gmra.mrb[0].mxu0 %v1672
  %v1711 = vpop.f32.mrb[0].mxu0
  %v1712 = vadd.f32 0.0, %v1711
  %v1713 = vpop.f32.mrb[0].mxu0
  %v1714 = vpop.f32.mrb[0].mxu0
  %v1715 = vpop.f32.mrb[0].mxu0
  %1716 = vdwg.mxu0
  %v1717 = vadd.f32 %v1668, %v1712
  %s1718 = scalar_lea.vmem %s5, 30
  %v1719 = vld [vmem:[%s1718] sm:$0x3]
  %v1721 = vsel %vm987, %v1719, 0
  %v1724 = vsel %vm991, %v974, 0
  %1726 = vmatprep.subr.bf16.mxu0 0
  %1727 = vmatpush1.bf16.msra.mxu0 %v1724
  %1728 = vmatprep.subr.bf16.mxu0 0
  %1729 = vmatpush1.bf16.msra.mxu0 0
  %1730 = vmatprep.subr.bf16.mxu0 0
  %1731 = vmatpush1.bf16.msra.mxu0 0
  %1732 = vmatprep.subr.bf16.mxu0 0
  %1733 = vmatpush1.bf16.msra.mxu0 0
  %1734 = vmatprep.subr.bf16.mxu0 0
  %1735 = vmatpush1.bf16.msra.mxu0 0
  %1736 = vmatprep.subr.bf16.mxu0 0
  %1737 = vmatpush1.bf16.msra.mxu0 0
  %1738 = vmatprep.subr.bf16.mxu0 0
  %1739 = vmatpush1.bf16.msra.mxu0 0
  %1740 = vmatprep.subr.bf16.mxu0 0
  %1741 = vmatpush1.bf16.msra.mxu0 0
  %1742 = vmatprep.subr.bf16.mxu0 0
  %1743 = vmatpush1.bf16.msra.mxu0 0
  %1744 = vmatprep.subr.bf16.mxu0 0
  %1745 = vmatpush1.bf16.msra.mxu0 0
  %1746 = vmatprep.subr.bf16.mxu0 0
  %1747 = vmatpush1.bf16.msra.mxu0 0
  %1748 = vmatprep.subr.bf16.mxu0 0
  %1749 = vmatpush1.bf16.msra.mxu0 0
  %1750 = vmatprep.subr.bf16.mxu0 0
  %1751 = vmatpush1.bf16.msra.mxu0 0
  %1752 = vmatprep.subr.bf16.mxu0 0
  %1753 = vmatpush1.bf16.msra.mxu0 0
  %1754 = vmatprep.subr.bf16.mxu0 0
  %1755 = vmatpush1.bf16.msra.mxu0 0
  %1756 = vmatprep.subr.bf16.mxu0 0
  %1757 = vmatpush1.bf16.msra.mxu0 0
  %1758 = vmatprep.mubr.bf16.mxu0 0
  %1759 = vmatmul.mubr.bf16.gmra.mrb[0].mxu0 %v1721
  %v1760 = vpop.f32.mrb[0].mxu0
  %v1761 = vadd.f32 0.0, %v1760
  %v1762 = vpop.f32.mrb[0].mxu0
  %v1763 = vpop.f32.mrb[0].mxu0
  %v1764 = vpop.f32.mrb[0].mxu0
  %1765 = vdwg.mxu0
  %v1766 = vadd.f32 %v1717, %v1761
  %s1767 = scalar_lea.vmem %s5, 32
  %v1768 = vld [vmem:[%s1767] sm:$0x3]
  %v1770 = vsel %vm987, %v1768, 0
  %v1773 = vsel %vm991, %v975, 0
  %1775 = vmatprep.subr.bf16.mxu0 0
  %1776 = vmatpush1.bf16.msra.mxu0 %v1773
  %1777 = vmatprep.subr.bf16.mxu0 0
  %1778 = vmatpush1.bf16.msra.mxu0 0
  %1779 = vmatprep.subr.bf16.mxu0 0
  %1780 = vmatpush1.bf16.msra.mxu0 0
  %1781 = vmatprep.subr.bf16.mxu0 0
  %1782 = vmatpush1.bf16.msra.mxu0 0
  %1783 = vmatprep.subr.bf16.mxu0 0
  %1784 = vmatpush1.bf16.msra.mxu0 0
  %1785 = vmatprep.subr.bf16.mxu0 0
  %1786 = vmatpush1.bf16.msra.mxu0 0
  %1787 = vmatprep.subr.bf16.mxu0 0
  %1788 = vmatpush1.bf16.msra.mxu0 0
  %1789 = vmatprep.subr.bf16.mxu0 0
  %1790 = vmatpush1.bf16.msra.mxu0 0
  %1791 = vmatprep.subr.bf16.mxu0 0
  %1792 = vmatpush1.bf16.msra.mxu0 0
  %1793 = vmatprep.subr.bf16.mxu0 0
  %1794 = vmatpush1.bf16.msra.mxu0 0
  %1795 = vmatprep.subr.bf16.mxu0 0
  %1796 = vmatpush1.bf16.msra.mxu0 0
  %1797 = vmatprep.subr.bf16.mxu0 0
  %1798 = vmatpush1.bf16.msra.mxu0 0
  %1799 = vmatprep.subr.bf16.mxu0 0
  %1800 = vmatpush1.bf16.msra.mxu0 0
  %1801 = vmatprep.subr.bf16.mxu0 0
  %1802 = vmatpush1.bf16.msra.mxu0 0
  %1803 = vmatprep.subr.bf16.mxu0 0
  %1804 = vmatpush1.bf16.msra.mxu0 0
  %1805 = vmatprep.subr.bf16.mxu0 0
  %1806 = vmatpush1.bf16.msra.mxu0 0
  %1807 = vmatprep.mubr.bf16.mxu0 0
  %1808 = vmatmul.mubr.bf16.gmra.mrb[0].mxu0 %v1770
  %v1809 = vpop.f32.mrb[0].mxu0
  %v1810 = vadd.f32 0.0, %v1809
  %v1811 = vpop.f32.mrb[0].mxu0
  %v1812 = vpop.f32.mrb[0].mxu0
  %v1813 = vpop.f32.mrb[0].mxu0
  %1814 = vdwg.mxu0
  %v1815 = vadd.f32 %v1766, %v1810
  %s1816 = scalar_lea.vmem %s5, 34
  %v1817 = vld [vmem:[%s1816] sm:$0x3]
  %v1819 = vsel %vm987, %v1817, 0
  %v1822 = vsel %vm991, %v976, 0
  %1824 = vmatprep.subr.bf16.mxu0 0
  %1825 = vmatpush1.bf16.msra.mxu0 %v1822
  %1826 = vmatprep.subr.bf16.mxu0 0
  %1827 = vmatpush1.bf16.msra.mxu0 0
  %1828 = vmatprep.subr.bf16.mxu0 0
  %1829 = vmatpush1.bf16.msra.mxu0 0
  %1830 = vmatprep.subr.bf16.mxu0 0
  %1831 = vmatpush1.bf16.msra.mxu0 0
  %1832 = vmatprep.subr.bf16.mxu0 0
  %1833 = vmatpush1.bf16.msra.mxu0 0
  %1834 = vmatprep.subr.bf16.mxu0 0
  %1835 = vmatpush1.bf16.msra.mxu0 0
  %1836 = vmatprep.subr.bf16.mxu0 0
  %1837 = vmatpush1.bf16.msra.mxu0 0
  %1838 = vmatprep.subr.bf16.mxu0 0
  %1839 = vmatpush1.bf16.msra.mxu0 0
  %1840 = vmatprep.subr.bf16.mxu0 0
  %1841 = vmatpush1.bf16.msra.mxu0 0
  %1842 = vmatprep.subr.bf16.mxu0 0
  %1843 = vmatpush1.bf16.msra.mxu0 0
  %1844 = vmatprep.subr.bf16.mxu0 0
  %1845 = vmatpush1.bf16.msra.mxu0 0
  %1846 = vmatprep.subr.bf16.mxu0 0
  %1847 = vmatpush1.bf16.msra.mxu0 0
  %1848 = vmatprep.subr.bf16.mxu0 0
  %1849 = vmatpush1.bf16.msra.mxu0 0
  %1850 = vmatprep.subr.bf16.mxu0 0
  %1851 = vmatpush1.bf16.msra.mxu0 0
  %1852 = vmatprep.subr.bf16.mxu0 0
  %1853 = vmatpush1.bf16.msra.mxu0 0
  %1854 = vmatprep.subr.bf16.mxu0 0
  %1855 = vmatpush1.bf16.msra.mxu0 0
  %1856 = vmatprep.mubr.bf16.mxu0 0
  %1857 = vmatmul.mubr.bf16.gmra.mrb[0].mxu0 %v1819
  %v1858 = vpop.f32.mrb[0].mxu0
  %v1859 = vadd.f32 0.0, %v1858
  %v1860 = vpop.f32.mrb[0].mxu0
  %v1861 = vpop.f32.mrb[0].mxu0
  %v1862 = vpop.f32.mrb[0].mxu0
  %1863 = vdwg.mxu0
  %v1864 = vadd.f32 %v1815, %v1859
  %s1865 = scalar_lea.vmem %s5, 36
  %v1866 = vld [vmem:[%s1865] sm:$0x3]
  %v1868 = vsel %vm987, %v1866, 0
  %v1871 = vsel %vm991, %v977, 0
  %1873 = vmatprep.subr.bf16.mxu0 0
  %1874 = vmatpush1.bf16.msra.mxu0 %v1871
  %1875 = vmatprep.subr.bf16.mxu0 0
  %1876 = vmatpush1.bf16.msra.mxu0 0
  %1877 = vmatprep.subr.bf16.mxu0 0
  %1878 = vmatpush1.bf16.msra.mxu0 0
  %1879 = vmatprep.subr.bf16.mxu0 0
  %1880 = vmatpush1.bf16.msra.mxu0 0
  %1881 = vmatprep.subr.bf16.mxu0 0
  %1882 = vmatpush1.bf16.msra.mxu0 0
  %1883 = vmatprep.subr.bf16.mxu0 0
  %1884 = vmatpush1.bf16.msra.mxu0 0
  %1885 = vmatprep.subr.bf16.mxu0 0
  %1886 = vmatpush1.bf16.msra.mxu0 0
  %1887 = vmatprep.subr.bf16.mxu0 0
  %1888 = vmatpush1.bf16.msra.mxu0 0
  %1889 = vmatprep.subr.bf16.mxu0 0
  %1890 = vmatpush1.bf16.msra.mxu0 0
  %1891 = vmatprep.subr.bf16.mxu0 0
  %1892 = vmatpush1.bf16.msra.mxu0 0
  %1893 = vmatprep.subr.bf16.mxu0 0
  %1894 = vmatpush1.bf16.msra.mxu0 0
  %1895 = vmatprep.subr.bf16.mxu0 0
  %1896 = vmatpush1.bf16.msra.mxu0 0
  %1897 = vmatprep.subr.bf16.mxu0 0
  %1898 = vmatpush1.bf16.msra.mxu0 0
  %1899 = vmatprep.subr.bf16.mxu0 0
  %1900 = vmatpush1.bf16.msra.mxu0 0
  %1901 = vmatprep.subr.bf16.mxu0 0
  %1902 = vmatpush1.bf16.msra.mxu0 0
  %1903 = vmatprep.subr.bf16.mxu0 0
  %1904 = vmatpush1.bf16.msra.mxu0 0
  %1905 = vmatprep.mubr.bf16.mxu0 0
  %1906 = vmatmul.mubr.bf16.gmra.mrb[0].mxu0 %v1868
  %v1907 = vpop.f32.mrb[0].mxu0
  %v1908 = vadd.f32 0.0, %v1907
  %v1909 = vpop.f32.mrb[0].mxu0
  %v1910 = vpop.f32.mrb[0].mxu0
  %v1911 = vpop.f32.mrb[0].mxu0
  %1912 = vdwg.mxu0
  %v1913 = vadd.f32 %v1864, %v1908
  %s1914 = scalar_lea.vmem %s5, 38
  %v1915 = vld [vmem:[%s1914] sm:$0x3]
  %v1917 = vsel %vm987, %v1915, 0
  %v1920 = vsel %vm991, %v978, 0
  %1922 = vmatprep.subr.bf16.mxu0 0
  %1923 = vmatpush1.bf16.msra.mxu0 %v1920
  %1924 = vmatprep.subr.bf16.mxu0 0
  %1925 = vmatpush1.bf16.msra.mxu0 0
  %1926 = vmatprep.subr.bf16.mxu0 0
  %1927 = vmatpush1.bf16.msra.mxu0 0
  %1928 = vmatprep.subr.bf16.mxu0 0
  %1929 = vmatpush1.bf16.msra.mxu0 0
  %1930 = vmatprep.subr.bf16.mxu0 0
  %1931 = vmatpush1.bf16.msra.mxu0 0
  %1932 = vmatprep.subr.bf16.mxu0 0
  %1933 = vmatpush1.bf16.msra.mxu0 0
  %1934 = vmatprep.subr.bf16.mxu0 0
  %1935 = vmatpush1.bf16.msra.mxu0 0
  %1936 = vmatprep.subr.bf16.mxu0 0
  %1937 = vmatpush1.bf16.msra.mxu0 0
  %1938 = vmatprep.subr.bf16.mxu0 0
  %1939 = vmatpush1.bf16.msra.mxu0 0
  %1940 = vmatprep.subr.bf16.mxu0 0
  %1941 = vmatpush1.bf16.msra.mxu0 0
  %1942 = vmatprep.subr.bf16.mxu0 0
  %1943 = vmatpush1.bf16.msra.mxu0 0
  %1944 = vmatprep.subr.bf16.mxu0 0
  %1945 = vmatpush1.bf16.msra.mxu0 0
  %1946 = vmatprep.subr.bf16.mxu0 0
  %1947 = vmatpush1.bf16.msra.mxu0 0
  %1948 = vmatprep.subr.bf16.mxu0 0
  %1949 = vmatpush1.bf16.msra.mxu0 0
  %1950 = vmatprep.subr.bf16.mxu0 0
  %1951 = vmatpush1.bf16.msra.mxu0 0
  %1952 = vmatprep.subr.bf16.mxu0 0
  %1953 = vmatpush1.bf16.msra.mxu0 0
  %1954 = vmatprep.mubr.bf16.mxu0 0
  %1955 = vmatmul.mubr.bf16.gmra.mrb[0].mxu0 %v1917
  %v1956 = vpop.f32.mrb[0].mxu0
  %v1957 = vadd.f32 0.0, %v1956
  %v1958 = vpop.f32.mrb[0].mxu0
  %v1959 = vpop.f32.mrb[0].mxu0
  %v1960 = vpop.f32.mrb[0].mxu0
  %1961 = vdwg.mxu0
  %v1962 = vadd.f32 %v1913, %v1957
  %s1963 = scalar_lea.vmem %s5, 40
  %v1964 = vld [vmem:[%s1963] sm:$0x3]
  %v1966 = vsel %vm987, %v1964, 0
  %v1969 = vsel %vm991, %v979, 0
  %1971 = vmatprep.subr.bf16.mxu0 0
  %1972 = vmatpush1.bf16.msra.mxu0 %v1969
  %1973 = vmatprep.subr.bf16.mxu0 0
  %1974 = vmatpush1.bf16.msra.mxu0 0
  %1975 = vmatprep.subr.bf16.mxu0 0
  %1976 = vmatpush1.bf16.msra.mxu0 0
  %1977 = vmatprep.subr.bf16.mxu0 0
  %1978 = vmatpush1.bf16.msra.mxu0 0
  %1979 = vmatprep.subr.bf16.mxu0 0
  %1980 = vmatpush1.bf16.msra.mxu0 0
  %1981 = vmatprep.subr.bf16.mxu0 0
  %1982 = vmatpush1.bf16.msra.mxu0 0
  %1983 = vmatprep.subr.bf16.mxu0 0
  %1984 = vmatpush1.bf16.msra.mxu0 0
  %1985 = vmatprep.subr.bf16.mxu0 0
  %1986 = vmatpush1.bf16.msra.mxu0 0
  %1987 = vmatprep.subr.bf16.mxu0 0
  %1988 = vmatpush1.bf16.msra.mxu0 0
  %1989 = vmatprep.subr.bf16.mxu0 0
  %1990 = vmatpush1.bf16.msra.mxu0 0
  %1991 = vmatprep.subr.bf16.mxu0 0
  %1992 = vmatpush1.bf16.msra.mxu0 0
  %1993 = vmatprep.subr.bf16.mxu0 0
  %1994 = vmatpush1.bf16.msra.mxu0 0
  %1995 = vmatprep.subr.bf16.mxu0 0
  %1996 = vmatpush1.bf16.msra.mxu0 0
  %1997 = vmatprep.subr.bf16.mxu0 0
  %1998 = vmatpush1.bf16.msra.mxu0 0
  %1999 = vmatprep.subr.bf16.mxu0 0
  %2000 = vmatpush1.bf16.msra.mxu0 0
  %2001 = vmatprep.subr.bf16.mxu0 0
  %2002 = vmatpush1.bf16.msra.mxu0 0
  %2003 = vmatprep.mubr.bf16.mxu0 0
  %2004 = vmatmul.mubr.bf16.gmra.mrb[0].mxu0 %v1966
  %v2005 = vpop.f32.mrb[0].mxu0
  %v2006 = vadd.f32 0.0, %v2005
  %v2007 = vpop.f32.mrb[0].mxu0
  %v2008 = vpop.f32.mrb[0].mxu0
  %v2009 = vpop.f32.mrb[0].mxu0
  %2010 = vdwg.mxu0
  %v2011 = vadd.f32 %v1962, %v2006
  %s2012 = scalar_lea.vmem %s5, 42
  %v2013 = vld [vmem:[%s2012] sm:$0x3]
  %v2015 = vsel %vm987, %v2013, 0
  %v2018 = vsel %vm991, %v980, 0
  %2020 = vmatprep.subr.bf16.mxu0 0
  %2021 = vmatpush1.bf16.msra.mxu0 %v2018
  %2022 = vmatprep.subr.bf16.mxu0 0
  %2023 = vmatpush1.bf16.msra.mxu0 0
  %2024 = vmatprep.subr.bf16.mxu0 0
  %2025 = vmatpush1.bf16.msra.mxu0 0
  %2026 = vmatprep.subr.bf16.mxu0 0
  %2027 = vmatpush1.bf16.msra.mxu0 0
  %2028 = vmatprep.subr.bf16.mxu0 0
  %2029 = vmatpush1.bf16.msra.mxu0 0
  %2030 = vmatprep.subr.bf16.mxu0 0
  %2031 = vmatpush1.bf16.msra.mxu0 0
  %2032 = vmatprep.subr.bf16.mxu0 0
  %2033 = vmatpush1.bf16.msra.mxu0 0
  %2034 = vmatprep.subr.bf16.mxu0 0
  %2035 = vmatpush1.bf16.msra.mxu0 0
  %2036 = vmatprep.subr.bf16.mxu0 0
  %2037 = vmatpush1.bf16.msra.mxu0 0
  %2038 = vmatprep.subr.bf16.mxu0 0
  %2039 = vmatpush1.bf16.msra.mxu0 0
  %2040 = vmatprep.subr.bf16.mxu0 0
  %2041 = vmatpush1.bf16.msra.mxu0 0
  %2042 = vmatprep.subr.bf16.mxu0 0
  %2043 = vmatpush1.bf16.msra.mxu0 0
  %2044 = vmatprep.subr.bf16.mxu0 0
  %2045 = vmatpush1.bf16.msra.mxu0 0
  %2046 = vmatprep.subr.bf16.mxu0 0
  %2047 = vmatpush1.bf16.msra.mxu0 0
  %2048 = vmatprep.subr.bf16.mxu0 0
  %2049 = vmatpush1.bf16.msra.mxu0 0
  %2050 = vmatprep.subr.bf16.mxu0 0
  %2051 = vmatpush1.bf16.msra.mxu0 0
  %2052 = vmatprep.mubr.bf16.mxu0 0
  %2053 = vmatmul.mubr.bf16.gmra.mrb[0].mxu0 %v2015
  %v2054 = vpop.f32.mrb[0].mxu0
  %v2055 = vadd.f32 0.0, %v2054
  %v2056 = vpop.f32.mrb[0].mxu0
  %v2057 = vpop.f32.mrb[0].mxu0
  %v2058 = vpop.f32.mrb[0].mxu0
  %2059 = vdwg.mxu0
  %v2060 = vadd.f32 %v2011, %v2055
  %s2061 = scalar_lea.vmem %s5, 44
  %v2062 = vld [vmem:[%s2061] sm:$0x3]
  %v2064 = vsel %vm987, %v2062, 0
  %v2067 = vsel %vm991, %v981, 0
  %2069 = vmatprep.subr.bf16.mxu0 0
  %2070 = vmatpush1.bf16.msra.mxu0 %v2067
  %2071 = vmatprep.subr.bf16.mxu0 0
  %2072 = vmatpush1.bf16.msra.mxu0 0
  %2073 = vmatprep.subr.bf16.mxu0 0
  %2074 = vmatpush1.bf16.msra.mxu0 0
  %2075 = vmatprep.subr.bf16.mxu0 0
  %2076 = vmatpush1.bf16.msra.mxu0 0
  %2077 = vmatprep.subr.bf16.mxu0 0
  %2078 = vmatpush1.bf16.msra.mxu0 0
  %2079 = vmatprep.subr.bf16.mxu0 0
  %2080 = vmatpush1.bf16.msra.mxu0 0
  %2081 = vmatprep.subr.bf16.mxu0 0
  %2082 = vmatpush1.bf16.msra.mxu0 0
  %2083 = vmatprep.subr.bf16.mxu0 0
  %2084 = vmatpush1.bf16.msra.mxu0 0
  %2085 = vmatprep.subr.bf16.mxu0 0
  %2086 = vmatpush1.bf16.msra.mxu0 0
  %2087 = vmatprep.subr.bf16.mxu0 0
  %2088 = vmatpush1.bf16.msra.mxu0 0
  %2089 = vmatprep.subr.bf16.mxu0 0
  %2090 = vmatpush1.bf16.msra.mxu0 0
  %2091 = vmatprep.subr.bf16.mxu0 0
  %2092 = vmatpush1.bf16.msra.mxu0 0
  %2093 = vmatprep.subr.bf16.mxu0 0
  %2094 = vmatpush1.bf16.msra.mxu0 0
  %2095 = vmatprep.subr.bf16.mxu0 0
  %2096 = vmatpush1.bf16.msra.mxu0 0
  %2097 = vmatprep.subr.bf16.mxu0 0
  %2098 = vmatpush1.bf16.msra.mxu0 0
  %2099 = vmatprep.subr.bf16.mxu0 0
  %2100 = vmatpush1.bf16.msra.mxu0 0
  %2101 = vmatprep.mubr.bf16.mxu0 0
  %2102 = vmatmul.mubr.bf16.gmra.mrb[0].mxu0 %v2064
  %v2103 = vpop.f32.mrb[0].mxu0
  %v2104 = vadd.f32 0.0, %v2103
  %v2105 = vpop.f32.mrb[0].mxu0
  %v2106 = vpop.f32.mrb[0].mxu0
  %v2107 = vpop.f32.mrb[0].mxu0
  %2108 = vdwg.mxu0
  %v2109 = vadd.f32 %v2060, %v2104
  %s2110 = scalar_lea.vmem %s5, 46
  %v2111 = vld [vmem:[%s2110] sm:$0x3]
  %v2113 = vsel %vm987, %v2111, 0
  %v2116 = vsel %vm991, %v982, 0
  %2118 = vmatprep.subr.bf16.mxu0 0
  %2119 = vmatpush1.bf16.msra.mxu0 %v2116
  %2120 = vmatprep.subr.bf16.mxu0 0
  %2121 = vmatpush1.bf16.msra.mxu0 0
  %2122 = vmatprep.subr.bf16.mxu0 0
  %2123 = vmatpush1.bf16.msra.mxu0 0
  %2124 = vmatprep.subr.bf16.mxu0 0
  %2125 = vmatpush1.bf16.msra.mxu0 0
  %2126 = vmatprep.subr.bf16.mxu0 0
  %2127 = vmatpush1.bf16.msra.mxu0 0
  %2128 = vmatprep.subr.bf16.mxu0 0
  %2129 = vmatpush1.bf16.msra.mxu0 0
  %2130 = vmatprep.subr.bf16.mxu0 0
  %2131 = vmatpush1.bf16.msra.mxu0 0
  %2132 = vmatprep.subr.bf16.mxu0 0
  %2133 = vmatpush1.bf16.msra.mxu0 0
  %2134 = vmatprep.subr.bf16.mxu0 0
  %2135 = vmatpush1.bf16.msra.mxu0 0
  %2136 = vmatprep.subr.bf16.mxu0 0
  %2137 = vmatpush1.bf16.msra.mxu0 0
  %2138 = vmatprep.subr.bf16.mxu0 0
  %2139 = vmatpush1.bf16.msra.mxu0 0
  %2140 = vmatprep.subr.bf16.mxu0 0
  %2141 = vmatpush1.bf16.msra.mxu0 0
  %2142 = vmatprep.subr.bf16.mxu0 0
  %2143 = vmatpush1.bf16.msra.mxu0 0
  %2144 = vmatprep.subr.bf16.mxu0 0
  %2145 = vmatpush1.bf16.msra.mxu0 0
  %2146 = vmatprep.subr.bf16.mxu0 0
  %2147 = vmatpush1.bf16.msra.mxu0 0
  %2148 = vmatprep.subr.bf16.mxu0 0
  %2149 = vmatpush1.bf16.msra.mxu0 0
  %2150 = vmatprep.mubr.bf16.mxu0 0
  %2151 = vmatmul.mubr.bf16.gmra.mrb[0].mxu0 %v2113
  %v2152 = vpop.f32.mrb[0].mxu0
  %v2153 = vadd.f32 0.0, %v2152
  %v2154 = vpop.f32.mrb[0].mxu0
  %v2155 = vpop.f32.mrb[0].mxu0
  %v2156 = vpop.f32.mrb[0].mxu0
  %2157 = vdwg.mxu0
  %v2158 = vadd.f32 %v2109, %v2153
  %s2159 = scalar_lea.vmem %s5, 48
  %v2160 = vld [vmem:[%s2159] sm:$0x3]
  %v2162 = vsel %vm987, %v2160, 0
  %v2165 = vsel %vm991, %v983, 0
  %2167 = vmatprep.subr.bf16.mxu0 0
  %2168 = vmatpush1.bf16.msra.mxu0 %v2165
  %2169 = vmatprep.subr.bf16.mxu0 0
  %2170 = vmatpush1.bf16.msra.mxu0 0
  %2171 = vmatprep.subr.bf16.mxu0 0
  %2172 = vmatpush1.bf16.msra.mxu0 0
  %2173 = vmatprep.subr.bf16.mxu0 0
  %2174 = vmatpush1.bf16.msra.mxu0 0
  %2175 = vmatprep.subr.bf16.mxu0 0
  %2176 = vmatpush1.bf16.msra.mxu0 0
  %2177 = vmatprep.subr.bf16.mxu0 0
  %2178 = vmatpush1.bf16.msra.mxu0 0
  %2179 = vmatprep.subr.bf16.mxu0 0
  %2180 = vmatpush1.bf16.msra.mxu0 0
  %2181 = vmatprep.subr.bf16.mxu0 0
  %2182 = vmatpush1.bf16.msra.mxu0 0
  %2183 = vmatprep.subr.bf16.mxu0 0
  %2184 = vmatpush1.bf16.msra.mxu0 0
  %2185 = vmatprep.subr.bf16.mxu0 0
  %2186 = vmatpush1.bf16.msra.mxu0 0
  %2187 = vmatprep.subr.bf16.mxu0 0
  %2188 = vmatpush1.bf16.msra.mxu0 0
  %2189 = vmatprep.subr.bf16.mxu0 0
  %2190 = vmatpush1.bf16.msra.mxu0 0
  %2191 = vmatprep.subr.bf16.mxu0 0
  %2192 = vmatpush1.bf16.msra.mxu0 0
  %2193 = vmatprep.subr.bf16.mxu0 0
  %2194 = vmatpush1.bf16.msra.mxu0 0
  %2195 = vmatprep.subr.bf16.mxu0 0
  %2196 = vmatpush1.bf16.msra.mxu0 0
  %2197 = vmatprep.subr.bf16.mxu0 0
  %2198 = vmatpush1.bf16.msra.mxu0 0
  %2199 = vmatprep.mubr.bf16.mxu0 0
  %2200 = vmatmul.mubr.bf16.gmra.mrb[0].mxu0 %v2162
  %v2201 = vpop.f32.mrb[0].mxu0
  %v2202 = vadd.f32 0.0, %v2201
  %v2203 = vpop.f32.mrb[0].mxu0
  %v2204 = vpop.f32.mrb[0].mxu0
  %v2205 = vpop.f32.mrb[0].mxu0
  %2206 = vdwg.mxu0
  %v2207 = vadd.f32 %v2158, %v2202
  %vm2208 = vcmp.ge.f32.partialorder %v2207, 0.0
  %v2209 = vmul.f32 %v2207, 0.2
  %v2210 = vsel %vm2208, %v2207, %v2209
  %v2211 = vld [vmem:[%s6] sm:$0x3]
  %v2212 = vld [vmem:[%s3] sm:$0xf]
  %v2213 = vld [vmem:[%s3 + $0x4] sm:$0xf]
  %v2214 = vld [vmem:[%s3 + $0x8] sm:$0xf]
  %v2215 = vld [vmem:[%s3 + $0xc] sm:$0x1]
  %v2220 = vunpack.c.l.b16 %v2212
  %v2221 = vunpack.c.l.b16 %v2213
  %v2222 = vunpack.c.l.b16 %v2214
  %v2223 = vunpack.c.l.b16 %v2215
  %v2224 = vpack.c.b16 %v2221, %v2220
  %v2225 = vpack.c.b16 %v2223, %v2222
  %v2228 = vsel %vm344, %v2211, 0
  %v2231 = vand.u32 %v2225, %v351
  %2233 = vmatprep.subr.bf16.mxu0 0
  %2234 = vmatpush1.bf16.msra.mxu0 %v2224
  %2235 = vmatprep.subr.bf16.mxu0 0
  %2236 = vmatpush1.bf16.msra.mxu0 %v2231
  %2237 = vmatprep.subr.bf16.mxu0 0
  %2238 = vmatpush1.bf16.msra.mxu0 0
  %2239 = vmatprep.subr.bf16.mxu0 0
  %2240 = vmatpush1.bf16.msra.mxu0 0
  %2241 = vmatprep.subr.bf16.mxu0 0
  %2242 = vmatpush1.bf16.msra.mxu0 0
  %2243 = vmatprep.subr.bf16.mxu0 0
  %2244 = vmatpush1.bf16.msra.mxu0 0
  %2245 = vmatprep.subr.bf16.mxu0 0
  %2246 = vmatpush1.bf16.msra.mxu0 0
  %2247 = vmatprep.subr.bf16.mxu0 0
  %2248 = vmatpush1.bf16.msra.mxu0 0
  %2249 = vmatprep.subr.bf16.mxu0 0
  %2250 = vmatpush1.bf16.msra.mxu0 0
  %2251 = vmatprep.subr.bf16.mxu0 0
  %2252 = vmatpush1.bf16.msra.mxu0 0
  %2253 = vmatprep.subr.bf16.mxu0 0
  %2254 = vmatpush1.bf16.msra.mxu0 0
  %2255 = vmatprep.subr.bf16.mxu0 0
  %2256 = vmatpush1.bf16.msra.mxu0 0
  %2257 = vmatprep.subr.bf16.mxu0 0
  %2258 = vmatpush1.bf16.msra.mxu0 0
  %2259 = vmatprep.subr.bf16.mxu0 0
  %2260 = vmatpush1.bf16.msra.mxu0 0
  %2261 = vmatprep.subr.bf16.mxu0 0
  %2262 = vmatpush1.bf16.msra.mxu0 0
  %2263 = vmatprep.subr.bf16.mxu0 0
  %2264 = vmatpush1.bf16.msra.mxu0 0
  %2265 = vmatprep.mubr.bf16.mxu0 0
  %2266 = vmatmul.mubr.bf16.gmra.mrb[0].mxu0 %v2228
  %v2267 = vpop.f32.mrb[0].mxu0
  %v2268 = vadd.f32 0.0, %v2267
  %v2269 = vpop.f32.mrb[0].mxu0
  %v2270 = vpop.f32.mrb[0].mxu0
  %v2271 = vpop.f32.mrb[0].mxu0
  %2272 = vdwg.mxu0
  %v2273 = vstv %s63
  %v2274 = vmul.f32 %v2273, %v2210
  %s2275 = ssub.f32 1.0, %s63
  %v2276 = vstv %s2275
  %v2277 = vmul.f32 %v2276, %v2268
  %v2278 = vadd.f32 %v2274, %v2277
  %v2279 = vld [vmem:[%s1] sm:$0x3]
  %v2280 = vpack.c.bf16 %v2279, %v2279
  %v2281 = vld [vmem:[%s8] sm:$0xff]
  %v2282 = vld [vmem:[%s8 + $0x8] sm:$0xff]
  %v2283 = vld [vmem:[%s9] sm:$0xf]
  %v2285 = vlaneseq
  %v2286 = vshrl.u32 %v2285, 7
  %v2287 = vsub.s32 0, %v2286
  %v2288 = vrot.slane %v2283, %v2287
  %v2289 = vlaneseq
  %v2290 = vshrl.u32 %v2289, 7
  %v2291 = vsub.s32 1, %v2290
  %v2292 = vrot.slane %v2283, %v2291
  %v2293 = vlaneseq
  %v2294 = vshrl.u32 %v2293, 7
  %v2295 = vsub.s32 2, %v2294
  %v2296 = vrot.slane %v2283, %v2295
  %v2297 = vlaneseq
  %v2298 = vshrl.u32 %v2297, 7
  %v2299 = vsub.s32 3, %v2298
  %v2300 = vrot.slane %v2283, %v2299
  %v2307 = vunpack.c.l.b16 %v2281
  %v2308 = vunpack.c.h.b16 %v2281
  %v2309 = vunpack.c.l.b16 %v2282
  %v2310 = vunpack.c.h.b16 %v2282
  %v2311 = vpack.c.b16 %v2307, %v2307
  %v2312 = vpack.c.b16 %v2308, %v2308
  %v2313 = vpack.c.b16 %v2309, %v2309
  %v2314 = vpack.c.b16 %v2310, %v2310
  %vm2315 = vcmask 64512
  %v2317 = vsel %vm2315, %v2280, 0
  %v2320 = vsel %vm348, %v2311, 0
  %v2323 = vsel %vm348, %v2312, 0
  %v2326 = vsel %vm348, %v2313, 0
  %v2329 = vsel %vm348, %v2314, 0
  %2331 = vmatprep.subr.bf16.mxu0 %v2323
  %2332 = vmatpush1.bf16.msra.mxu0 %v2320
  %2333 = vmatprep.subr.bf16.mxu0 0
  %2334 = vmatpush1.bf16.msra.mxu0 0
  %2335 = vmatprep.subr.bf16.mxu0 0
  %2336 = vmatpush1.bf16.msra.mxu0 0
  %2337 = vmatprep.subr.bf16.mxu0 0
  %2338 = vmatpush1.bf16.msra.mxu0 0
  %2339 = vmatprep.subr.bf16.mxu0 0
  %2340 = vmatpush1.bf16.msra.mxu0 0
  %2341 = vmatprep.subr.bf16.mxu0 0
  %2342 = vmatpush1.bf16.msra.mxu0 0
  %2343 = vmatprep.subr.bf16.mxu0 0
  %2344 = vmatpush1.bf16.msra.mxu0 0
  %2345 = vmatprep.subr.bf16.mxu0 0
  %2346 = vmatpush1.bf16.msra.mxu0 0
  %2347 = vmatprep.subr.bf16.mxu0 0
  %2348 = vmatpush1.bf16.msra.mxu0 0
  %2349 = vmatprep.subr.bf16.mxu0 0
  %2350 = vmatpush1.bf16.msra.mxu0 0
  %2351 = vmatprep.subr.bf16.mxu0 0
  %2352 = vmatpush1.bf16.msra.mxu0 0
  %2353 = vmatprep.subr.bf16.mxu0 0
  %2354 = vmatpush1.bf16.msra.mxu0 0
  %2355 = vmatprep.subr.bf16.mxu0 0
  %2356 = vmatpush1.bf16.msra.mxu0 0
  %2357 = vmatprep.subr.bf16.mxu0 0
  %2358 = vmatpush1.bf16.msra.mxu0 0
  %2359 = vmatprep.subr.bf16.mxu0 0
  %2360 = vmatpush1.bf16.msra.mxu0 0
  %2361 = vmatprep.subr.bf16.mxu0 0
  %2362 = vmatpush1.bf16.msra.mxu0 0
  %2363 = vmatprep.mubr.bf16.mxu0 0
  %2364 = vmatmul.mubr.bf16.gmra.mrb[0].mxu0 %v2317
  %v2365 = vpop.f32.mrb[0].mxu0
  %v2366 = vadd.f32 %v2288, %v2365
  %v2367 = vpop.f32.mrb[0].mxu0
  %v2368 = vadd.f32 %v2292, %v2367
  %v2369 = vpop.f32.mrb[0].mxu0
  %v2370 = vpop.f32.mrb[0].mxu0
  %2371 = vdwg.mxu0
  %2372 = vmatprep.subr.bf16.mxu0 %v2329
  %2373 = vmatpush1.bf16.msra.mxu0 %v2326
  %2374 = vmatprep.subr.bf16.mxu0 0
  %2375 = vmatpush1.bf16.msra.mxu0 0
  %2376 = vmatprep.subr.bf16.mxu0 0
  %2377 = vmatpush1.bf16.msra.mxu0 0
  %2378 = vmatprep.subr.bf16.mxu0 0
  %2379 = vmatpush1.bf16.msra.mxu0 0
  %2380 = vmatprep.subr.bf16.mxu0 0
  %2381 = vmatpush1.bf16.msra.mxu0 0
  %2382 = vmatprep.subr.bf16.mxu0 0
  %2383 = vmatpush1.bf16.msra.mxu0 0
  %2384 = vmatprep.subr.bf16.mxu0 0
  %2385 = vmatpush1.bf16.msra.mxu0 0
  %2386 = vmatprep.subr.bf16.mxu0 0
  %2387 = vmatpush1.bf16.msra.mxu0 0
  %2388 = vmatprep.subr.bf16.mxu0 0
  %2389 = vmatpush1.bf16.msra.mxu0 0
  %2390 = vmatprep.subr.bf16.mxu0 0
  %2391 = vmatpush1.bf16.msra.mxu0 0
  %2392 = vmatprep.subr.bf16.mxu0 0
  %2393 = vmatpush1.bf16.msra.mxu0 0
  %2394 = vmatprep.subr.bf16.mxu0 0
  %2395 = vmatpush1.bf16.msra.mxu0 0
  %2396 = vmatprep.subr.bf16.mxu0 0
  %2397 = vmatpush1.bf16.msra.mxu0 0
  %2398 = vmatprep.subr.bf16.mxu0 0
  %2399 = vmatpush1.bf16.msra.mxu0 0
  %2400 = vmatprep.subr.bf16.mxu0 0
  %2401 = vmatpush1.bf16.msra.mxu0 0
  %2402 = vmatprep.subr.bf16.mxu0 0
  %2403 = vmatpush1.bf16.msra.mxu0 0
  %2404 = vmatprep.mubr.bf16.mxu0 0
  %2405 = vmatmul.mubr.bf16.gmra.mrb[0].mxu0 %v2317
  %v2406 = vpop.f32.mrb[0].mxu0
  %v2407 = vadd.f32 %v2296, %v2406
  %v2408 = vpop.f32.mrb[0].mxu0
  %v2409 = vadd.f32 %v2300, %v2408
  %v2410 = vpop.f32.mrb[0].mxu0
  %v2411 = vpop.f32.mrb[0].mxu0
  %2412 = vdwg.mxu0
  %v2414 = vrot.slane %v2278, 7
  %2415 = vrot.lane.b32.xlu0 %v2414, 64
  %v2416 = vpop.permute.xlu0 %2415
  %vm2418 = vcmask 1040384
  %v2419 = vsel %vm2418, %v2278, %v2416
  %v2420 = vpack.c.bf16 %v2419, %v2419
  %v2421 = vld [vmem:[%s7] sm:$0xff]
  %v2422 = vld [vmem:[%s7 + $0x8] sm:$0xff]
  %v2423 = vld [vmem:[%s7 + $0x10] sm:$0xff]
  %v2424 = vld [vmem:[%s7 + $0x18] sm:$0xff]
  %v2425 = vld [vmem:[%s7 + $0x20] sm:$0xff]
  %v2426 = vld [vmem:[%s7 + $0x28] sm:$0xff]
  %v2427 = vld [vmem:[%s7 + $0x30] sm:$0xff]
  %v2428 = vld [vmem:[%s7 + $0x38] sm:$0xff]
  %v2429 = vld [vmem:[%s7 + $0x40] sm:$0xff]
  %v2430 = vld [vmem:[%s7 + $0x48] sm:$0xff]
  %v2431 = vld [vmem:[%s7 + $0x50] sm:$0xff]
  %v2432 = vld [vmem:[%s7 + $0x58] sm:$0xff]
  %v2433 = vld [vmem:[%s7 + $0x60] sm:$0xff]
  %v2434 = vld [vmem:[%s7 + $0x68] sm:$0xff]
  %v2435 = vld [vmem:[%s7 + $0x70] sm:$0xff]
  %v2436 = vld [vmem:[%s7 + $0x78] sm:$0xff]
  %v2453 = vunpack.c.l.b16 %v2421
  %v2454 = vunpack.c.h.b16 %v2421
  %v2455 = vunpack.c.l.b16 %v2422
  %v2456 = vunpack.c.h.b16 %v2422
  %v2457 = vunpack.c.l.b16 %v2423
  %v2458 = vunpack.c.h.b16 %v2423
  %v2459 = vunpack.c.l.b16 %v2424
  %v2460 = vunpack.c.h.b16 %v2424
  %v2461 = vunpack.c.l.b16 %v2425
  %v2462 = vunpack.c.h.b16 %v2425
  %v2463 = vunpack.c.l.b16 %v2426
  %v2464 = vunpack.c.h.b16 %v2426
  %v2465 = vunpack.c.l.b16 %v2427
  %v2466 = vunpack.c.h.b16 %v2427
  %v2467 = vunpack.c.l.b16 %v2428
  %v2468 = vunpack.c.h.b16 %v2428
  %v2469 = vunpack.c.l.b16 %v2429
  %v2470 = vunpack.c.h.b16 %v2429
  %v2471 = vunpack.c.l.b16 %v2430
  %v2472 = vunpack.c.h.b16 %v2430
  %v2473 = vunpack.c.l.b16 %v2431
  %v2474 = vunpack.c.h.b16 %v2431
  %v2475 = vunpack.c.l.b16 %v2432
  %v2476 = vunpack.c.h.b16 %v2432
  %v2477 = vunpack.c.l.b16 %v2433
  %v2478 = vunpack.c.h.b16 %v2433
  %v2479 = vunpack.c.l.b16 %v2434
  %v2480 = vunpack.c.h.b16 %v2434
  %v2481 = vunpack.c.l.b16 %v2435
  %v2482 = vunpack.c.h.b16 %v2435
  %v2483 = vunpack.c.l.b16 %v2436
  %v2484 = vunpack.c.h.b16 %v2436
  %v2485 = vpack.c.b16 %v2457, %v2453
  %v2486 = vpack.c.b16 %v2458, %v2454
  %v2487 = vpack.c.b16 %v2459, %v2455
  %v2488 = vpack.c.b16 %v2460, %v2456
  %v2489 = vpack.c.b16 %v2465, %v2461
  %v2490 = vpack.c.b16 %v2466, %v2462
  %v2491 = vpack.c.b16 %v2467, %v2463
  %v2492 = vpack.c.b16 %v2468, %v2464
  %v2493 = vpack.c.b16 %v2473, %v2469
  %v2494 = vpack.c.b16 %v2474, %v2470
  %v2495 = vpack.c.b16 %v2475, %v2471
  %v2496 = vpack.c.b16 %v2476, %v2472
  %v2497 = vpack.c.b16 %v2481, %v2477
  %v2498 = vpack.c.b16 %v2482, %v2478
  %v2499 = vpack.c.b16 %v2483, %v2479
  %v2500 = vpack.c.b16 %v2484, %v2480
  %vm2517 = vcmask 523264
  %v2519 = vsel %vm2517, %v2420, 0
  %2521 = vmatprep.subr.bf16.mxu0 %v2486
  %2522 = vmatpush1.bf16.msra.mxu0 %v2485
  %2523 = vmatprep.subr.bf16.mxu0 %v2490
  %2524 = vmatpush1.bf16.msra.mxu0 %v2489
  %2525 = vmatprep.subr.bf16.mxu0 %v2494
  %2526 = vmatpush1.bf16.msra.mxu0 %v2493
  %2527 = vmatprep.subr.bf16.mxu0 %v2498
  %2528 = vmatpush1.bf16.msra.mxu0 %v2497
  %2529 = vmatprep.subr.bf16.mxu0 0
  %2530 = vmatpush1.bf16.msra.mxu0 0
  %2531 = vmatprep.subr.bf16.mxu0 0
  %2532 = vmatpush1.bf16.msra.mxu0 0
  %2533 = vmatprep.subr.bf16.mxu0 0
  %2534 = vmatpush1.bf16.msra.mxu0 0
  %2535 = vmatprep.subr.bf16.mxu0 0
  %2536 = vmatpush1.bf16.msra.mxu0 0
  %2537 = vmatprep.subr.bf16.mxu0 0
  %2538 = vmatpush1.bf16.msra.mxu0 0
  %2539 = vmatprep.subr.bf16.mxu0 0
  %2540 = vmatpush1.bf16.msra.mxu0 0
  %2541 = vmatprep.subr.bf16.mxu0 0
  %2542 = vmatpush1.bf16.msra.mxu0 0
  %2543 = vmatprep.subr.bf16.mxu0 0
  %2544 = vmatpush1.bf16.msra.mxu0 0
  %2545 = vmatprep.subr.bf16.mxu0 0
  %2546 = vmatpush1.bf16.msra.mxu0 0
  %2547 = vmatprep.subr.bf16.mxu0 0
  %2548 = vmatpush1.bf16.msra.mxu0 0
  %2549 = vmatprep.subr.bf16.mxu0 0
  %2550 = vmatpush1.bf16.msra.mxu0 0
  %2551 = vmatprep.subr.bf16.mxu0 0
  %2552 = vmatpush1.bf16.msra.mxu0 0
  %2553 = vmatprep.mubr.bf16.mxu0 0
  %2554 = vmatmul.mubr.bf16.gmra.mrb[0].mxu0 %v2519
  %v2555 = vpop.f32.mrb[0].mxu0
  %v2556 = vadd.f32 0.0, %v2555
  %v2557 = vpop.f32.mrb[0].mxu0
  %v2558 = vadd.f32 0.0, %v2557
  %v2559 = vpop.f32.mrb[0].mxu0
  %v2560 = vpop.f32.mrb[0].mxu0
  %2561 = vdwg.mxu0
  %2562 = vmatprep.subr.bf16.mxu0 %v2488
  %2563 = vmatpush1.bf16.msra.mxu0 %v2487
  %2564 = vmatprep.subr.bf16.mxu0 %v2492
  %2565 = vmatpush1.bf16.msra.mxu0 %v2491
  %2566 = vmatprep.subr.bf16.mxu0 %v2496
  %2567 = vmatpush1.bf16.msra.mxu0 %v2495
  %2568 = vmatprep.subr.bf16.mxu0 %v2500
  %2569 = vmatpush1.bf16.msra.mxu0 %v2499
  %2570 = vmatprep.subr.bf16.mxu0 0
  %2571 = vmatpush1.bf16.msra.mxu0 0
  %2572 = vmatprep.subr.bf16.mxu0 0
  %2573 = vmatpush1.bf16.msra.mxu0 0
  %2574 = vmatprep.subr.bf16.mxu0 0
  %2575 = vmatpush1.bf16.msra.mxu0 0
  %2576 = vmatprep.subr.bf16.mxu0 0
  %2577 = vmatpush1.bf16.msra.mxu0 0
  %2578 = vmatprep.subr.bf16.mxu0 0
  %2579 = vmatpush1.bf16.msra.mxu0 0
  %2580 = vmatprep.subr.bf16.mxu0 0
  %2581 = vmatpush1.bf16.msra.mxu0 0
  %2582 = vmatprep.subr.bf16.mxu0 0
  %2583 = vmatpush1.bf16.msra.mxu0 0
  %2584 = vmatprep.subr.bf16.mxu0 0
  %2585 = vmatpush1.bf16.msra.mxu0 0
  %2586 = vmatprep.subr.bf16.mxu0 0
  %2587 = vmatpush1.bf16.msra.mxu0 0
  %2588 = vmatprep.subr.bf16.mxu0 0
  %2589 = vmatpush1.bf16.msra.mxu0 0
  %2590 = vmatprep.subr.bf16.mxu0 0
  %2591 = vmatpush1.bf16.msra.mxu0 0
  %2592 = vmatprep.subr.bf16.mxu0 0
  %2593 = vmatpush1.bf16.msra.mxu0 0
  %2594 = vmatprep.mubr.bf16.mxu0 0
  %2595 = vmatmul.mubr.bf16.gmra.mrb[0].mxu0 %v2519
  %v2596 = vpop.f32.mrb[0].mxu0
  %v2597 = vadd.f32 0.0, %v2596
  %v2598 = vpop.f32.mrb[0].mxu0
  %v2599 = vadd.f32 0.0, %v2598
  %v2600 = vpop.f32.mrb[0].mxu0
  %v2601 = vpop.f32.mrb[0].mxu0
  %2602 = vdwg.mxu0
  %v2603 = vadd.f32 %v2366, %v2556
  %v2604 = vadd.f32 %v2368, %v2558
  %v2605 = vadd.f32 %v2407, %v2597
  %v2606 = vadd.f32 %v2409, %v2599
  %v2607 = vrot.slane %v2278, 1
  %2609 = vrot.lane.b32.xlu0 %v2278, 64
  %v2610 = vpop.permute.xlu0 %2609
  %v2612 = vsel %vm2418, %v2607, %v2610
  %v2613 = vpack.c.bf16 %v2612, %v2612
  %v2614 = vld [vmem:[%s7 + $0x80] sm:$0xff]
  %v2615 = vld [vmem:[%s7 + $0x88] sm:$0xff]
  %v2616 = vld [vmem:[%s7 + $0x90] sm:$0xff]
  %v2617 = vld [vmem:[%s7 + $0x98] sm:$0xff]
  %v2618 = vld [vmem:[%s7 + $0xa0] sm:$0xff]
  %v2619 = vld [vmem:[%s7 + $0xa8] sm:$0xff]
  %v2620 = vld [vmem:[%s7 + $0xb0] sm:$0xff]
  %v2621 = vld [vmem:[%s7 + $0xb8] sm:$0xff]
  %v2622 = vld [vmem:[%s7 + $0xc0] sm:$0xff]
  %v2623 = vld [vmem:[%s7 + $0xc8] sm:$0xff]
  %v2624 = vld [vmem:[%s7 + $0xd0] sm:$0xff]
  %v2625 = vld [vmem:[%s7 + $0xd8] sm:$0xff]
  %v2626 = vld [vmem:[%s7 + $0xe0] sm:$0xff]
  %v2627 = vld [vmem:[%s7 + $0xe8] sm:$0xff]
  %v2628 = vld [vmem:[%s7 + $0xf0] sm:$0xff]
  %v2629 = vld [vmem:[%s7 + $0xf8] sm:$0xff]
  %v2646 = vunpack.c.l.b16 %v2614
  %v2647 = vunpack.c.h.b16 %v2614
  %v2648 = vunpack.c.l.b16 %v2615
  %v2649 = vunpack.c.h.b16 %v2615
  %v2650 = vunpack.c.l.b16 %v2616
  %v2651 = vunpack.c.h.b16 %v2616
  %v2652 = vunpack.c.l.b16 %v2617
  %v2653 = vunpack.c.h.b16 %v2617
  %v2654 = vunpack.c.l.b16 %v2618
  %v2655 = vunpack.c.h.b16 %v2618
  %v2656 = vunpack.c.l.b16 %v2619
  %v2657 = vunpack.c.h.b16 %v2619
  %v2658 = vunpack.c.l.b16 %v2620
  %v2659 = vunpack.c.h.b16 %v2620
  %v2660 = vunpack.c.l.b16 %v2621
  %v2661 = vunpack.c.h.b16 %v2621
  %v2662 = vunpack.c.l.b16 %v2622
  %v2663 = vunpack.c.h.b16 %v2622
  %v2664 = vunpack.c.l.b16 %v2623
  %v2665 = vunpack.c.h.b16 %v2623
  %v2666 = vunpack.c.l.b16 %v2624
  %v2667 = vunpack.c.h.b16 %v2624
  %v2668 = vunpack.c.l.b16 %v2625
  %v2669 = vunpack.c.h.b16 %v2625
  %v2670 = vunpack.c.l.b16 %v2626
  %v2671 = vunpack.c.h.b16 %v2626
  %v2672 = vunpack.c.l.b16 %v2627
  %v2673 = vunpack.c.h.b16 %v2627
  %v2674 = vunpack.c.l.b16 %v2628
  %v2675 = vunpack.c.h.b16 %v2628
  %v2676 = vunpack.c.l.b16 %v2629
  %v2677 = vunpack.c.h.b16 %v2629
  %v2678 = vpack.c.b16 %v2650, %v2646
  %v2679 = vpack.c.b16 %v2651, %v2647
  %v2680 = vpack.c.b16 %v2652, %v2648
  %v2681 = vpack.c.b16 %v2653, %v2649
  %v2682 = vpack.c.b16 %v2658, %v2654
  %v2683 = vpack.c.b16 %v2659, %v2655
  %v2684 = vpack.c.b16 %v2660, %v2656
  %v2685 = vpack.c.b16 %v2661, %v2657
  %v2686 = vpack.c.b16 %v2666, %v2662
  %v2687 = vpack.c.b16 %v2667, %v2663
  %v2688 = vpack.c.b16 %v2668, %v2664
  %v2689 = vpack.c.b16 %v2669, %v2665
  %v2690 = vpack.c.b16 %v2674, %v2670
  %v2691 = vpack.c.b16 %v2675, %v2671
  %v2692 = vpack.c.b16 %v2676, %v2672
  %v2693 = vpack.c.b16 %v2677, %v2673
  %v2711 = vsel %vm2517, %v2613, 0
  %2713 = vmatprep.subr.bf16.mxu0 %v2679
  %2714 = vmatpush1.bf16.msra.mxu0 %v2678
  %2715 = vmatprep.subr.bf16.mxu0 %v2683
  %2716 = vmatpush1.bf16.msra.mxu0 %v2682
  %2717 = vmatprep.subr.bf16.mxu0 %v2687
  %2718 = vmatpush1.bf16.msra.mxu0 %v2686
  %2719 = vmatprep.subr.bf16.mxu0 %v2691
  %2720 = vmatpush1.bf16.msra.mxu0 %v2690
  %2721 = vmatprep.subr.bf16.mxu0 0
  %2722 = vmatpush1.bf16.msra.mxu0 0
  %2723 = vmatprep.subr.bf16.mxu0 0
  %2724 = vmatpush1.bf16.msra.mxu0 0
  %2725 = vmatprep.subr.bf16.mxu0 0
  %2726 = vmatpush1.bf16.msra.mxu0 0
  %2727 = vmatprep.subr.bf16.mxu0 0
  %2728 = vmatpush1.bf16.msra.mxu0 0
  %2729 = vmatprep.subr.bf16.mxu0 0
  %2730 = vmatpush1.bf16.msra.mxu0 0
  %2731 = vmatprep.subr.bf16.mxu0 0
  %2732 = vmatpush1.bf16.msra.mxu0 0
  %2733 = vmatprep.subr.bf16.mxu0 0
  %2734 = vmatpush1.bf16.msra.mxu0 0
  %2735 = vmatprep.subr.bf16.mxu0 0
  %2736 = vmatpush1.bf16.msra.mxu0 0
  %2737 = vmatprep.subr.bf16.mxu0 0
  %2738 = vmatpush1.bf16.msra.mxu0 0
  %2739 = vmatprep.subr.bf16.mxu0 0
  %2740 = vmatpush1.bf16.msra.mxu0 0
  %2741 = vmatprep.subr.bf16.mxu0 0
  %2742 = vmatpush1.bf16.msra.mxu0 0
  %2743 = vmatprep.subr.bf16.mxu0 0
  %2744 = vmatpush1.bf16.msra.mxu0 0
  %2745 = vmatprep.mubr.bf16.mxu0 0
  %2746 = vmatmul.mubr.bf16.gmra.mrb[0].mxu0 %v2711
  %v2747 = vpop.f32.mrb[0].mxu0
  %v2748 = vadd.f32 0.0, %v2747
  %v2749 = vpop.f32.mrb[0].mxu0
  %v2750 = vadd.f32 0.0, %v2749
  %v2751 = vpop.f32.mrb[0].mxu0
  %v2752 = vpop.f32.mrb[0].mxu0
  %2753 = vdwg.mxu0
  %2754 = vmatprep.subr.bf16.mxu0 %v2681
  %2755 = vmatpush1.bf16.msra.mxu0 %v2680
  %2756 = vmatprep.subr.bf16.mxu0 %v2685
  %2757 = vmatpush1.bf16.msra.mxu0 %v2684
  %2758 = vmatprep.subr.bf16.mxu0 %v2689
  %2759 = vmatpush1.bf16.msra.mxu0 %v2688
  %2760 = vmatprep.subr.bf16.mxu0 %v2693
  %2761 = vmatpush1.bf16.msra.mxu0 %v2692
  %2762 = vmatprep.subr.bf16.mxu0 0
  %2763 = vmatpush1.bf16.msra.mxu0 0
  %2764 = vmatprep.subr.bf16.mxu0 0
  %2765 = vmatpush1.bf16.msra.mxu0 0
  %2766 = vmatprep.subr.bf16.mxu0 0
  %2767 = vmatpush1.bf16.msra.mxu0 0
  %2768 = vmatprep.subr.bf16.mxu0 0
  %2769 = vmatpush1.bf16.msra.mxu0 0
  %2770 = vmatprep.subr.bf16.mxu0 0
  %2771 = vmatpush1.bf16.msra.mxu0 0
  %2772 = vmatprep.subr.bf16.mxu0 0
  %2773 = vmatpush1.bf16.msra.mxu0 0
  %2774 = vmatprep.subr.bf16.mxu0 0
  %2775 = vmatpush1.bf16.msra.mxu0 0
  %2776 = vmatprep.subr.bf16.mxu0 0
  %2777 = vmatpush1.bf16.msra.mxu0 0
  %2778 = vmatprep.subr.bf16.mxu0 0
  %2779 = vmatpush1.bf16.msra.mxu0 0
  %2780 = vmatprep.subr.bf16.mxu0 0
  %2781 = vmatpush1.bf16.msra.mxu0 0
  %2782 = vmatprep.subr.bf16.mxu0 0
  %2783 = vmatpush1.bf16.msra.mxu0 0
  %2784 = vmatprep.subr.bf16.mxu0 0
  %2785 = vmatpush1.bf16.msra.mxu0 0
  %2786 = vmatprep.mubr.bf16.mxu0 0
  %2787 = vmatmul.mubr.bf16.gmra.mrb[0].mxu0 %v2711
  %v2788 = vpop.f32.mrb[0].mxu0
  %v2789 = vadd.f32 0.0, %v2788
  %v2790 = vpop.f32.mrb[0].mxu0
  %v2791 = vadd.f32 0.0, %v2790
  %v2792 = vpop.f32.mrb[0].mxu0
  %v2793 = vpop.f32.mrb[0].mxu0
  %2794 = vdwg.mxu0
  %v2795 = vadd.f32 %v2603, %v2748
  %v2796 = vadd.f32 %v2604, %v2750
  %v2797 = vadd.f32 %v2605, %v2789
  %v2798 = vadd.f32 %v2606, %v2791
  %v2799 = vrot.slane %v2278, 2
  %2801 = vrot.lane.b32.xlu0 %v2607, 64
  %v2802 = vpop.permute.xlu0 %2801
  %v2804 = vsel %vm2418, %v2799, %v2802
  %v2805 = vpack.c.bf16 %v2804, %v2804
  %v2806 = vld [vmem:[%s7 + $0x100] sm:$0xff]
  %v2807 = vld [vmem:[%s7 + $0x108] sm:$0xff]
  %v2808 = vld [vmem:[%s7 + $0x110] sm:$0xff]
  %v2809 = vld [vmem:[%s7 + $0x118] sm:$0xff]
  %v2810 = vld [vmem:[%s7 + $0x120] sm:$0xff]
  %v2811 = vld [vmem:[%s7 + $0x128] sm:$0xff]
  %v2812 = vld [vmem:[%s7 + $0x130] sm:$0xff]
  %v2813 = vld [vmem:[%s7 + $0x138] sm:$0xff]
  %v2814 = vld [vmem:[%s7 + $0x140] sm:$0xff]
  %v2815 = vld [vmem:[%s7 + $0x148] sm:$0xff]
  %v2816 = vld [vmem:[%s7 + $0x150] sm:$0xff]
  %v2817 = vld [vmem:[%s7 + $0x158] sm:$0xff]
  %v2818 = vld [vmem:[%s7 + $0x160] sm:$0xff]
  %v2819 = vld [vmem:[%s7 + $0x168] sm:$0xff]
  %v2820 = vld [vmem:[%s7 + $0x170] sm:$0xff]
  %v2821 = vld [vmem:[%s7 + $0x178] sm:$0xff]
  %v2838 = vunpack.c.l.b16 %v2806
  %v2839 = vunpack.c.h.b16 %v2806
  %v2840 = vunpack.c.l.b16 %v2807
  %v2841 = vunpack.c.h.b16 %v2807
  %v2842 = vunpack.c.l.b16 %v2808
  %v2843 = vunpack.c.h.b16 %v2808
  %v2844 = vunpack.c.l.b16 %v2809
  %v2845 = vunpack.c.h.b16 %v2809
  %v2846 = vunpack.c.l.b16 %v2810
  %v2847 = vunpack.c.h.b16 %v2810
  %v2848 = vunpack.c.l.b16 %v2811
  %v2849 = vunpack.c.h.b16 %v2811
  %v2850 = vunpack.c.l.b16 %v2812
  %v2851 = vunpack.c.h.b16 %v2812
  %v2852 = vunpack.c.l.b16 %v2813
  %v2853 = vunpack.c.h.b16 %v2813
  %v2854 = vunpack.c.l.b16 %v2814
  %v2855 = vunpack.c.h.b16 %v2814
  %v2856 = vunpack.c.l.b16 %v2815
  %v2857 = vunpack.c.h.b16 %v2815
  %v2858 = vunpack.c.l.b16 %v2816
  %v2859 = vunpack.c.h.b16 %v2816
  %v2860 = vunpack.c.l.b16 %v2817
  %v2861 = vunpack.c.h.b16 %v2817
  %v2862 = vunpack.c.l.b16 %v2818
  %v2863 = vunpack.c.h.b16 %v2818
  %v2864 = vunpack.c.l.b16 %v2819
  %v2865 = vunpack.c.h.b16 %v2819
  %v2866 = vunpack.c.l.b16 %v2820
  %v2867 = vunpack.c.h.b16 %v2820
  %v2868 = vunpack.c.l.b16 %v2821
  %v2869 = vunpack.c.h.b16 %v2821
  %v2870 = vpack.c.b16 %v2842, %v2838
  %v2871 = vpack.c.b16 %v2843, %v2839
  %v2872 = vpack.c.b16 %v2844, %v2840
  %v2873 = vpack.c.b16 %v2845, %v2841
  %v2874 = vpack.c.b16 %v2850, %v2846
  %v2875 = vpack.c.b16 %v2851, %v2847
  %v2876 = vpack.c.b16 %v2852, %v2848
  %v2877 = vpack.c.b16 %v2853, %v2849
  %v2878 = vpack.c.b16 %v2858, %v2854
  %v2879 = vpack.c.b16 %v2859, %v2855
  %v2880 = vpack.c.b16 %v2860, %v2856
  %v2881 = vpack.c.b16 %v2861, %v2857
  %v2882 = vpack.c.b16 %v2866, %v2862
  %v2883 = vpack.c.b16 %v2867, %v2863
  %v2884 = vpack.c.b16 %v2868, %v2864
  %v2885 = vpack.c.b16 %v2869, %v2865
  %v2903 = vsel %vm2517, %v2805, 0
  %2905 = vmatprep.subr.bf16.mxu0 %v2871
  %2906 = vmatpush1.bf16.msra.mxu0 %v2870
  %2907 = vmatprep.subr.bf16.mxu0 %v2875
  %2908 = vmatpush1.bf16.msra.mxu0 %v2874
  %2909 = vmatprep.subr.bf16.mxu0 %v2879
  %2910 = vmatpush1.bf16.msra.mxu0 %v2878
  %2911 = vmatprep.subr.bf16.mxu0 %v2883
  %2912 = vmatpush1.bf16.msra.mxu0 %v2882
  %2913 = vmatprep.subr.bf16.mxu0 0
  %2914 = vmatpush1.bf16.msra.mxu0 0
  %2915 = vmatprep.subr.bf16.mxu0 0
  %2916 = vmatpush1.bf16.msra.mxu0 0
  %2917 = vmatprep.subr.bf16.mxu0 0
  %2918 = vmatpush1.bf16.msra.mxu0 0
  %2919 = vmatprep.subr.bf16.mxu0 0
  %2920 = vmatpush1.bf16.msra.mxu0 0
  %2921 = vmatprep.subr.bf16.mxu0 0
  %2922 = vmatpush1.bf16.msra.mxu0 0
  %2923 = vmatprep.subr.bf16.mxu0 0
  %2924 = vmatpush1.bf16.msra.mxu0 0
  %2925 = vmatprep.subr.bf16.mxu0 0
  %2926 = vmatpush1.bf16.msra.mxu0 0
  %2927 = vmatprep.subr.bf16.mxu0 0
  %2928 = vmatpush1.bf16.msra.mxu0 0
  %2929 = vmatprep.subr.bf16.mxu0 0
  %2930 = vmatpush1.bf16.msra.mxu0 0
  %2931 = vmatprep.subr.bf16.mxu0 0
  %2932 = vmatpush1.bf16.msra.mxu0 0
  %2933 = vmatprep.subr.bf16.mxu0 0
  %2934 = vmatpush1.bf16.msra.mxu0 0
  %2935 = vmatprep.subr.bf16.mxu0 0
  %2936 = vmatpush1.bf16.msra.mxu0 0
  %2937 = vmatprep.mubr.bf16.mxu0 0
  %2938 = vmatmul.mubr.bf16.gmra.mrb[0].mxu0 %v2903
  %v2939 = vpop.f32.mrb[0].mxu0
  %v2940 = vadd.f32 0.0, %v2939
  %v2941 = vpop.f32.mrb[0].mxu0
  %v2942 = vadd.f32 0.0, %v2941
  %v2943 = vpop.f32.mrb[0].mxu0
  %v2944 = vpop.f32.mrb[0].mxu0
  %2945 = vdwg.mxu0
  %2946 = vmatprep.subr.bf16.mxu0 %v2873
  %2947 = vmatpush1.bf16.msra.mxu0 %v2872
  %2948 = vmatprep.subr.bf16.mxu0 %v2877
  %2949 = vmatpush1.bf16.msra.mxu0 %v2876
  %2950 = vmatprep.subr.bf16.mxu0 %v2881
  %2951 = vmatpush1.bf16.msra.mxu0 %v2880
  %2952 = vmatprep.subr.bf16.mxu0 %v2885
  %2953 = vmatpush1.bf16.msra.mxu0 %v2884
  %2954 = vmatprep.subr.bf16.mxu0 0
  %2955 = vmatpush1.bf16.msra.mxu0 0
  %2956 = vmatprep.subr.bf16.mxu0 0
  %2957 = vmatpush1.bf16.msra.mxu0 0
  %2958 = vmatprep.subr.bf16.mxu0 0
  %2959 = vmatpush1.bf16.msra.mxu0 0
  %2960 = vmatprep.subr.bf16.mxu0 0
  %2961 = vmatpush1.bf16.msra.mxu0 0
  %2962 = vmatprep.subr.bf16.mxu0 0
  %2963 = vmatpush1.bf16.msra.mxu0 0
  %2964 = vmatprep.subr.bf16.mxu0 0
  %2965 = vmatpush1.bf16.msra.mxu0 0
  %2966 = vmatprep.subr.bf16.mxu0 0
  %2967 = vmatpush1.bf16.msra.mxu0 0
  %2968 = vmatprep.subr.bf16.mxu0 0
  %2969 = vmatpush1.bf16.msra.mxu0 0
  %2970 = vmatprep.subr.bf16.mxu0 0
  %2971 = vmatpush1.bf16.msra.mxu0 0
  %2972 = vmatprep.subr.bf16.mxu0 0
  %2973 = vmatpush1.bf16.msra.mxu0 0
  %2974 = vmatprep.subr.bf16.mxu0 0
  %2975 = vmatpush1.bf16.msra.mxu0 0
  %2976 = vmatprep.subr.bf16.mxu0 0
  %2977 = vmatpush1.bf16.msra.mxu0 0
  %2978 = vmatprep.mubr.bf16.mxu0 0
  %2979 = vmatmul.mubr.bf16.gmra.mrb[0].mxu0 %v2903
  %v2980 = vpop.f32.mrb[0].mxu0
  %v2981 = vadd.f32 0.0, %v2980
  %v2982 = vpop.f32.mrb[0].mxu0
  %v2983 = vadd.f32 0.0, %v2982
  %v2984 = vpop.f32.mrb[0].mxu0
  %v2985 = vpop.f32.mrb[0].mxu0
  %2986 = vdwg.mxu0
  %v2987 = vadd.f32 %v2795, %v2940
  %v2988 = vadd.f32 %v2796, %v2942
  %v2989 = vadd.f32 %v2797, %v2981
  %v2990 = vadd.f32 %v2798, %v2983
  %v2991 = vrot.slane %v2278, 3
  %2993 = vrot.lane.b32.xlu0 %v2799, 64
  %v2994 = vpop.permute.xlu0 %2993
  %v2996 = vsel %vm2418, %v2991, %v2994
  %v2997 = vpack.c.bf16 %v2996, %v2996
  %v2998 = vld [vmem:[%s7 + $0x180] sm:$0xff]
  %v2999 = vld [vmem:[%s7 + $0x188] sm:$0xff]
  %v3000 = vld [vmem:[%s7 + $0x190] sm:$0xff]
  %v3001 = vld [vmem:[%s7 + $0x198] sm:$0xff]
  %v3002 = vld [vmem:[%s7 + $0x1a0] sm:$0xff]
  %v3003 = vld [vmem:[%s7 + $0x1a8] sm:$0xff]
  %v3004 = vld [vmem:[%s7 + $0x1b0] sm:$0xff]
  %v3005 = vld [vmem:[%s7 + $0x1b8] sm:$0xff]
  %v3006 = vld [vmem:[%s7 + $0x1c0] sm:$0xff]
  %v3007 = vld [vmem:[%s7 + $0x1c8] sm:$0xff]
  %v3008 = vld [vmem:[%s7 + $0x1d0] sm:$0xff]
  %v3009 = vld [vmem:[%s7 + $0x1d8] sm:$0xff]
  %v3010 = vld [vmem:[%s7 + $0x1e0] sm:$0xff]
  %v3011 = vld [vmem:[%s7 + $0x1e8] sm:$0xff]
  %v3012 = vld [vmem:[%s7 + $0x1f0] sm:$0xff]
  %v3013 = vld [vmem:[%s7 + $0x1f8] sm:$0xff]
  %v3030 = vunpack.c.l.b16 %v2998
  %v3031 = vunpack.c.h.b16 %v2998
  %v3032 = vunpack.c.l.b16 %v2999
  %v3033 = vunpack.c.h.b16 %v2999
  %v3034 = vunpack.c.l.b16 %v3000
  %v3035 = vunpack.c.h.b16 %v3000
  %v3036 = vunpack.c.l.b16 %v3001
  %v3037 = vunpack.c.h.b16 %v3001
  %v3038 = vunpack.c.l.b16 %v3002
  %v3039 = vunpack.c.h.b16 %v3002
  %v3040 = vunpack.c.l.b16 %v3003
  %v3041 = vunpack.c.h.b16 %v3003
  %v3042 = vunpack.c.l.b16 %v3004
  %v3043 = vunpack.c.h.b16 %v3004
  %v3044 = vunpack.c.l.b16 %v3005
  %v3045 = vunpack.c.h.b16 %v3005
  %v3046 = vunpack.c.l.b16 %v3006
  %v3047 = vunpack.c.h.b16 %v3006
  %v3048 = vunpack.c.l.b16 %v3007
  %v3049 = vunpack.c.h.b16 %v3007
  %v3050 = vunpack.c.l.b16 %v3008
  %v3051 = vunpack.c.h.b16 %v3008
  %v3052 = vunpack.c.l.b16 %v3009
  %v3053 = vunpack.c.h.b16 %v3009
  %v3054 = vunpack.c.l.b16 %v3010
  %v3055 = vunpack.c.h.b16 %v3010
  %v3056 = vunpack.c.l.b16 %v3011
  %v3057 = vunpack.c.h.b16 %v3011
  %v3058 = vunpack.c.l.b16 %v3012
  %v3059 = vunpack.c.h.b16 %v3012
  %v3060 = vunpack.c.l.b16 %v3013
  %v3061 = vunpack.c.h.b16 %v3013
  %v3062 = vpack.c.b16 %v3034, %v3030
  %v3063 = vpack.c.b16 %v3035, %v3031
  %v3064 = vpack.c.b16 %v3036, %v3032
  %v3065 = vpack.c.b16 %v3037, %v3033
  %v3066 = vpack.c.b16 %v3042, %v3038
  %v3067 = vpack.c.b16 %v3043, %v3039
  %v3068 = vpack.c.b16 %v3044, %v3040
  %v3069 = vpack.c.b16 %v3045, %v3041
  %v3070 = vpack.c.b16 %v3050, %v3046
  %v3071 = vpack.c.b16 %v3051, %v3047
  %v3072 = vpack.c.b16 %v3052, %v3048
  %v3073 = vpack.c.b16 %v3053, %v3049
  %v3074 = vpack.c.b16 %v3058, %v3054
  %v3075 = vpack.c.b16 %v3059, %v3055
  %v3076 = vpack.c.b16 %v3060, %v3056
  %v3077 = vpack.c.b16 %v3061, %v3057
  %v3095 = vsel %vm2517, %v2997, 0
  %3097 = vmatprep.subr.bf16.mxu0 %v3063
  %3098 = vmatpush1.bf16.msra.mxu0 %v3062
  %3099 = vmatprep.subr.bf16.mxu0 %v3067
  %3100 = vmatpush1.bf16.msra.mxu0 %v3066
  %3101 = vmatprep.subr.bf16.mxu0 %v3071
  %3102 = vmatpush1.bf16.msra.mxu0 %v3070
  %3103 = vmatprep.subr.bf16.mxu0 %v3075
  %3104 = vmatpush1.bf16.msra.mxu0 %v3074
  %3105 = vmatprep.subr.bf16.mxu0 0
  %3106 = vmatpush1.bf16.msra.mxu0 0
  %3107 = vmatprep.subr.bf16.mxu0 0
  %3108 = vmatpush1.bf16.msra.mxu0 0
  %3109 = vmatprep.subr.bf16.mxu0 0
  %3110 = vmatpush1.bf16.msra.mxu0 0
  %3111 = vmatprep.subr.bf16.mxu0 0
  %3112 = vmatpush1.bf16.msra.mxu0 0
  %3113 = vmatprep.subr.bf16.mxu0 0
  %3114 = vmatpush1.bf16.msra.mxu0 0
  %3115 = vmatprep.subr.bf16.mxu0 0
  %3116 = vmatpush1.bf16.msra.mxu0 0
  %3117 = vmatprep.subr.bf16.mxu0 0
  %3118 = vmatpush1.bf16.msra.mxu0 0
  %3119 = vmatprep.subr.bf16.mxu0 0
  %3120 = vmatpush1.bf16.msra.mxu0 0
  %3121 = vmatprep.subr.bf16.mxu0 0
  %3122 = vmatpush1.bf16.msra.mxu0 0
  %3123 = vmatprep.subr.bf16.mxu0 0
  %3124 = vmatpush1.bf16.msra.mxu0 0
  %3125 = vmatprep.subr.bf16.mxu0 0
  %3126 = vmatpush1.bf16.msra.mxu0 0
  %3127 = vmatprep.subr.bf16.mxu0 0
  %3128 = vmatpush1.bf16.msra.mxu0 0
  %3129 = vmatprep.mubr.bf16.mxu0 0
  %3130 = vmatmul.mubr.bf16.gmra.mrb[0].mxu0 %v3095
  %v3131 = vpop.f32.mrb[0].mxu0
  %v3132 = vadd.f32 0.0, %v3131
  %v3133 = vpop.f32.mrb[0].mxu0
  %v3134 = vadd.f32 0.0, %v3133
  %v3135 = vpop.f32.mrb[0].mxu0
  %v3136 = vpop.f32.mrb[0].mxu0
  %3137 = vdwg.mxu0
  %3138 = vmatprep.subr.bf16.mxu0 %v3065
  %3139 = vmatpush1.bf16.msra.mxu0 %v3064
  %3140 = vmatprep.subr.bf16.mxu0 %v3069
  %3141 = vmatpush1.bf16.msra.mxu0 %v3068
  %3142 = vmatprep.subr.bf16.mxu0 %v3073
  %3143 = vmatpush1.bf16.msra.mxu0 %v3072
  %3144 = vmatprep.subr.bf16.mxu0 %v3077
  %3145 = vmatpush1.bf16.msra.mxu0 %v3076
  %3146 = vmatprep.subr.bf16.mxu0 0
  %3147 = vmatpush1.bf16.msra.mxu0 0
  %3148 = vmatprep.subr.bf16.mxu0 0
  %3149 = vmatpush1.bf16.msra.mxu0 0
  %3150 = vmatprep.subr.bf16.mxu0 0
  %3151 = vmatpush1.bf16.msra.mxu0 0
  %3152 = vmatprep.subr.bf16.mxu0 0
  %3153 = vmatpush1.bf16.msra.mxu0 0
  %3154 = vmatprep.subr.bf16.mxu0 0
  %3155 = vmatpush1.bf16.msra.mxu0 0
  %3156 = vmatprep.subr.bf16.mxu0 0
  %3157 = vmatpush1.bf16.msra.mxu0 0
  %3158 = vmatprep.subr.bf16.mxu0 0
  %3159 = vmatpush1.bf16.msra.mxu0 0
  %3160 = vmatprep.subr.bf16.mxu0 0
  %3161 = vmatpush1.bf16.msra.mxu0 0
  %3162 = vmatprep.subr.bf16.mxu0 0
  %3163 = vmatpush1.bf16.msra.mxu0 0
  %3164 = vmatprep.subr.bf16.mxu0 0
  %3165 = vmatpush1.bf16.msra.mxu0 0
  %3166 = vmatprep.subr.bf16.mxu0 0
  %3167 = vmatpush1.bf16.msra.mxu0 0
  %3168 = vmatprep.subr.bf16.mxu0 0
  %3169 = vmatpush1.bf16.msra.mxu0 0
  %3170 = vmatprep.mubr.bf16.mxu0 0
  %3171 = vmatmul.mubr.bf16.gmra.mrb[0].mxu0 %v3095
  %v3172 = vpop.f32.mrb[0].mxu0
  %v3173 = vadd.f32 0.0, %v3172
  %v3174 = vpop.f32.mrb[0].mxu0
  %v3175 = vadd.f32 0.0, %v3174
  %v3176 = vpop.f32.mrb[0].mxu0
  %v3177 = vpop.f32.mrb[0].mxu0
  %3178 = vdwg.mxu0
  %v3179 = vadd.f32 %v2987, %v3132
  %v3180 = vadd.f32 %v2988, %v3134
  %v3181 = vadd.f32 %v2989, %v3173
  %v3182 = vadd.f32 %v2990, %v3175
  %v3183 = vld [vmem:[%s10] sm:$0xf]
  %v3184 = vld [vmem:[%s11] sm:$0xf]
  %v3185 = vsel %vm991, %v3179, 0.0
  %v3186 = vsel %vm991, %v3180, 0.0
  %v3187 = vadd.f32 %v3185, %v3186
  %v3188 = vsel %vm991, %v3181, 0.0
  %v3189 = vadd.f32 %v3187, %v3188
  %v3190 = vsel %vm991, %v3182, 0.0
  %v3191 = vadd.f32 %v3189, %v3190
  %3192 = vadd.xlane.f32.xlu0 %v3191
  %v3193 = vpop.xlane.xlu0 %3192
  %v3194 = vrcp.pop 512.0
  %v3195 = vmul.f32 %v3193, %v3194
  %v3196 = vsub.f32 %v3179, %v3195
  %v3197 = vsub.f32 %v3180, %v3195
  %v3198 = vsub.f32 %v3181, %v3195
  %v3199 = vsub.f32 %v3182, %v3195
  %v3200 = vmul.f32 %v3196, %v3196
  %v3201 = vmul.f32 %v3197, %v3197
  %v3202 = vmul.f32 %v3198, %v3198
  %v3203 = vmul.f32 %v3199, %v3199
  %v3204 = vsel %vm991, %v3200, 0.0
  %v3205 = vsel %vm991, %v3201, 0.0
  %v3206 = vadd.f32 %v3204, %v3205
  %v3207 = vsel %vm991, %v3202, 0.0
  %v3208 = vadd.f32 %v3206, %v3207
  %v3209 = vsel %vm991, %v3203, 0.0
  %v3210 = vadd.f32 %v3208, %v3209
  %3211 = vadd.xlane.f32.xlu0 %v3210
  %v3212 = vpop.xlane.xlu0 %3211
  %v3213 = vmul.f32 %v3212, %v3194
  %v3214 = vadd.f32 %v3213, 1e-05
  %v3215 = vrsqrt.pop %v3214
  %v3216 = vmul.f32 %v3196, %v3215
  %v3217 = vmul.f32 %v3197, %v3215
  %v3218 = vmul.f32 %v3198, %v3215
  %v3219 = vmul.f32 %v3199, %v3215
  %v3221 = vlaneseq
  %v3222 = vshrl.u32 %v3221, 7
  %v3223 = vsub.s32 0, %v3222
  %v3224 = vrot.slane %v3183, %v3223
  %v3225 = vlaneseq
  %v3226 = vshrl.u32 %v3225, 7
  %v3227 = vsub.s32 1, %v3226
  %v3228 = vrot.slane %v3183, %v3227
  %v3229 = vlaneseq
  %v3230 = vshrl.u32 %v3229, 7
  %v3231 = vsub.s32 2, %v3230
  %v3232 = vrot.slane %v3183, %v3231
  %v3233 = vlaneseq
  %v3234 = vshrl.u32 %v3233, 7
  %v3235 = vsub.s32 3, %v3234
  %v3236 = vrot.slane %v3183, %v3235
  %v3241 = vmul.f32 %v3216, %v3224
  %v3242 = vmul.f32 %v3217, %v3228
  %v3243 = vmul.f32 %v3218, %v3232
  %v3244 = vmul.f32 %v3219, %v3236
  %v3246 = vlaneseq
  %v3247 = vshrl.u32 %v3246, 7
  %v3248 = vsub.s32 0, %v3247
  %v3249 = vrot.slane %v3184, %v3248
  %v3250 = vlaneseq
  %v3251 = vshrl.u32 %v3250, 7
  %v3252 = vsub.s32 1, %v3251
  %v3253 = vrot.slane %v3184, %v3252
  %v3254 = vlaneseq
  %v3255 = vshrl.u32 %v3254, 7
  %v3256 = vsub.s32 2, %v3255
  %v3257 = vrot.slane %v3184, %v3256
  %v3258 = vlaneseq
  %v3259 = vshrl.u32 %v3258, 7
  %v3260 = vsub.s32 3, %v3259
  %v3261 = vrot.slane %v3184, %v3260
  %v3266 = vadd.f32 %v3241, %v3249
  %v3267 = vadd.f32 %v3242, %v3253
  %v3268 = vadd.f32 %v3243, %v3257
  %v3269 = vadd.f32 %v3244, %v3261
  %vm3270 = vcmp.ge.f32.partialorder %v3266, 0.0
  %vm3271 = vcmp.ge.f32.partialorder %v3267, 0.0
  %vm3272 = vcmp.ge.f32.partialorder %v3268, 0.0
  %vm3273 = vcmp.ge.f32.partialorder %v3269, 0.0
  %v3274 = vmul.f32 %v3266, 0.2
  %v3275 = vmul.f32 %v3267, 0.2
  %v3276 = vmul.f32 %v3268, 0.2
  %v3277 = vmul.f32 %v3269, 0.2
  %v3278 = vsel %vm3270, %v3266, %v3274
  %v3279 = vsel %vm3271, %v3267, %v3275
  %v3280 = vsel %vm3272, %v3268, %v3276
  %v3281 = vsel %vm3273, %v3269, %v3277
  %v3282 = vpack.c.bf16 %v3278, %v3278
  %v3283 = vpack.c.bf16 %v3279, %v3279
  %v3284 = vpack.c.bf16 %v3280, %v3280
  %v3285 = vpack.c.bf16 %v3281, %v3281
  %v3286 = vld [vmem:[%s12] sm:$0xff]
  %v3287 = vld [vmem:[%s12 + $0x8] sm:$0xff]
  %v3288 = vld [vmem:[%s12 + $0x10] sm:$0xff]
  %v3289 = vld [vmem:[%s12 + $0x18] sm:$0xff]
  %v3290 = vld [vmem:[%s12 + $0x20] sm:$0xff]
  %v3291 = vld [vmem:[%s12 + $0x28] sm:$0xff]
  %v3292 = vld [vmem:[%s12 + $0x30] sm:$0xff]
  %v3293 = vld [vmem:[%s12 + $0x38] sm:$0xff]
  %v3294 = vld [vmem:[%s12 + $0x40] sm:$0xff]
  %v3295 = vld [vmem:[%s12 + $0x48] sm:$0xff]
  %v3296 = vld [vmem:[%s12 + $0x50] sm:$0xff]
  %v3297 = vld [vmem:[%s12 + $0x58] sm:$0xff]
  %v3298 = vld [vmem:[%s12 + $0x60] sm:$0xff]
  %v3299 = vld [vmem:[%s12 + $0x68] sm:$0xff]
  %v3300 = vld [vmem:[%s12 + $0x70] sm:$0xff]
  %v3301 = vld [vmem:[%s12 + $0x78] sm:$0xff]
  %v3302 = vld [vmem:[%s12 + $0x80] sm:$0xff]
  %v3303 = vld [vmem:[%s12 + $0x88] sm:$0xff]
  %v3304 = vld [vmem:[%s12 + $0x90] sm:$0xff]
  %v3305 = vld [vmem:[%s12 + $0x98] sm:$0xff]
  %v3306 = vld [vmem:[%s12 + $0xa0] sm:$0xff]
  %v3307 = vld [vmem:[%s12 + $0xa8] sm:$0xff]
  %v3308 = vld [vmem:[%s12 + $0xb0] sm:$0xff]
  %v3309 = vld [vmem:[%s12 + $0xb8] sm:$0xff]
  %v3310 = vld [vmem:[%s12 + $0xc0] sm:$0xff]
  %v3311 = vld [vmem:[%s12 + $0xc8] sm:$0xff]
  %v3312 = vld [vmem:[%s12 + $0xd0] sm:$0xff]
  %v3313 = vld [vmem:[%s12 + $0xd8] sm:$0xff]
  %v3314 = vld [vmem:[%s12 + $0xe0] sm:$0xff]
  %v3315 = vld [vmem:[%s12 + $0xe8] sm:$0xff]
  %v3316 = vld [vmem:[%s12 + $0xf0] sm:$0xff]
  %v3317 = vld [vmem:[%s12 + $0xf8] sm:$0xff]
  %v3318 = vld [vmem:[%s12 + $0x100] sm:$0xff]
  %v3319 = vld [vmem:[%s12 + $0x108] sm:$0xff]
  %v3320 = vld [vmem:[%s12 + $0x110] sm:$0xff]
  %v3321 = vld [vmem:[%s12 + $0x118] sm:$0xff]
  %v3322 = vld [vmem:[%s12 + $0x120] sm:$0xff]
  %v3323 = vld [vmem:[%s12 + $0x128] sm:$0xff]
  %v3324 = vld [vmem:[%s12 + $0x130] sm:$0xff]
  %v3325 = vld [vmem:[%s12 + $0x138] sm:$0xff]
  %v3326 = vld [vmem:[%s12 + $0x140] sm:$0xff]
  %v3327 = vld [vmem:[%s12 + $0x148] sm:$0xff]
  %v3328 = vld [vmem:[%s12 + $0x150] sm:$0xff]
  %v3329 = vld [vmem:[%s12 + $0x158] sm:$0xff]
  %v3330 = vld [vmem:[%s12 + $0x160] sm:$0xff]
  %v3331 = vld [vmem:[%s12 + $0x168] sm:$0xff]
  %v3332 = vld [vmem:[%s12 + $0x170] sm:$0xff]
  %v3333 = vld [vmem:[%s12 + $0x178] sm:$0xff]
  %v3334 = vld [vmem:[%s12 + $0x180] sm:$0xff]
  %v3335 = vld [vmem:[%s12 + $0x188] sm:$0xff]
  %v3336 = vld [vmem:[%s12 + $0x190] sm:$0xff]
  %v3337 = vld [vmem:[%s12 + $0x198] sm:$0xff]
  %v3338 = vld [vmem:[%s12 + $0x1a0] sm:$0xff]
  %v3339 = vld [vmem:[%s12 + $0x1a8] sm:$0xff]
  %v3340 = vld [vmem:[%s12 + $0x1b0] sm:$0xff]
  %v3341 = vld [vmem:[%s12 + $0x1b8] sm:$0xff]
  %v3342 = vld [vmem:[%s12 + $0x1c0] sm:$0xff]
  %v3343 = vld [vmem:[%s12 + $0x1c8] sm:$0xff]
  %v3344 = vld [vmem:[%s12 + $0x1d0] sm:$0xff]
  %v3345 = vld [vmem:[%s12 + $0x1d8] sm:$0xff]
  %v3346 = vld [vmem:[%s12 + $0x1e0] sm:$0xff]
  %v3347 = vld [vmem:[%s12 + $0x1e8] sm:$0xff]
  %v3348 = vld [vmem:[%s12 + $0x1f0] sm:$0xff]
  %v3349 = vld [vmem:[%s12 + $0x1f8] sm:$0xff]
  %v3350 = vld [vmem:[%s12 + $0x200] sm:$0xff]
  %v3351 = vld [vmem:[%s12 + $0x208] sm:$0xff]
  %v3352 = vld [vmem:[%s12 + $0x210] sm:$0xff]
  %v3353 = vld [vmem:[%s12 + $0x218] sm:$0xff]
  %v3354 = vld [vmem:[%s12 + $0x220] sm:$0xff]
  %v3355 = vld [vmem:[%s12 + $0x228] sm:$0xff]
  %v3356 = vld [vmem:[%s12 + $0x230] sm:$0xff]
  %v3357 = vld [vmem:[%s12 + $0x238] sm:$0xff]
  %v3358 = vld [vmem:[%s12 + $0x240] sm:$0xff]
  %v3359 = vld [vmem:[%s12 + $0x248] sm:$0xff]
  %v3360 = vld [vmem:[%s12 + $0x250] sm:$0xff]
  %v3361 = vld [vmem:[%s12 + $0x258] sm:$0xff]
  %v3362 = vld [vmem:[%s12 + $0x260] sm:$0xff]
  %v3363 = vld [vmem:[%s12 + $0x268] sm:$0xff]
  %v3364 = vld [vmem:[%s12 + $0x270] sm:$0xff]
  %v3365 = vld [vmem:[%s12 + $0x278] sm:$0xff]
  %v3366 = vld [vmem:[%s12 + $0x280] sm:$0xff]
  %v3367 = vld [vmem:[%s12 + $0x288] sm:$0xff]
  %v3368 = vld [vmem:[%s12 + $0x290] sm:$0xff]
  %v3369 = vld [vmem:[%s12 + $0x298] sm:$0xff]
  %v3370 = vld [vmem:[%s12 + $0x2a0] sm:$0xff]
  %v3371 = vld [vmem:[%s12 + $0x2a8] sm:$0xff]
  %v3372 = vld [vmem:[%s12 + $0x2b0] sm:$0xff]
  %v3373 = vld [vmem:[%s12 + $0x2b8] sm:$0xff]
  %v3374 = vld [vmem:[%s12 + $0x2c0] sm:$0xff]
  %v3375 = vld [vmem:[%s12 + $0x2c8] sm:$0xff]
  %v3376 = vld [vmem:[%s12 + $0x2d0] sm:$0xff]
  %v3377 = vld [vmem:[%s12 + $0x2d8] sm:$0xff]
  %v3378 = vld [vmem:[%s12 + $0x2e0] sm:$0xff]
  %v3379 = vld [vmem:[%s12 + $0x2e8] sm:$0xff]
  %v3380 = vld [vmem:[%s12 + $0x2f0] sm:$0xff]
  %v3381 = vld [vmem:[%s12 + $0x2f8] sm:$0xff]
  %v3382 = vld [vmem:[%s12 + $0x300] sm:$0xff]
  %v3383 = vld [vmem:[%s12 + $0x308] sm:$0xff]
  %v3384 = vld [vmem:[%s12 + $0x310] sm:$0xff]
  %v3385 = vld [vmem:[%s12 + $0x318] sm:$0xff]
  %v3386 = vld [vmem:[%s12 + $0x320] sm:$0xff]
  %v3387 = vld [vmem:[%s12 + $0x328] sm:$0xff]
  %v3388 = vld [vmem:[%s12 + $0x330] sm:$0xff]
  %v3389 = vld [vmem:[%s12 + $0x338] sm:$0xff]
  %v3390 = vld [vmem:[%s12 + $0x340] sm:$0xff]
  %v3391 = vld [vmem:[%s12 + $0x348] sm:$0xff]
  %v3392 = vld [vmem:[%s12 + $0x350] sm:$0xff]
  %v3393 = vld [vmem:[%s12 + $0x358] sm:$0xff]
  %v3394 = vld [vmem:[%s12 + $0x360] sm:$0xff]
  %v3395 = vld [vmem:[%s12 + $0x368] sm:$0xff]
  %v3396 = vld [vmem:[%s12 + $0x370] sm:$0xff]
  %v3397 = vld [vmem:[%s12 + $0x378] sm:$0xff]
  %v3398 = vld [vmem:[%s12 + $0x380] sm:$0xff]
  %v3399 = vld [vmem:[%s12 + $0x388] sm:$0xff]
  %v3400 = vld [vmem:[%s12 + $0x390] sm:$0xff]
  %v3401 = vld [vmem:[%s12 + $0x398] sm:$0xff]
  %v3402 = vld [vmem:[%s12 + $0x3a0] sm:$0xff]
  %v3403 = vld [vmem:[%s12 + $0x3a8] sm:$0xff]
  %v3404 = vld [vmem:[%s12 + $0x3b0] sm:$0xff]
  %v3405 = vld [vmem:[%s12 + $0x3b8] sm:$0xff]
  %v3406 = vld [vmem:[%s12 + $0x3c0] sm:$0xff]
  %v3407 = vld [vmem:[%s12 + $0x3c8] sm:$0xff]
  %v3408 = vld [vmem:[%s12 + $0x3d0] sm:$0xff]
  %v3409 = vld [vmem:[%s12 + $0x3d8] sm:$0xff]
  %v3410 = vld [vmem:[%s12 + $0x3e0] sm:$0xff]
  %v3411 = vld [vmem:[%s12 + $0x3e8] sm:$0xff]
  %v3412 = vld [vmem:[%s12 + $0x3f0] sm:$0xff]
  %v3413 = vld [vmem:[%s12 + $0x3f8] sm:$0xff]
  %v3414 = vld [vmem:[%s13] sm:$0xf]
  %v3416 = vlaneseq
  %v3417 = vshrl.u32 %v3416, 7
  %v3418 = vsub.s32 0, %v3417
  %v3419 = vrot.slane %v3414, %v3418
  %v3420 = vlaneseq
  %v3421 = vshrl.u32 %v3420, 7
  %v3422 = vsub.s32 1, %v3421
  %v3423 = vrot.slane %v3414, %v3422
  %v3424 = vlaneseq
  %v3425 = vshrl.u32 %v3424, 7
  %v3426 = vsub.s32 2, %v3425
  %v3427 = vrot.slane %v3414, %v3426
  %v3428 = vlaneseq
  %v3429 = vshrl.u32 %v3428, 7
  %v3430 = vsub.s32 3, %v3429
  %v3431 = vrot.slane %v3414, %v3430
  %v3564 = vunpack.c.l.b16 %v3286
  %v3565 = vunpack.c.h.b16 %v3286
  %v3566 = vunpack.c.l.b16 %v3287
  %v3567 = vunpack.c.h.b16 %v3287
  %v3568 = vunpack.c.l.b16 %v3288
  %v3569 = vunpack.c.h.b16 %v3288
  %v3570 = vunpack.c.l.b16 %v3289
  %v3571 = vunpack.c.h.b16 %v3289
  %v3572 = vunpack.c.l.b16 %v3290
  %v3573 = vunpack.c.h.b16 %v3290
  %v3574 = vunpack.c.l.b16 %v3291
  %v3575 = vunpack.c.h.b16 %v3291
  %v3576 = vunpack.c.l.b16 %v3292
  %v3577 = vunpack.c.h.b16 %v3292
  %v3578 = vunpack.c.l.b16 %v3293
  %v3579 = vunpack.c.h.b16 %v3293
  %v3580 = vunpack.c.l.b16 %v3294
  %v3581 = vunpack.c.h.b16 %v3294
  %v3582 = vunpack.c.l.b16 %v3295
  %v3583 = vunpack.c.h.b16 %v3295
  %v3584 = vunpack.c.l.b16 %v3296
  %v3585 = vunpack.c.h.b16 %v3296
  %v3586 = vunpack.c.l.b16 %v3297
  %v3587 = vunpack.c.h.b16 %v3297
  %v3588 = vunpack.c.l.b16 %v3298
  %v3589 = vunpack.c.h.b16 %v3298
  %v3590 = vunpack.c.l.b16 %v3299
  %v3591 = vunpack.c.h.b16 %v3299
  %v3592 = vunpack.c.l.b16 %v3300
  %v3593 = vunpack.c.h.b16 %v3300
  %v3594 = vunpack.c.l.b16 %v3301
  %v3595 = vunpack.c.h.b16 %v3301
  %v3596 = vunpack.c.l.b16 %v3302
  %v3597 = vunpack.c.h.b16 %v3302
  %v3598 = vunpack.c.l.b16 %v3303
  %v3599 = vunpack.c.h.b16 %v3303
  %v3600 = vunpack.c.l.b16 %v3304
  %v3601 = vunpack.c.h.b16 %v3304
  %v3602 = vunpack.c.l.b16 %v3305
  %v3603 = vunpack.c.h.b16 %v3305
  %v3604 = vunpack.c.l.b16 %v3306
  %v3605 = vunpack.c.h.b16 %v3306
  %v3606 = vunpack.c.l.b16 %v3307
  %v3607 = vunpack.c.h.b16 %v3307
  %v3608 = vunpack.c.l.b16 %v3308
  %v3609 = vunpack.c.h.b16 %v3308
  %v3610 = vunpack.c.l.b16 %v3309
  %v3611 = vunpack.c.h.b16 %v3309
  %v3612 = vunpack.c.l.b16 %v3310
  %v3613 = vunpack.c.h.b16 %v3310
  %v3614 = vunpack.c.l.b16 %v3311
  %v3615 = vunpack.c.h.b16 %v3311
  %v3616 = vunpack.c.l.b16 %v3312
  %v3617 = vunpack.c.h.b16 %v3312
  %v3618 = vunpack.c.l.b16 %v3313
  %v3619 = vunpack.c.h.b16 %v3313
  %v3620 = vunpack.c.l.b16 %v3314
  %v3621 = vunpack.c.h.b16 %v3314
  %v3622 = vunpack.c.l.b16 %v3315
  %v3623 = vunpack.c.h.b16 %v3315
  %v3624 = vunpack.c.l.b16 %v3316
  %v3625 = vunpack.c.h.b16 %v3316
  %v3626 = vunpack.c.l.b16 %v3317
  %v3627 = vunpack.c.h.b16 %v3317
  %v3628 = vunpack.c.l.b16 %v3318
  %v3629 = vunpack.c.h.b16 %v3318
  %v3630 = vunpack.c.l.b16 %v3319
  %v3631 = vunpack.c.h.b16 %v3319
  %v3632 = vunpack.c.l.b16 %v3320
  %v3633 = vunpack.c.h.b16 %v3320
  %v3634 = vunpack.c.l.b16 %v3321
  %v3635 = vunpack.c.h.b16 %v3321
  %v3636 = vunpack.c.l.b16 %v3322
  %v3637 = vunpack.c.h.b16 %v3322
  %v3638 = vunpack.c.l.b16 %v3323
  %v3639 = vunpack.c.h.b16 %v3323
  %v3640 = vunpack.c.l.b16 %v3324
  %v3641 = vunpack.c.h.b16 %v3324
  %v3642 = vunpack.c.l.b16 %v3325
  %v3643 = vunpack.c.h.b16 %v3325
  %v3644 = vunpack.c.l.b16 %v3326
  %v3645 = vunpack.c.h.b16 %v3326
  %v3646 = vunpack.c.l.b16 %v3327
  %v3647 = vunpack.c.h.b16 %v3327
  %v3648 = vunpack.c.l.b16 %v3328
  %v3649 = vunpack.c.h.b16 %v3328
  %v3650 = vunpack.c.l.b16 %v3329
  %v3651 = vunpack.c.h.b16 %v3329
  %v3652 = vunpack.c.l.b16 %v3330
  %v3653 = vunpack.c.h.b16 %v3330
  %v3654 = vunpack.c.l.b16 %v3331
  %v3655 = vunpack.c.h.b16 %v3331
  %v3656 = vunpack.c.l.b16 %v3332
  %v3657 = vunpack.c.h.b16 %v3332
  %v3658 = vunpack.c.l.b16 %v3333
  %v3659 = vunpack.c.h.b16 %v3333
  %v3660 = vunpack.c.l.b16 %v3334
  %v3661 = vunpack.c.h.b16 %v3334
  %v3662 = vunpack.c.l.b16 %v3335
  %v3663 = vunpack.c.h.b16 %v3335
  %v3664 = vunpack.c.l.b16 %v3336
  %v3665 = vunpack.c.h.b16 %v3336
  %v3666 = vunpack.c.l.b16 %v3337
  %v3667 = vunpack.c.h.b16 %v3337
  %v3668 = vunpack.c.l.b16 %v3338
  %v3669 = vunpack.c.h.b16 %v3338
  %v3670 = vunpack.c.l.b16 %v3339
  %v3671 = vunpack.c.h.b16 %v3339
  %v3672 = vunpack.c.l.b16 %v3340
  %v3673 = vunpack.c.h.b16 %v3340
  %v3674 = vunpack.c.l.b16 %v3341
  %v3675 = vunpack.c.h.b16 %v3341
  %v3676 = vunpack.c.l.b16 %v3342
  %v3677 = vunpack.c.h.b16 %v3342
  %v3678 = vunpack.c.l.b16 %v3343
  %v3679 = vunpack.c.h.b16 %v3343
  %v3680 = vunpack.c.l.b16 %v3344
  %v3681 = vunpack.c.h.b16 %v3344
  %v3682 = vunpack.c.l.b16 %v3345
  %v3683 = vunpack.c.h.b16 %v3345
  %v3684 = vunpack.c.l.b16 %v3346
  %v3685 = vunpack.c.h.b16 %v3346
  %v3686 = vunpack.c.l.b16 %v3347
  %v3687 = vunpack.c.h.b16 %v3347
  %v3688 = vunpack.c.l.b16 %v3348
  %v3689 = vunpack.c.h.b16 %v3348
  %v3690 = vunpack.c.l.b16 %v3349
  %v3691 = vunpack.c.h.b16 %v3349
  %v3692 = vunpack.c.l.b16 %v3350
  %v3693 = vunpack.c.h.b16 %v3350
  %v3694 = vunpack.c.l.b16 %v3351
  %v3695 = vunpack.c.h.b16 %v3351
  %v3696 = vunpack.c.l.b16 %v3352
  %v3697 = vunpack.c.h.b16 %v3352
  %v3698 = vunpack.c.l.b16 %v3353
  %v3699 = vunpack.c.h.b16 %v3353
  %v3700 = vunpack.c.l.b16 %v3354
  %v3701 = vunpack.c.h.b16 %v3354
  %v3702 = vunpack.c.l.b16 %v3355
  %v3703 = vunpack.c.h.b16 %v3355
  %v3704 = vunpack.c.l.b16 %v3356
  %v3705 = vunpack.c.h.b16 %v3356
  %v3706 = vunpack.c.l.b16 %v3357
  %v3707 = vunpack.c.h.b16 %v3357
  %v3708 = vunpack.c.l.b16 %v3358
  %v3709 = vunpack.c.h.b16 %v3358
  %v3710 = vunpack.c.l.b16 %v3359
  %v3711 = vunpack.c.h.b16 %v3359
  %v3712 = vunpack.c.l.b16 %v3360
  %v3713 = vunpack.c.h.b16 %v3360
  %v3714 = vunpack.c.l.b16 %v3361
  %v3715 = vunpack.c.h.b16 %v3361
  %v3716 = vunpack.c.l.b16 %v3362
  %v3717 = vunpack.c.h.b16 %v3362
  %v3718 = vunpack.c.l.b16 %v3363
  %v3719 = vunpack.c.h.b16 %v3363
  %v3720 = vunpack.c.l.b16 %v3364
  %v3721 = vunpack.c.h.b16 %v3364
  %v3722 = vunpack.c.l.b16 %v3365
  %v3723 = vunpack.c.h.b16 %v3365
  %v3724 = vunpack.c.l.b16 %v3366
  %v3725 = vunpack.c.h.b16 %v3366
  %v3726 = vunpack.c.l.b16 %v3367
  %v3727 = vunpack.c.h.b16 %v3367
  %v3728 = vunpack.c.l.b16 %v3368
  %v3729 = vunpack.c.h.b16 %v3368
  %v3730 = vunpack.c.l.b16 %v3369
  %v3731 = vunpack.c.h.b16 %v3369
  %v3732 = vunpack.c.l.b16 %v3370
  %v3733 = vunpack.c.h.b16 %v3370
  %v3734 = vunpack.c.l.b16 %v3371
  %v3735 = vunpack.c.h.b16 %v3371
  %v3736 = vunpack.c.l.b16 %v3372
  %v3737 = vunpack.c.h.b16 %v3372
  %v3738 = vunpack.c.l.b16 %v3373
  %v3739 = vunpack.c.h.b16 %v3373
  %v3740 = vunpack.c.l.b16 %v3374
  %v3741 = vunpack.c.h.b16 %v3374
  %v3742 = vunpack.c.l.b16 %v3375
  %v3743 = vunpack.c.h.b16 %v3375
  %v3744 = vunpack.c.l.b16 %v3376
  %v3745 = vunpack.c.h.b16 %v3376
  %v3746 = vunpack.c.l.b16 %v3377
  %v3747 = vunpack.c.h.b16 %v3377
  %v3748 = vunpack.c.l.b16 %v3378
  %v3749 = vunpack.c.h.b16 %v3378
  %v3750 = vunpack.c.l.b16 %v3379
  %v3751 = vunpack.c.h.b16 %v3379
  %v3752 = vunpack.c.l.b16 %v3380
  %v3753 = vunpack.c.h.b16 %v3380
  %v3754 = vunpack.c.l.b16 %v3381
  %v3755 = vunpack.c.h.b16 %v3381
  %v3756 = vunpack.c.l.b16 %v3382
  %v3757 = vunpack.c.h.b16 %v3382
  %v3758 = vunpack.c.l.b16 %v3383
  %v3759 = vunpack.c.h.b16 %v3383
  %v3760 = vunpack.c.l.b16 %v3384
  %v3761 = vunpack.c.h.b16 %v3384
  %v3762 = vunpack.c.l.b16 %v3385
  %v3763 = vunpack.c.h.b16 %v3385
  %v3764 = vunpack.c.l.b16 %v3386
  %v3765 = vunpack.c.h.b16 %v3386
  %v3766 = vunpack.c.l.b16 %v3387
  %v3767 = vunpack.c.h.b16 %v3387
  %v3768 = vunpack.c.l.b16 %v3388
  %v3769 = vunpack.c.h.b16 %v3388
  %v3770 = vunpack.c.l.b16 %v3389
  %v3771 = vunpack.c.h.b16 %v3389
  %v3772 = vunpack.c.l.b16 %v3390
  %v3773 = vunpack.c.h.b16 %v3390
  %v3774 = vunpack.c.l.b16 %v3391
  %v3775 = vunpack.c.h.b16 %v3391
  %v3776 = vunpack.c.l.b16 %v3392
  %v3777 = vunpack.c.h.b16 %v3392
  %v3778 = vunpack.c.l.b16 %v3393
  %v3779 = vunpack.c.h.b16 %v3393
  %v3780 = vunpack.c.l.b16 %v3394
  %v3781 = vunpack.c.h.b16 %v3394
  %v3782 = vunpack.c.l.b16 %v3395
  %v3783 = vunpack.c.h.b16 %v3395
  %v3784 = vunpack.c.l.b16 %v3396
  %v3785 = vunpack.c.h.b16 %v3396
  %v3786 = vunpack.c.l.b16 %v3397
  %v3787 = vunpack.c.h.b16 %v3397
  %v3788 = vunpack.c.l.b16 %v3398
  %v3789 = vunpack.c.h.b16 %v3398
  %v3790 = vunpack.c.l.b16 %v3399
  %v3791 = vunpack.c.h.b16 %v3399
  %v3792 = vunpack.c.l.b16 %v3400
  %v3793 = vunpack.c.h.b16 %v3400
  %v3794 = vunpack.c.l.b16 %v3401
  %v3795 = vunpack.c.h.b16 %v3401
  %v3796 = vunpack.c.l.b16 %v3402
  %v3797 = vunpack.c.h.b16 %v3402
  %v3798 = vunpack.c.l.b16 %v3403
  %v3799 = vunpack.c.h.b16 %v3403
  %v3800 = vunpack.c.l.b16 %v3404
  %v3801 = vunpack.c.h.b16 %v3404
  %v3802 = vunpack.c.l.b16 %v3405
  %v3803 = vunpack.c.h.b16 %v3405
  %v3804 = vunpack.c.l.b16 %v3406
  %v3805 = vunpack.c.h.b16 %v3406
  %v3806 = vunpack.c.l.b16 %v3407
  %v3807 = vunpack.c.h.b16 %v3407
  %v3808 = vunpack.c.l.b16 %v3408
  %v3809 = vunpack.c.h.b16 %v3408
  %v3810 = vunpack.c.l.b16 %v3409
  %v3811 = vunpack.c.h.b16 %v3409
  %v3812 = vunpack.c.l.b16 %v3410
  %v3813 = vunpack.c.h.b16 %v3410
  %v3814 = vunpack.c.l.b16 %v3411
  %v3815 = vunpack.c.h.b16 %v3411
  %v3816 = vunpack.c.l.b16 %v3412
  %v3817 = vunpack.c.h.b16 %v3412
  %v3818 = vunpack.c.l.b16 %v3413
  %v3819 = vunpack.c.h.b16 %v3413
  %v3820 = vpack.c.b16 %v3568, %v3564
  %v3821 = vpack.c.b16 %v3569, %v3565
  %v3822 = vpack.c.b16 %v3570, %v3566
  %v3823 = vpack.c.b16 %v3571, %v3567
  %v3824 = vpack.c.b16 %v3576, %v3572
  %v3825 = vpack.c.b16 %v3577, %v3573
  %v3826 = vpack.c.b16 %v3578, %v3574
  %v3827 = vpack.c.b16 %v3579, %v3575
  %v3828 = vpack.c.b16 %v3584, %v3580
  %v3829 = vpack.c.b16 %v3585, %v3581
  %v3830 = vpack.c.b16 %v3586, %v3582
  %v3831 = vpack.c.b16 %v3587, %v3583
  %v3832 = vpack.c.b16 %v3592, %v3588
  %v3833 = vpack.c.b16 %v3593, %v3589
  %v3834 = vpack.c.b16 %v3594, %v3590
  %v3835 = vpack.c.b16 %v3595, %v3591
  %v3836 = vpack.c.b16 %v3600, %v3596
  %v3837 = vpack.c.b16 %v3601, %v3597
  %v3838 = vpack.c.b16 %v3602, %v3598
  %v3839 = vpack.c.b16 %v3603, %v3599
  %v3840 = vpack.c.b16 %v3608, %v3604
  %v3841 = vpack.c.b16 %v3609, %v3605
  %v3842 = vpack.c.b16 %v3610, %v3606
  %v3843 = vpack.c.b16 %v3611, %v3607
  %v3844 = vpack.c.b16 %v3616, %v3612
  %v3845 = vpack.c.b16 %v3617, %v3613
  %v3846 = vpack.c.b16 %v3618, %v3614
  %v3847 = vpack.c.b16 %v3619, %v3615
  %v3848 = vpack.c.b16 %v3624, %v3620
  %v3849 = vpack.c.b16 %v3625, %v3621
  %v3850 = vpack.c.b16 %v3626, %v3622
  %v3851 = vpack.c.b16 %v3627, %v3623
  %v3852 = vpack.c.b16 %v3632, %v3628
  %v3853 = vpack.c.b16 %v3633, %v3629
  %v3854 = vpack.c.b16 %v3634, %v3630
  %v3855 = vpack.c.b16 %v3635, %v3631
  %v3856 = vpack.c.b16 %v3640, %v3636
  %v3857 = vpack.c.b16 %v3641, %v3637
  %v3858 = vpack.c.b16 %v3642, %v3638
  %v3859 = vpack.c.b16 %v3643, %v3639
  %v3860 = vpack.c.b16 %v3648, %v3644
  %v3861 = vpack.c.b16 %v3649, %v3645
  %v3862 = vpack.c.b16 %v3650, %v3646
  %v3863 = vpack.c.b16 %v3651, %v3647
  %v3864 = vpack.c.b16 %v3656, %v3652
  %v3865 = vpack.c.b16 %v3657, %v3653
  %v3866 = vpack.c.b16 %v3658, %v3654
  %v3867 = vpack.c.b16 %v3659, %v3655
  %v3868 = vpack.c.b16 %v3664, %v3660
  %v3869 = vpack.c.b16 %v3665, %v3661
  %v3870 = vpack.c.b16 %v3666, %v3662
  %v3871 = vpack.c.b16 %v3667, %v3663
  %v3872 = vpack.c.b16 %v3672, %v3668
  %v3873 = vpack.c.b16 %v3673, %v3669
  %v3874 = vpack.c.b16 %v3674, %v3670
  %v3875 = vpack.c.b16 %v3675, %v3671
  %v3876 = vpack.c.b16 %v3680, %v3676
  %v3877 = vpack.c.b16 %v3681, %v3677
  %v3878 = vpack.c.b16 %v3682, %v3678
  %v3879 = vpack.c.b16 %v3683, %v3679
  %v3880 = vpack.c.b16 %v3688, %v3684
  %v3881 = vpack.c.b16 %v3689, %v3685
  %v3882 = vpack.c.b16 %v3690, %v3686
  %v3883 = vpack.c.b16 %v3691, %v3687
  %v3884 = vpack.c.b16 %v3696, %v3692
  %v3885 = vpack.c.b16 %v3697, %v3693
  %v3886 = vpack.c.b16 %v3698, %v3694
  %v3887 = vpack.c.b16 %v3699, %v3695
  %v3888 = vpack.c.b16 %v3704, %v3700
  %v3889 = vpack.c.b16 %v3705, %v3701
  %v3890 = vpack.c.b16 %v3706, %v3702
  %v3891 = vpack.c.b16 %v3707, %v3703
  %v3892 = vpack.c.b16 %v3712, %v3708
  %v3893 = vpack.c.b16 %v3713, %v3709
  %v3894 = vpack.c.b16 %v3714, %v3710
  %v3895 = vpack.c.b16 %v3715, %v3711
  %v3896 = vpack.c.b16 %v3720, %v3716
  %v3897 = vpack.c.b16 %v3721, %v3717
  %v3898 = vpack.c.b16 %v3722, %v3718
  %v3899 = vpack.c.b16 %v3723, %v3719
  %v3900 = vpack.c.b16 %v3728, %v3724
  %v3901 = vpack.c.b16 %v3729, %v3725
  %v3902 = vpack.c.b16 %v3730, %v3726
  %v3903 = vpack.c.b16 %v3731, %v3727
  %v3904 = vpack.c.b16 %v3736, %v3732
  %v3905 = vpack.c.b16 %v3737, %v3733
  %v3906 = vpack.c.b16 %v3738, %v3734
  %v3907 = vpack.c.b16 %v3739, %v3735
  %v3908 = vpack.c.b16 %v3744, %v3740
  %v3909 = vpack.c.b16 %v3745, %v3741
  %v3910 = vpack.c.b16 %v3746, %v3742
  %v3911 = vpack.c.b16 %v3747, %v3743
  %v3912 = vpack.c.b16 %v3752, %v3748
  %v3913 = vpack.c.b16 %v3753, %v3749
  %v3914 = vpack.c.b16 %v3754, %v3750
  %v3915 = vpack.c.b16 %v3755, %v3751
  %v3916 = vpack.c.b16 %v3760, %v3756
  %v3917 = vpack.c.b16 %v3761, %v3757
  %v3918 = vpack.c.b16 %v3762, %v3758
  %v3919 = vpack.c.b16 %v3763, %v3759
  %v3920 = vpack.c.b16 %v3768, %v3764
  %v3921 = vpack.c.b16 %v3769, %v3765
  %v3922 = vpack.c.b16 %v3770, %v3766
  %v3923 = vpack.c.b16 %v3771, %v3767
  %v3924 = vpack.c.b16 %v3776, %v3772
  %v3925 = vpack.c.b16 %v3777, %v3773
  %v3926 = vpack.c.b16 %v3778, %v3774
  %v3927 = vpack.c.b16 %v3779, %v3775
  %v3928 = vpack.c.b16 %v3784, %v3780
  %v3929 = vpack.c.b16 %v3785, %v3781
  %v3930 = vpack.c.b16 %v3786, %v3782
  %v3931 = vpack.c.b16 %v3787, %v3783
  %v3932 = vpack.c.b16 %v3792, %v3788
  %v3933 = vpack.c.b16 %v3793, %v3789
  %v3934 = vpack.c.b16 %v3794, %v3790
  %v3935 = vpack.c.b16 %v3795, %v3791
  %v3936 = vpack.c.b16 %v3800, %v3796
  %v3937 = vpack.c.b16 %v3801, %v3797
  %v3938 = vpack.c.b16 %v3802, %v3798
  %v3939 = vpack.c.b16 %v3803, %v3799
  %v3940 = vpack.c.b16 %v3808, %v3804
  %v3941 = vpack.c.b16 %v3809, %v3805
  %v3942 = vpack.c.b16 %v3810, %v3806
  %v3943 = vpack.c.b16 %v3811, %v3807
  %v3944 = vpack.c.b16 %v3816, %v3812
  %v3945 = vpack.c.b16 %v3817, %v3813
  %v3946 = vpack.c.b16 %v3818, %v3814
  %v3947 = vpack.c.b16 %v3819, %v3815
  %4076 = vmatprep.subr.bf16.mxu0 %v3821
  %4077 = vmatpush1.bf16.msra.mxu0 %v3820
  %4078 = vmatprep.subr.bf16.mxu0 %v3825
  %4079 = vmatpush1.bf16.msra.mxu0 %v3824
  %4080 = vmatprep.subr.bf16.mxu0 %v3829
  %4081 = vmatpush1.bf16.msra.mxu0 %v3828
  %4082 = vmatprep.subr.bf16.mxu0 %v3833
  %4083 = vmatpush1.bf16.msra.mxu0 %v3832
  %4084 = vmatprep.subr.bf16.mxu0 %v3837
  %4085 = vmatpush1.bf16.msra.mxu0 %v3836
  %4086 = vmatprep.subr.bf16.mxu0 %v3841
  %4087 = vmatpush1.bf16.msra.mxu0 %v3840
  %4088 = vmatprep.subr.bf16.mxu0 %v3845
  %4089 = vmatpush1.bf16.msra.mxu0 %v3844
  %4090 = vmatprep.subr.bf16.mxu0 %v3849
  %4091 = vmatpush1.bf16.msra.mxu0 %v3848
  %4092 = vmatprep.subr.bf16.mxu0 %v3853
  %4093 = vmatpush1.bf16.msra.mxu0 %v3852
  %4094 = vmatprep.subr.bf16.mxu0 %v3857
  %4095 = vmatpush1.bf16.msra.mxu0 %v3856
  %4096 = vmatprep.subr.bf16.mxu0 %v3861
  %4097 = vmatpush1.bf16.msra.mxu0 %v3860
  %4098 = vmatprep.subr.bf16.mxu0 %v3865
  %4099 = vmatpush1.bf16.msra.mxu0 %v3864
  %4100 = vmatprep.subr.bf16.mxu0 %v3869
  %4101 = vmatpush1.bf16.msra.mxu0 %v3868
  %4102 = vmatprep.subr.bf16.mxu0 %v3873
  %4103 = vmatpush1.bf16.msra.mxu0 %v3872
  %4104 = vmatprep.subr.bf16.mxu0 %v3877
  %4105 = vmatpush1.bf16.msra.mxu0 %v3876
  %4106 = vmatprep.subr.bf16.mxu0 %v3881
  %4107 = vmatpush1.bf16.msra.mxu0 %v3880
  %4108 = vmatprep.mubr.bf16.mxu0 %v3283
  %4109 = vmatmul.mubr.bf16.gmra.mrb[0].mxu0 %v3282
  %v4110 = vpop.f32.mrb[0].mxu0
  %v4111 = vadd.f32 %v3419, %v4110
  %v4112 = vpop.f32.mrb[0].mxu0
  %v4113 = vadd.f32 %v3423, %v4112
  %v4114 = vpop.f32.mrb[0].mxu0
  %v4115 = vpop.f32.mrb[0].mxu0
  %4116 = vdwg.mxu0
  %4117 = vmatprep.subr.bf16.mxu0 %v3885
  %4118 = vmatpush1.bf16.msra.mxu0 %v3884
  %4119 = vmatprep.subr.bf16.mxu0 %v3889
  %4120 = vmatpush1.bf16.msra.mxu0 %v3888
  %4121 = vmatprep.subr.bf16.mxu0 %v3893
  %4122 = vmatpush1.bf16.msra.mxu0 %v3892
  %4123 = vmatprep.subr.bf16.mxu0 %v3897
  %4124 = vmatpush1.bf16.msra.mxu0 %v3896
  %4125 = vmatprep.subr.bf16.mxu0 %v3901
  %4126 = vmatpush1.bf16.msra.mxu0 %v3900
  %4127 = vmatprep.subr.bf16.mxu0 %v3905
  %4128 = vmatpush1.bf16.msra.mxu0 %v3904
  %4129 = vmatprep.subr.bf16.mxu0 %v3909
  %4130 = vmatpush1.bf16.msra.mxu0 %v3908
  %4131 = vmatprep.subr.bf16.mxu0 %v3913
  %4132 = vmatpush1.bf16.msra.mxu0 %v3912
  %4133 = vmatprep.subr.bf16.mxu0 %v3917
  %4134 = vmatpush1.bf16.msra.mxu0 %v3916
  %4135 = vmatprep.subr.bf16.mxu0 %v3921
  %4136 = vmatpush1.bf16.msra.mxu0 %v3920
  %4137 = vmatprep.subr.bf16.mxu0 %v3925
  %4138 = vmatpush1.bf16.msra.mxu0 %v3924
  %4139 = vmatprep.subr.bf16.mxu0 %v3929
  %4140 = vmatpush1.bf16.msra.mxu0 %v3928
  %4141 = vmatprep.subr.bf16.mxu0 %v3933
  %4142 = vmatpush1.bf16.msra.mxu0 %v3932
  %4143 = vmatprep.subr.bf16.mxu0 %v3937
  %4144 = vmatpush1.bf16.msra.mxu0 %v3936
  %4145 = vmatprep.subr.bf16.mxu0 %v3941
  %4146 = vmatpush1.bf16.msra.mxu0 %v3940
  %4147 = vmatprep.subr.bf16.mxu0 %v3945
  %4148 = vmatpush1.bf16.msra.mxu0 %v3944
  %4149 = vmatprep.mubr.bf16.mxu0 %v3285
  %4150 = vmatmul.mubr.bf16.gmra.mrb[0].mxu0 %v3284
  %v4151 = vpop.f32.mrb[0].mxu0
  %v4152 = vadd.f32 %v4111, %v4151
  %v4153 = vpop.f32.mrb[0].mxu0
  %v4154 = vadd.f32 %v4113, %v4153
  %v4155 = vpop.f32.mrb[0].mxu0
  %v4156 = vpop.f32.mrb[0].mxu0
  %4157 = vdwg.mxu0
  %4158 = vmatprep.subr.bf16.mxu0 %v3823
  %4159 = vmatpush1.bf16.msra.mxu0 %v3822
  %4160 = vmatprep.subr.bf16.mxu0 %v3827
  %4161 = vmatpush1.bf16.msra.mxu0 %v3826
  %4162 = vmatprep.subr.bf16.mxu0 %v3831
  %4163 = vmatpush1.bf16.msra.mxu0 %v3830
  %4164 = vmatprep.subr.bf16.mxu0 %v3835
  %4165 = vmatpush1.bf16.msra.mxu0 %v3834
  %4166 = vmatprep.subr.bf16.mxu0 %v3839
  %4167 = vmatpush1.bf16.msra.mxu0 %v3838
  %4168 = vmatprep.subr.bf16.mxu0 %v3843
  %4169 = vmatpush1.bf16.msra.mxu0 %v3842
  %4170 = vmatprep.subr.bf16.mxu0 %v3847
  %4171 = vmatpush1.bf16.msra.mxu0 %v3846
  %4172 = vmatprep.subr.bf16.mxu0 %v3851
  %4173 = vmatpush1.bf16.msra.mxu0 %v3850
  %4174 = vmatprep.subr.bf16.mxu0 %v3855
  %4175 = vmatpush1.bf16.msra.mxu0 %v3854
  %4176 = vmatprep.subr.bf16.mxu0 %v3859
  %4177 = vmatpush1.bf16.msra.mxu0 %v3858
  %4178 = vmatprep.subr.bf16.mxu0 %v3863
  %4179 = vmatpush1.bf16.msra.mxu0 %v3862
  %4180 = vmatprep.subr.bf16.mxu0 %v3867
  %4181 = vmatpush1.bf16.msra.mxu0 %v3866
  %4182 = vmatprep.subr.bf16.mxu0 %v3871
  %4183 = vmatpush1.bf16.msra.mxu0 %v3870
  %4184 = vmatprep.subr.bf16.mxu0 %v3875
  %4185 = vmatpush1.bf16.msra.mxu0 %v3874
  %4186 = vmatprep.subr.bf16.mxu0 %v3879
  %4187 = vmatpush1.bf16.msra.mxu0 %v3878
  %4188 = vmatprep.subr.bf16.mxu0 %v3883
  %4189 = vmatpush1.bf16.msra.mxu0 %v3882
  %4190 = vmatprep.mubr.bf16.mxu0 %v3283
  %4191 = vmatmul.mubr.bf16.gmra.mrb[0].mxu0 %v3282
  %v4192 = vpop.f32.mrb[0].mxu0
  %v4193 = vadd.f32 %v3427, %v4192
  %v4194 = vpop.f32.mrb[0].mxu0
  %v4195 = vadd.f32 %v3431, %v4194
  %v4196 = vpop.f32.mrb[0].mxu0
  %v4197 = vpop.f32.mrb[0].mxu0
  %4198 = vdwg.mxu0
  %4199 = vmatprep.subr.bf16.mxu0 %v3887
  %4200 = vmatpush1.bf16.msra.mxu0 %v3886
  %4201 = vmatprep.subr.bf16.mxu0 %v3891
  %4202 = vmatpush1.bf16.msra.mxu0 %v3890
  %4203 = vmatprep.subr.bf16.mxu0 %v3895
  %4204 = vmatpush1.bf16.msra.mxu0 %v3894
  %4205 = vmatprep.subr.bf16.mxu0 %v3899
  %4206 = vmatpush1.bf16.msra.mxu0 %v3898
  %4207 = vmatprep.subr.bf16.mxu0 %v3903
  %4208 = vmatpush1.bf16.msra.mxu0 %v3902
  %4209 = vmatprep.subr.bf16.mxu0 %v3907
  %4210 = vmatpush1.bf16.msra.mxu0 %v3906
  %4211 = vmatprep.subr.bf16.mxu0 %v3911
  %4212 = vmatpush1.bf16.msra.mxu0 %v3910
  %4213 = vmatprep.subr.bf16.mxu0 %v3915
  %4214 = vmatpush1.bf16.msra.mxu0 %v3914
  %4215 = vmatprep.subr.bf16.mxu0 %v3919
  %4216 = vmatpush1.bf16.msra.mxu0 %v3918
  %4217 = vmatprep.subr.bf16.mxu0 %v3923
  %4218 = vmatpush1.bf16.msra.mxu0 %v3922
  %4219 = vmatprep.subr.bf16.mxu0 %v3927
  %4220 = vmatpush1.bf16.msra.mxu0 %v3926
  %4221 = vmatprep.subr.bf16.mxu0 %v3931
  %4222 = vmatpush1.bf16.msra.mxu0 %v3930
  %4223 = vmatprep.subr.bf16.mxu0 %v3935
  %4224 = vmatpush1.bf16.msra.mxu0 %v3934
  %4225 = vmatprep.subr.bf16.mxu0 %v3939
  %4226 = vmatpush1.bf16.msra.mxu0 %v3938
  %4227 = vmatprep.subr.bf16.mxu0 %v3943
  %4228 = vmatpush1.bf16.msra.mxu0 %v3942
  %4229 = vmatprep.subr.bf16.mxu0 %v3947
  %4230 = vmatpush1.bf16.msra.mxu0 %v3946
  %4231 = vmatprep.mubr.bf16.mxu0 %v3285
  %4232 = vmatmul.mubr.bf16.gmra.mrb[0].mxu0 %v3284
  %v4233 = vpop.f32.mrb[0].mxu0
  %v4234 = vadd.f32 %v4193, %v4233
  %v4235 = vpop.f32.mrb[0].mxu0
  %v4236 = vadd.f32 %v4195, %v4235
  %v4237 = vpop.f32.mrb[0].mxu0
  %v4238 = vpop.f32.mrb[0].mxu0
  %4239 = vdwg.mxu0
  %v4240 = vld [vmem:[%s14] sm:$0xf]
  %v4241 = vld [vmem:[%s15] sm:$0xf]
  %v4242 = vsel %vm991, %v4152, 0.0
  %v4243 = vsel %vm991, %v4154, 0.0
  %v4244 = vadd.f32 %v4242, %v4243
  %v4245 = vsel %vm991, %v4234, 0.0
  %v4246 = vadd.f32 %v4244, %v4245
  %v4247 = vsel %vm991, %v4236, 0.0
  %v4248 = vadd.f32 %v4246, %v4247
  %4249 = vadd.xlane.f32.xlu0 %v4248
  %v4250 = vpop.xlane.xlu0 %4249
  %v4251 = vmul.f32 %v4250, %v3194
  %v4252 = vsub.f32 %v4152, %v4251
  %v4253 = vsub.f32 %v4154, %v4251
  %v4254 = vsub.f32 %v4234, %v4251
  %v4255 = vsub.f32 %v4236, %v4251
  %v4256 = vmul.f32 %v4252, %v4252
  %v4257 = vmul.f32 %v4253, %v4253
  %v4258 = vmul.f32 %v4254, %v4254
  %v4259 = vmul.f32 %v4255, %v4255
  %v4260 = vsel %vm991, %v4256, 0.0
  %v4261 = vsel %vm991, %v4257, 0.0
  %v4262 = vadd.f32 %v4260, %v4261
  %v4263 = vsel %vm991, %v4258, 0.0
  %v4264 = vadd.f32 %v4262, %v4263
  %v4265 = vsel %vm991, %v4259, 0.0
  %v4266 = vadd.f32 %v4264, %v4265
  %4267 = vadd.xlane.f32.xlu0 %v4266
  %v4268 = vpop.xlane.xlu0 %4267
  %v4269 = vmul.f32 %v4268, %v3194
  %v4270 = vadd.f32 %v4269, 1e-05
  %v4271 = vrsqrt.pop %v4270
  %v4272 = vmul.f32 %v4252, %v4271
  %v4273 = vmul.f32 %v4253, %v4271
  %v4274 = vmul.f32 %v4254, %v4271
  %v4275 = vmul.f32 %v4255, %v4271
  %v4277 = vlaneseq
  %v4278 = vshrl.u32 %v4277, 7
  %v4279 = vsub.s32 0, %v4278
  %v4280 = vrot.slane %v4240, %v4279
  %v4281 = vlaneseq
  %v4282 = vshrl.u32 %v4281, 7
  %v4283 = vsub.s32 1, %v4282
  %v4284 = vrot.slane %v4240, %v4283
  %v4285 = vlaneseq
  %v4286 = vshrl.u32 %v4285, 7
  %v4287 = vsub.s32 2, %v4286
  %v4288 = vrot.slane %v4240, %v4287
  %v4289 = vlaneseq
  %v4290 = vshrl.u32 %v4289, 7
  %v4291 = vsub.s32 3, %v4290
  %v4292 = vrot.slane %v4240, %v4291
  %v4297 = vmul.f32 %v4272, %v4280
  %v4298 = vmul.f32 %v4273, %v4284
  %v4299 = vmul.f32 %v4274, %v4288
  %v4300 = vmul.f32 %v4275, %v4292
  %v4302 = vlaneseq
  %v4303 = vshrl.u32 %v4302, 7
  %v4304 = vsub.s32 0, %v4303
  %v4305 = vrot.slane %v4241, %v4304
  %v4306 = vlaneseq
  %v4307 = vshrl.u32 %v4306, 7
  %v4308 = vsub.s32 1, %v4307
  %v4309 = vrot.slane %v4241, %v4308
  %v4310 = vlaneseq
  %v4311 = vshrl.u32 %v4310, 7
  %v4312 = vsub.s32 2, %v4311
  %v4313 = vrot.slane %v4241, %v4312
  %v4314 = vlaneseq
  %v4315 = vshrl.u32 %v4314, 7
  %v4316 = vsub.s32 3, %v4315
  %v4317 = vrot.slane %v4241, %v4316
  %v4322 = vadd.f32 %v4297, %v4305
  %v4323 = vadd.f32 %v4298, %v4309
  %v4324 = vadd.f32 %v4299, %v4313
  %v4325 = vadd.f32 %v4300, %v4317
  %vm4326 = vcmp.ge.f32.partialorder %v4322, 0.0
  %vm4327 = vcmp.ge.f32.partialorder %v4323, 0.0
  %vm4328 = vcmp.ge.f32.partialorder %v4324, 0.0
  %vm4329 = vcmp.ge.f32.partialorder %v4325, 0.0
  %v4330 = vmul.f32 %v4322, 0.2
  %v4331 = vmul.f32 %v4323, 0.2
  %v4332 = vmul.f32 %v4324, 0.2
  %v4333 = vmul.f32 %v4325, 0.2
  %v4334 = vsel %vm4326, %v4322, %v4330
  %v4335 = vsel %vm4327, %v4323, %v4331
  %v4336 = vsel %vm4328, %v4324, %v4332
  %v4337 = vsel %vm4329, %v4325, %v4333
  %v4338 = vpack.c.bf16 %v4334, %v4334
  %v4339 = vpack.c.bf16 %v4335, %v4335
  %v4340 = vpack.c.bf16 %v4336, %v4336
  %v4341 = vpack.c.bf16 %v4337, %v4337
  %v4342 = vld [vmem:[%s16] sm:$0xf]
  %v4343 = vld [vmem:[%s16 + $0x4] sm:$0xf]
  %v4344 = vld [vmem:[%s16 + $0x8] sm:$0xf]
  %v4345 = vld [vmem:[%s16 + $0xc] sm:$0xf]
  %v4346 = vld [vmem:[%s16 + $0x10] sm:$0xf]
  %v4347 = vld [vmem:[%s16 + $0x14] sm:$0xf]
  %v4348 = vld [vmem:[%s16 + $0x18] sm:$0xf]
  %v4349 = vld [vmem:[%s16 + $0x1c] sm:$0xf]
  %v4350 = vld [vmem:[%s16 + $0x20] sm:$0xf]
  %v4351 = vld [vmem:[%s16 + $0x24] sm:$0xf]
  %v4352 = vld [vmem:[%s16 + $0x28] sm:$0xf]
  %v4353 = vld [vmem:[%s16 + $0x2c] sm:$0xf]
  %v4354 = vld [vmem:[%s16 + $0x30] sm:$0xf]
  %v4355 = vld [vmem:[%s16 + $0x34] sm:$0xf]
  %v4356 = vld [vmem:[%s16 + $0x38] sm:$0xf]
  %v4357 = vld [vmem:[%s16 + $0x3c] sm:$0xf]
  %v4358 = vld [vmem:[%s16 + $0x40] sm:$0xf]
  %v4359 = vld [vmem:[%s16 + $0x44] sm:$0xf]
  %v4360 = vld [vmem:[%s16 + $0x48] sm:$0xf]
  %v4361 = vld [vmem:[%s16 + $0x4c] sm:$0xf]
  %v4362 = vld [vmem:[%s16 + $0x50] sm:$0xf]
  %v4363 = vld [vmem:[%s16 + $0x54] sm:$0xf]
  %v4364 = vld [vmem:[%s16 + $0x58] sm:$0xf]
  %v4365 = vld [vmem:[%s16 + $0x5c] sm:$0xf]
  %v4366 = vld [vmem:[%s16 + $0x60] sm:$0xf]
  %v4367 = vld [vmem:[%s16 + $0x64] sm:$0xf]
  %v4368 = vld [vmem:[%s16 + $0x68] sm:$0xf]
  %v4369 = vld [vmem:[%s16 + $0x6c] sm:$0xf]
  %v4370 = vld [vmem:[%s16 + $0x70] sm:$0xf]
  %v4371 = vld [vmem:[%s16 + $0x74] sm:$0xf]
  %v4372 = vld [vmem:[%s16 + $0x78] sm:$0xf]
  %v4373 = vld [vmem:[%s16 + $0x7c] sm:$0xf]
  %v4374 = vld [vmem:[%s16 + $0x80] sm:$0xf]
  %v4375 = vld [vmem:[%s16 + $0x84] sm:$0xf]
  %v4376 = vld [vmem:[%s16 + $0x88] sm:$0xf]
  %v4377 = vld [vmem:[%s16 + $0x8c] sm:$0xf]
  %v4378 = vld [vmem:[%s16 + $0x90] sm:$0xf]
  %v4379 = vld [vmem:[%s16 + $0x94] sm:$0xf]
  %v4380 = vld [vmem:[%s16 + $0x98] sm:$0xf]
  %v4381 = vld [vmem:[%s16 + $0x9c] sm:$0xf]
  %v4382 = vld [vmem:[%s16 + $0xa0] sm:$0xf]
  %v4383 = vld [vmem:[%s16 + $0xa4] sm:$0xf]
  %v4384 = vld [vmem:[%s16 + $0xa8] sm:$0xf]
  %v4385 = vld [vmem:[%s16 + $0xac] sm:$0xf]
  %v4386 = vld [vmem:[%s16 + $0xb0] sm:$0xf]
  %v4387 = vld [vmem:[%s16 + $0xb4] sm:$0xf]
  %v4388 = vld [vmem:[%s16 + $0xb8] sm:$0xf]
  %v4389 = vld [vmem:[%s16 + $0xbc] sm:$0xf]
  %v4390 = vld [vmem:[%s16 + $0xc0] sm:$0xf]
  %v4391 = vld [vmem:[%s16 + $0xc4] sm:$0xf]
  %v4392 = vld [vmem:[%s16 + $0xc8] sm:$0xf]
  %v4393 = vld [vmem:[%s16 + $0xcc] sm:$0xf]
  %v4394 = vld [vmem:[%s16 + $0xd0] sm:$0xf]
  %v4395 = vld [vmem:[%s16 + $0xd4] sm:$0xf]
  %v4396 = vld [vmem:[%s16 + $0xd8] sm:$0xf]
  %v4397 = vld [vmem:[%s16 + $0xdc] sm:$0xf]
  %v4398 = vld [vmem:[%s16 + $0xe0] sm:$0xf]
  %v4399 = vld [vmem:[%s16 + $0xe4] sm:$0xf]
  %v4400 = vld [vmem:[%s16 + $0xe8] sm:$0xf]
  %v4401 = vld [vmem:[%s16 + $0xec] sm:$0xf]
  %v4402 = vld [vmem:[%s16 + $0xf0] sm:$0xf]
  %v4403 = vld [vmem:[%s16 + $0xf4] sm:$0xf]
  %v4404 = vld [vmem:[%s16 + $0xf8] sm:$0xf]
  %v4405 = vld [vmem:[%s16 + $0xfc] sm:$0xf]
  %v4406 = vld [vmem:[#allocation3] sm:$0x1]
  %v4408 = vlaneseq
  %v4409 = vshrl.u32 %v4408, 7
  %v4410 = vsub.s32 0, %v4409
  %v4411 = vrot.slane %v4406, %v4410
  %v4477 = vunpack.c.l.b16 %v4342
  %v4478 = vunpack.c.l.b16 %v4343
  %v4479 = vunpack.c.l.b16 %v4344
  %v4480 = vunpack.c.l.b16 %v4345
  %v4481 = vunpack.c.l.b16 %v4346
  %v4482 = vunpack.c.l.b16 %v4347
  %v4483 = vunpack.c.l.b16 %v4348
  %v4484 = vunpack.c.l.b16 %v4349
  %v4485 = vunpack.c.l.b16 %v4350
  %v4486 = vunpack.c.l.b16 %v4351
  %v4487 = vunpack.c.l.b16 %v4352
  %v4488 = vunpack.c.l.b16 %v4353
  %v4489 = vunpack.c.l.b16 %v4354
  %v4490 = vunpack.c.l.b16 %v4355
  %v4491 = vunpack.c.l.b16 %v4356
  %v4492 = vunpack.c.l.b16 %v4357
  %v4493 = vunpack.c.l.b16 %v4358
  %v4494 = vunpack.c.l.b16 %v4359
  %v4495 = vunpack.c.l.b16 %v4360
  %v4496 = vunpack.c.l.b16 %v4361
  %v4497 = vunpack.c.l.b16 %v4362
  %v4498 = vunpack.c.l.b16 %v4363
  %v4499 = vunpack.c.l.b16 %v4364
  %v4500 = vunpack.c.l.b16 %v4365
  %v4501 = vunpack.c.l.b16 %v4366
  %v4502 = vunpack.c.l.b16 %v4367
  %v4503 = vunpack.c.l.b16 %v4368
  %v4504 = vunpack.c.l.b16 %v4369
  %v4505 = vunpack.c.l.b16 %v4370
  %v4506 = vunpack.c.l.b16 %v4371
  %v4507 = vunpack.c.l.b16 %v4372
  %v4508 = vunpack.c.l.b16 %v4373
  %v4509 = vunpack.c.l.b16 %v4374
  %v4510 = vunpack.c.l.b16 %v4375
  %v4511 = vunpack.c.l.b16 %v4376
  %v4512 = vunpack.c.l.b16 %v4377
  %v4513 = vunpack.c.l.b16 %v4378
  %v4514 = vunpack.c.l.b16 %v4379
  %v4515 = vunpack.c.l.b16 %v4380
  %v4516 = vunpack.c.l.b16 %v4381
  %v4517 = vunpack.c.l.b16 %v4382
  %v4518 = vunpack.c.l.b16 %v4383
  %v4519 = vunpack.c.l.b16 %v4384
  %v4520 = vunpack.c.l.b16 %v4385
  %v4521 = vunpack.c.l.b16 %v4386
  %v4522 = vunpack.c.l.b16 %v4387
  %v4523 = vunpack.c.l.b16 %v4388
  %v4524 = vunpack.c.l.b16 %v4389
  %v4525 = vunpack.c.l.b16 %v4390
  %v4526 = vunpack.c.l.b16 %v4391
  %v4527 = vunpack.c.l.b16 %v4392
  %v4528 = vunpack.c.l.b16 %v4393
  %v4529 = vunpack.c.l.b16 %v4394
  %v4530 = vunpack.c.l.b16 %v4395
  %v4531 = vunpack.c.l.b16 %v4396
  %v4532 = vunpack.c.l.b16 %v4397
  %v4533 = vunpack.c.l.b16 %v4398
  %v4534 = vunpack.c.l.b16 %v4399
  %v4535 = vunpack.c.l.b16 %v4400
  %v4536 = vunpack.c.l.b16 %v4401
  %v4537 = vunpack.c.l.b16 %v4402
  %v4538 = vunpack.c.l.b16 %v4403
  %v4539 = vunpack.c.l.b16 %v4404
  %v4540 = vunpack.c.l.b16 %v4405
  %v4541 = vpack.c.b16 %v4478, %v4477
  %v4542 = vpack.c.b16 %v4480, %v4479
  %v4543 = vpack.c.b16 %v4482, %v4481
  %v4544 = vpack.c.b16 %v4484, %v4483
  %v4545 = vpack.c.b16 %v4486, %v4485
  %v4546 = vpack.c.b16 %v4488, %v4487
  %v4547 = vpack.c.b16 %v4490, %v4489
  %v4548 = vpack.c.b16 %v4492, %v4491
  %v4549 = vpack.c.b16 %v4494, %v4493
  %v4550 = vpack.c.b16 %v4496, %v4495
  %v4551 = vpack.c.b16 %v4498, %v4497
  %v4552 = vpack.c.b16 %v4500, %v4499
  %v4553 = vpack.c.b16 %v4502, %v4501
  %v4554 = vpack.c.b16 %v4504, %v4503
  %v4555 = vpack.c.b16 %v4506, %v4505
  %v4556 = vpack.c.b16 %v4508, %v4507
  %v4557 = vpack.c.b16 %v4510, %v4509
  %v4558 = vpack.c.b16 %v4512, %v4511
  %v4559 = vpack.c.b16 %v4514, %v4513
  %v4560 = vpack.c.b16 %v4516, %v4515
  %v4561 = vpack.c.b16 %v4518, %v4517
  %v4562 = vpack.c.b16 %v4520, %v4519
  %v4563 = vpack.c.b16 %v4522, %v4521
  %v4564 = vpack.c.b16 %v4524, %v4523
  %v4565 = vpack.c.b16 %v4526, %v4525
  %v4566 = vpack.c.b16 %v4528, %v4527
  %v4567 = vpack.c.b16 %v4530, %v4529
  %v4568 = vpack.c.b16 %v4532, %v4531
  %v4569 = vpack.c.b16 %v4534, %v4533
  %v4570 = vpack.c.b16 %v4536, %v4535
  %v4571 = vpack.c.b16 %v4538, %v4537
  %v4572 = vpack.c.b16 %v4540, %v4539
  %4605 = vmatprep.subr.bf16.mxu0 0
  %4606 = vmatpush1.bf16.msra.mxu0 %v4541
  %4607 = vmatprep.subr.bf16.mxu0 0
  %4608 = vmatpush1.bf16.msra.mxu0 %v4542
  %4609 = vmatprep.subr.bf16.mxu0 0
  %4610 = vmatpush1.bf16.msra.mxu0 %v4543
  %4611 = vmatprep.subr.bf16.mxu0 0
  %4612 = vmatpush1.bf16.msra.mxu0 %v4544
  %4613 = vmatprep.subr.bf16.mxu0 0
  %4614 = vmatpush1.bf16.msra.mxu0 %v4545
  %4615 = vmatprep.subr.bf16.mxu0 0
  %4616 = vmatpush1.bf16.msra.mxu0 %v4546
  %4617 = vmatprep.subr.bf16.mxu0 0
  %4618 = vmatpush1.bf16.msra.mxu0 %v4547
  %4619 = vmatprep.subr.bf16.mxu0 0
  %4620 = vmatpush1.bf16.msra.mxu0 %v4548
  %4621 = vmatprep.subr.bf16.mxu0 0
  %4622 = vmatpush1.bf16.msra.mxu0 %v4549
  %4623 = vmatprep.subr.bf16.mxu0 0
  %4624 = vmatpush1.bf16.msra.mxu0 %v4550
  %4625 = vmatprep.subr.bf16.mxu0 0
  %4626 = vmatpush1.bf16.msra.mxu0 %v4551
  %4627 = vmatprep.subr.bf16.mxu0 0
  %4628 = vmatpush1.bf16.msra.mxu0 %v4552
  %4629 = vmatprep.subr.bf16.mxu0 0
  %4630 = vmatpush1.bf16.msra.mxu0 %v4553
  %4631 = vmatprep.subr.bf16.mxu0 0
  %4632 = vmatpush1.bf16.msra.mxu0 %v4554
  %4633 = vmatprep.subr.bf16.mxu0 0
  %4634 = vmatpush1.bf16.msra.mxu0 %v4555
  %4635 = vmatprep.subr.bf16.mxu0 0
  %4636 = vmatpush1.bf16.msra.mxu0 %v4556
  %4637 = vmatprep.mubr.bf16.mxu0 %v4339
  %4638 = vmatmul.mubr.bf16.gmra.mrb[0].mxu0 %v4338
  %v4639 = vpop.f32.mrb[0].mxu0
  %v4640 = vadd.f32 %v4411, %v4639
  %v4641 = vpop.f32.mrb[0].mxu0
  %v4642 = vpop.f32.mrb[0].mxu0
  %v4643 = vpop.f32.mrb[0].mxu0
  %4644 = vdwg.mxu0
  %4645 = vmatprep.subr.bf16.mxu0 0
  %4646 = vmatpush1.bf16.msra.mxu0 %v4557
  %4647 = vmatprep.subr.bf16.mxu0 0
  %4648 = vmatpush1.bf16.msra.mxu0 %v4558
  %4649 = vmatprep.subr.bf16.mxu0 0
  %4650 = vmatpush1.bf16.msra.mxu0 %v4559
  %4651 = vmatprep.subr.bf16.mxu0 0
  %4652 = vmatpush1.bf16.msra.mxu0 %v4560
  %4653 = vmatprep.subr.bf16.mxu0 0
  %4654 = vmatpush1.bf16.msra.mxu0 %v4561
  %4655 = vmatprep.subr.bf16.mxu0 0
  %4656 = vmatpush1.bf16.msra.mxu0 %v4562
  %4657 = vmatprep.subr.bf16.mxu0 0
  %4658 = vmatpush1.bf16.msra.mxu0 %v4563
  %4659 = vmatprep.subr.bf16.mxu0 0
  %4660 = vmatpush1.bf16.msra.mxu0 %v4564
  %4661 = vmatprep.subr.bf16.mxu0 0
  %4662 = vmatpush1.bf16.msra.mxu0 %v4565
  %4663 = vmatprep.subr.bf16.mxu0 0
  %4664 = vmatpush1.bf16.msra.mxu0 %v4566
  %4665 = vmatprep.subr.bf16.mxu0 0
  %4666 = vmatpush1.bf16.msra.mxu0 %v4567
  %4667 = vmatprep.subr.bf16.mxu0 0
  %4668 = vmatpush1.bf16.msra.mxu0 %v4568
  %4669 = vmatprep.subr.bf16.mxu0 0
  %4670 = vmatpush1.bf16.msra.mxu0 %v4569
  %4671 = vmatprep.subr.bf16.mxu0 0
  %4672 = vmatpush1.bf16.msra.mxu0 %v4570
  %4673 = vmatprep.subr.bf16.mxu0 0
  %4674 = vmatpush1.bf16.msra.mxu0 %v4571
  %4675 = vmatprep.subr.bf16.mxu0 0
  %4676 = vmatpush1.bf16.msra.mxu0 %v4572
  %4677 = vmatprep.mubr.bf16.mxu0 %v4341
  %4678 = vmatmul.mubr.bf16.gmra.mrb[0].mxu0 %v4340
  %v4679 = vpop.f32.mrb[0].mxu0
  %v4680 = vadd.f32 %v4640, %v4679
  %v4681 = vpop.f32.mrb[0].mxu0
  %v4682 = vpop.f32.mrb[0].mxu0
  %v4683 = vpop.f32.mrb[0].mxu0
  %4684 = vdwg.mxu0
  %vm4685 = vcmask 1024
  %4686 = vst.msk [vmem:[%s18] sm:$0x3] %vm4685, %v4680
  // Predicated region
  $region74: #{discriminator_forward.1} parent=0 // pred_check
    _
  $region75: #{discriminator_forward.1} parent=0 // pred_check_branch
    %4688 = sbr.rel (0) target = $region77
  $region76: #{discriminator_forward.1} parent=0 // pred_region
    _
  $region77: #{discriminator_forward.1} parent=0 // pred_fallthru
    _
  // Predicated region
  $region78: #{discriminator_forward.1} parent=0 // pred_check
    _
  $region79: #{discriminator_forward.1} parent=0 // pred_check_branch
    %4690 = sbr.rel (0) target = $region81
  $region80: #{discriminator_forward.1} parent=0 // pred_region
    _
  $region81: #{discriminator_forward.1} parent=0 // pred_fallthru
    _

</llo_original>
